<compile_context>
chip_gen: v7x
topology: tpu7x:2x2x1
jax: 0.10.0
libtpu: 0.0.40
codegen_flags: <defaults>
</compile_context>

<pallas_src>
import numpy as np
import jax
import jax.numpy as jnp
from jax.experimental import pallas as pl
from jax.experimental.pallas import tpu as pltpu


# ----------------------------------------------------------------------------
# Fused kernel: full MultiOctaveConv forward for one image per grid step.
# ----------------------------------------------------------------------------
def _multi_octave_kernel(
    xh_ref, xl_ref, xll_ref,                               # (H, W, C) f32
    w_h2h_ref, w_h2l_ref, w_l_ref, w_l2ll_ref, w_ll_ref,   # bf16 (Cout, 9*Cin)
    u_l2h_ref, u_ll2l_ref,                                 # f32 0/1 upsample mats
    oh_ref, ol_ref, oll_ref,                               # f32 (Cout, H*W)
    xh_pad, xhp_pad, xl_pad, xlp_pad, xll_pad,             # bf16 padded scratch
    ptmp_h, ptmp_l,                                        # f32 pooling scratch
):
    Hh, Wh, _ = xh_ref.shape
    Hl, Wl, _ = xl_ref.shape
    Hll, Wll, _ = xll_ref.shape
    g_out = oh_ref.shape[0]
    a_out = ol_ref.shape[0]

    # ---- zero padding in-kernel (VMEM scratch); also casts to bf16 so the 9x
    #      im2col patch buffer is half-size. ----
    def pad_into(dst, val, h, w):
        dst[...] = jnp.zeros_like(dst)
        dst[1:h + 1, 1:w + 1, :] = val.astype(dst.dtype)

    pad_into(xh_pad, xh_ref[...], Hh, Wh)
    pad_into(xl_pad, xl_ref[...], Hl, Wl)
    pad_into(xll_pad, xll_ref[...], Hll, Wll)

    # ---- AvgPool2d(2,2)/stride 2 fused in: strided VMEM reads along the two
    #      non-lane axes; sums stay f32 (v5e has no bf16 VPU path). ----
    def pool_into(dst, src_ref, tmp, h, w):
        tmp[...] = (src_ref[pl.ds(0, h // 2, 2), :, :] +
                    src_ref[pl.ds(1, h // 2, 2), :, :])            # row pairs
        pooled = 0.25 * (tmp[:, pl.ds(0, w // 2, 2), :] +
                         tmp[:, pl.ds(1, w // 2, 2), :])           # col pairs
        dst[...] = jnp.zeros_like(dst)
        dst[1:h // 2 + 1, 1:w // 2 + 1, :] = pooled.astype(dst.dtype)

    pool_into(xhp_pad, xh_ref, ptmp_h, Hh, Wh)
    pool_into(xlp_pad, xl_ref, ptmp_l, Hl, Wl)

    # ---- im2col patches (M, 9*Cin): channels-last so the (H, W, 9C) ->
    #      (H*W, 9C) collapse only merges leading (sublane) dims. ----
    def patches(xp, h, w):
        c = xp.shape[-1]
        taps = [xp[kh:kh + h, kw:kw + w, :] for kh in range(3) for kw in range(3)]
        return jnp.concatenate(taps, axis=-1).reshape(h * w, 9 * c)

    p_h = patches(xh_pad, Hh, Wh)        # (Hh*Wh, 9*g_in)  bf16
    p_hp = patches(xhp_pad, Hl, Wl)      # (Hl*Wl, 9*g_in)
    p_l = patches(xl_pad, Hl, Wl)        # (Hl*Wl, 9*a_in)
    p_lp = patches(xlp_pad, Hll, Wll)    # (Hll*Wll, 9*a_in)
    p_ll = patches(xll_pad, Hll, Wll)    # (Hll*Wll, 9*b_in)

    # ---- convs: (Cout, K) x (M, K)^T -> lane-dense (Cout, M), f32 accum.
    #      Same-input convs fused along Cout: w_l = [l2h ; l2l], w_ll = [ll2l ; ll2ll].
    def conv(w_ref, p):
        return jax.lax.dot_general(
            w_ref[...], p, (((1,), (1,)), ((), ())),
            preferred_element_type=jnp.float32)

    y_h2h = conv(w_h2h_ref, p_h)         # (g_out, Hh*Wh)
    y_h2l = conv(w_h2l_ref, p_hp)        # (a_out, Hl*Wl)
    y_l = conv(w_l_ref, p_l)             # (g_out+a_out, Hl*Wl)
    y_l2ll = conv(w_l2ll_ref, p_lp)      # (b_out, Hll*Wll)
    y_ll = conv(w_ll_ref, p_ll)          # (a_out+b_out, Hll*Wll)

    # ---- nearest-2x upsample as a matmul with a constant 0/1 matrix (keeps
    #      the flat lane-dense layout; exact, stays f32). ----
    up_l2h = jnp.dot(y_l[:g_out, :], u_l2h_ref[...],
                     preferred_element_type=jnp.float32)           # (g_out, Hh*Wh)
    up_ll2l = jnp.dot(y_ll[:a_out, :], u_ll2l_ref[...],
                      preferred_element_type=jnp.float32)          # (a_out, Hl*Wl)

    # ---- cross-branch adds fused in the epilogue; (Cout, H*W) == NCHW-flat.
    # TODO(synk): norm_layer / activation_layer are None in this config; if set
    # they would be a per-channel affine + elementwise fused right here.
    oh_ref[...] = (y_h2h + up_l2h).astype(oh_ref.dtype)
    ol_ref[...] = (y_h2l + y_l[g_out:, :] + up_ll2l).astype(ol_ref.dtype)
    oll_ref[...] = (y_l2ll + y_ll[a_out:, :]).astype(oll_ref.dtype)


# ----------------------------------------------------------------------------
# One-time parameter prep: OIHW -> packed bf16 (Cout, 9*Cin) matrices, with
# same-input convs fused along Cout.
# ----------------------------------------------------------------------------
def _pack_weight(w_oihw, dtype=jnp.bfloat16):
    # column order = (kh*3 + kw)*Cin + cin, matching the in-kernel tap concat.
    cout = w_oihw.shape[0]
    return jnp.transpose(w_oihw, (0, 2, 3, 1)).reshape(cout, -1).astype(dtype)


def prepare_params(params):
    return {
        "w_h2h": _pack_weight(params["h2h"]),
        "w_h2l": _pack_weight(params["h2l"]),
        "w_l": jnp.concatenate(
            [_pack_weight(params["l2h"]), _pack_weight(params["l2l"])], axis=0),
        "w_l2ll": _pack_weight(params["l2ll"]),
        "w_ll": jnp.concatenate(
            [_pack_weight(params["ll2l"]), _pack_weight(params["ll2ll"])], axis=0),
    }


def _nearest_upsample_matrix(h, w, dtype=jnp.float32):
    # up_flat = y_flat @ U ; U[yl*w+xl, yh*2w+xh] = 1 iff yl==yh//2 and xl==xh//2
    i = np.arange(h * w)
    yl, xl = i // w, i % w
    j = np.arange(4 * h * w)
    yh, xh = j // (2 * w), j % (2 * w)
    u = (yl[:, None] == yh[None, :] // 2) & (xl[:, None] == xh[None, :] // 2)
    return jnp.asarray(u, dtype=dtype)


# ----------------------------------------------------------------------------
# MultiOctaveConv forward (stride=1, 3x3, pad=1, not last, no norm/activation).
# ----------------------------------------------------------------------------
def multi_octave_forward(packed, x_h, x_l, x_ll):
    N, g_in, Hh, Wh = x_h.shape
    _, a_in, Hl, Wl = x_l.shape
    _, b_in, Hll, Wll = x_ll.shape
    assert (Hh, Wh) == (2 * Hl, 2 * Wl) and (Hl, Wl) == (2 * Hll, 2 * Wll)
    g_out = packed["w_h2h"].shape[0]
    a_out = packed["w_h2l"].shape[0]
    b_out = packed["w_l2ll"].shape[0]

    # NCHW -> NHWC once per input (channels-last feeds the in-kernel im2col).
    # The output side needs NO transpose: the kernel's lane-dense (Cout, H*W)
    # block is exactly flattened NCHW, so only free metadata reshapes remain.
    xh = jnp.transpose(x_h, (0, 2, 3, 1))
    xl = jnp.transpose(x_l, (0, 2, 3, 1))
    xll = jnp.transpose(x_ll, (0, 2, 3, 1))

    # Constant 0/1 nearest-upsample matrices (trace-time constants).
    u_l2h = _nearest_upsample_matrix(Hl, Wl)       # (Hl*Wl, Hh*Wh)
    u_ll2l = _nearest_upsample_matrix(Hll, Wll)    # (Hll*Wll, Hl*Wl)

    full = lambda shape: pl.BlockSpec(tuple(shape), lambda n: (0,) * len(shape))
    per_img = lambda h, w, c: pl.BlockSpec((None, h, w, c),
                                           lambda n: (n, 0, 0, 0))

    out_h, out_l, out_ll = pl.pallas_call(
        _multi_octave_kernel,
        out_shape=(
            jax.ShapeDtypeStruct((N, g_out, Hh * Wh), x_h.dtype),
            jax.ShapeDtypeStruct((N, a_out, Hl * Wl), x_h.dtype),
            jax.ShapeDtypeStruct((N, b_out, Hll * Wll), x_h.dtype),
        ),
        grid=(N,),
        in_specs=[
            per_img(Hh, Wh, g_in),
            per_img(Hl, Wl, a_in),
            per_img(Hll, Wll, b_in),
            full(packed["w_h2h"].shape),
            full(packed["w_h2l"].shape),
            full(packed["w_l"].shape),
            full(packed["w_l2ll"].shape),
            full(packed["w_ll"].shape),
            full(u_l2h.shape),
            full(u_ll2l.shape),
        ],
        out_specs=(
            pl.BlockSpec((None, g_out, Hh * Wh), lambda n: (n, 0, 0)),
            pl.BlockSpec((None, a_out, Hl * Wl), lambda n: (n, 0, 0)),
            pl.BlockSpec((None, b_out, Hll * Wll), lambda n: (n, 0, 0)),
        ),
        scratch_shapes=[
            pltpu.VMEM((Hh + 2, Wh + 2, g_in), jnp.bfloat16),    # padded x_h
            pltpu.VMEM((Hl + 2, Wl + 2, g_in), jnp.bfloat16),    # padded pool(x_h)
            pltpu.VMEM((Hl + 2, Wl + 2, a_in), jnp.bfloat16),    # padded x_l
            pltpu.VMEM((Hll + 2, Wll + 2, a_in), jnp.bfloat16),  # padded pool(x_l)
            pltpu.VMEM((Hll + 2, Wll + 2, b_in), jnp.bfloat16),  # padded x_ll
            pltpu.VMEM((Hh // 2, Wh, g_in), jnp.float32),        # pool row sums
            pltpu.VMEM((Hl // 2, Wl, a_in), jnp.float32),
        ],
        compiler_params=pltpu.CompilerParams(
            dimension_semantics=("parallel",)),   # batch -> both TCs on v7x
    )(xh, xl, xll,
      packed["w_h2h"], packed["w_h2l"], packed["w_l"], packed["w_l2ll"],
      packed["w_ll"], u_l2h, u_ll2l)

    return (out_h.reshape(N, g_out, Hh, Wh),
            out_l.reshape(N, a_out, Hl, Wl),
            out_ll.reshape(N, b_out, Hll, Wll))


# ----------------------------------------------------------------------------
# Pure-JAX (XLA) references of the same module, for correctness checks only.
# ----------------------------------------------------------------------------
def _conv_ref(x, w, dtype=None, padding=1):
    if dtype is not None:
        x = x.astype(dtype)
        w = w.astype(dtype)
    return jax.lax.conv_general_dilated(
        x, w, (1, 1), [(padding, padding), (padding, padding)],
        dimension_numbers=("NCHW", "OIHW", "NCHW"),
        preferred_element_type=jnp.float32)


def multi_octave_ref(params, x_h, x_l, x_ll, dtype=None):
    conv = lambda x, w: _conv_ref(x, w, dtype)
    pool = lambda t: t.reshape(t.shape[0], t.shape[1], t.shape[2] // 2, 2,
                               t.shape[3] // 2, 2).mean(axis=(3, 5))
    up = lambda t: jnp.repeat(jnp.repeat(t, 2, axis=2), 2, axis=3)
    x_h2h = conv(x_h, params["h2h"])
    x_h2l = conv(pool(x_h), params["h2l"])
    x_l2h = up(conv(x_l, params["l2h"]))
    x_l2l = conv(x_l, params["l2l"])
    x_l2ll = conv(pool(x_l), params["l2ll"])
    x_ll2l = up(conv(x_ll, params["ll2l"]))
    x_ll2ll = conv(x_ll, params["ll2ll"])
    return (x_h2h + x_l2h, x_h2l + x_l2l + x_ll2l, x_l2ll + x_ll2ll)


def init_conv_weight(key, cout, cin, k):
    fan_in = cin * k * k
    bound = 1.0 / (fan_in ** 0.5)
    return jax.random.uniform(key, (cout, cin, k, k), jnp.float32, -bound, bound)


if __name__ == "__main__":
    key = jax.random.PRNGKey(0)
    ks = jax.random.split(key, 10)

    in_channels, out_channels, ksize = 8, 8, 3
    alpha_in = alpha_out = beta_in = beta_out = 0.25
    a_in = int(alpha_in * in_channels)                     # 2
    b_in = int(beta_in * in_channels)                      # 2
    g_in = in_channels - a_in - b_in                       # 4
    a_out = int(alpha_out * out_channels)                  # 2
    b_out = int(beta_out * out_channels)                   # 2
    g_out = out_channels - a_out - b_out                   # 4

    params = {
        "h2h": init_conv_weight(ks[0], g_out, g_in, ksize),
        "h2l": init_conv_weight(ks[1], a_out, g_in, ksize),
        "l2h": init_conv_weight(ks[2], g_out, a_in, ksize),
        "l2l": init_conv_weight(ks[3], a_out, a_in, ksize),
        "l2ll": init_conv_weight(ks[4], b_out, a_in, ksize),
        "ll2l": init_conv_weight(ks[5], a_out, b_in, ksize),
        "ll2ll": init_conv_weight(ks[6], b_out, b_in, ksize),
    }

    # Octave inputs: x_h full res, x_l half res, x_ll quarter res (NCHW).
    x_h = jax.random.normal(ks[7], (2, g_in, 16, 16), jnp.float32)
    x_l = jax.random.normal(ks[8], (2, a_in, 8, 8), jnp.float32)
    x_ll = jax.random.normal(ks[9], (2, b_in, 4, 4), jnp.float32)

    # One-time weight packing / Cout fusion / bf16 cast (outside the jit).
    packed = prepare_params(params)

    fwd = jax.jit(multi_octave_forward)
    out_h, out_l, out_ll = fwd(packed, x_h, x_l, x_ll)
    jax.block_until_ready((out_h, out_l, out_ll))

    assert out_h.shape == (2, g_out, 16, 16)
    assert out_l.shape == (2, a_out, 8, 8)
    assert out_ll.shape == (2, b_out, 4, 4)

    # Precision-matched reference (bf16 conv operands, f32 accumulation), same
    # quantization as the kernel -> tight tolerance.
    mh, ml, mll = multi_octave_ref(params, x_h, x_l, x_ll, dtype=jnp.bfloat16)
    assert jnp.allclose(out_h, mh, atol=5e-3, rtol=5e-3)
    assert jnp.allclose(out_l, ml, atol=5e-3, rtol=5e-3)
    assert jnp.allclose(out_ll, mll, atol=5e-3, rtol=5e-3)

    # Loose sanity check against the full-f32 reference (bf16 MXU inputs).
    fh, fl, fll = multi_octave_ref(params, x_h, x_l, x_ll)
    assert jnp.allclose(out_h, fh, atol=1e-1, rtol=1e-1)
    assert jnp.allclose(out_l, fl, atol=1e-1, rtol=1e-1)
    assert jnp.allclose(out_ll, fll, atol=1e-1, rtol=1e-1)

    print("KERNEL_OK")
</pallas_src>

<mosaic_0001>
module attributes {stable_mosaic.version = 11 : i64} {
  func.func @_multi_octave_kernel(%arg0: i32, %arg1: memref<1x16x16x4xf32, #tpu.memory_space<vmem>>, %arg2: memref<1x8x8x2xf32, #tpu.memory_space<vmem>>, %arg3: memref<1x4x4x2xf32, #tpu.memory_space<vmem>>, %arg4: memref<4x36xbf16, #tpu.memory_space<vmem>>, %arg5: memref<2x36xbf16, #tpu.memory_space<vmem>>, %arg6: memref<6x18xbf16, #tpu.memory_space<vmem>>, %arg7: memref<2x18xbf16, #tpu.memory_space<vmem>>, %arg8: memref<4x18xbf16, #tpu.memory_space<vmem>>, %arg9: memref<64x256xf32, #tpu.memory_space<vmem>>, %arg10: memref<16x64xf32, #tpu.memory_space<vmem>>, %arg11: memref<1x4x256xf32, #tpu.memory_space<vmem>>, %arg12: memref<1x2x64xf32, #tpu.memory_space<vmem>>, %arg13: memref<1x2x16xf32, #tpu.memory_space<vmem>>, %arg14: memref<18x18x4xbf16, #tpu.memory_space<vmem>>, %arg15: memref<10x10x4xbf16, #tpu.memory_space<vmem>>, %arg16: memref<10x10x2xbf16, #tpu.memory_space<vmem>>, %arg17: memref<6x6x2xbf16, #tpu.memory_space<vmem>>, %arg18: memref<6x6x2xbf16, #tpu.memory_space<vmem>>, %arg19: memref<8x16x4xf32, #tpu.memory_space<vmem>>, %arg20: memref<4x8x2xf32, #tpu.memory_space<vmem>>) attributes {dimension_semantics = [#tpu.dimension_semantics<parallel>], iteration_bounds = array<i64: 2>, scalar_prefetch = 0 : i64, scratch_operands = 7 : i64, tpu.core_type = #tpu.core_type<tc>, window_params = [{transform_indices = @transform_0, window_bounds = array<i64: 1, 16, 16, 4>}, {transform_indices = @transform_1, window_bounds = array<i64: 1, 8, 8, 2>}, {transform_indices = @transform_2, window_bounds = array<i64: 1, 4, 4, 2>}, {pipeline_mode = #tpu.pipeline_mode<synchronous>, transform_indices = @transform_3, window_bounds = array<i64: 4, 36>}, {pipeline_mode = #tpu.pipeline_mode<synchronous>, transform_indices = @transform_4, window_bounds = array<i64: 2, 36>}, {pipeline_mode = #tpu.pipeline_mode<synchronous>, transform_indices = @transform_5, window_bounds = array<i64: 6, 18>}, {pipeline_mode = #tpu.pipeline_mode<synchronous>, transform_indices = @transform_6, window_bounds = array<i64: 2, 18>}, {pipeline_mode = #tpu.pipeline_mode<synchronous>, transform_indices = @transform_7, window_bounds = array<i64: 4, 18>}, {pipeline_mode = #tpu.pipeline_mode<synchronous>, transform_indices = @transform_8, window_bounds = array<i64: 64, 256>}, {pipeline_mode = #tpu.pipeline_mode<synchronous>, transform_indices = @transform_9, window_bounds = array<i64: 16, 64>}, {transform_indices = @transform_10, window_bounds = array<i64: 1, 4, 256>}, {transform_indices = @transform_11, window_bounds = array<i64: 1, 2, 64>}, {transform_indices = @transform_12, window_bounds = array<i64: 1, 2, 16>}]} {
    %c0 = arith.constant 0 : index
    %c0_0 = arith.constant 0 : index
    %c0_1 = arith.constant 0 : index
    %c0_2 = arith.constant 0 : index
    %0 = vector.load %arg1[%c0, %c0_0, %c0_1, %c0_2] : memref<1x16x16x4xf32, #tpu.memory_space<vmem>>, vector<1x16x16x4xf32>
    %1 = vector.shape_cast %0 : vector<1x16x16x4xf32> to vector<16x16x4xf32>
    %cst = arith.constant 0.000000e+00 : bf16
    %2 = vector.broadcast %cst : bf16 to vector<18x18x4xbf16>
    %c0_3 = arith.constant 0 : index
    %c0_4 = arith.constant 0 : index
    %c0_5 = arith.constant 0 : index
    %3 = vector.load %arg14[%c0_3, %c0_4, %c0_5] : memref<18x18x4xbf16, #tpu.memory_space<vmem>>, vector<18x18x4xbf16>
    tpu.vector_store %arg14[%c0_3, %c0_4, %c0_5], %2 {strides = array<i32>} : memref<18x18x4xbf16, #tpu.memory_space<vmem>>, vector<18x18x4xbf16>,
    %4 = arith.truncf %1 : vector<16x16x4xf32> to vector<16x16x4xbf16>
    %c1 = arith.constant 1 : index
    %c1_6 = arith.constant 1 : index
    %c0_7 = arith.constant 0 : index
    %5 = vector.load %arg14[%c1, %c1_6, %c0_7] : memref<18x18x4xbf16, #tpu.memory_space<vmem>>, vector<16x16x4xbf16>
    tpu.vector_store %arg14[%c1, %c1_6, %c0_7], %4 {strides = array<i32>} : memref<18x18x4xbf16, #tpu.memory_space<vmem>>, vector<16x16x4xbf16>,
    %c0_8 = arith.constant 0 : index
    %c0_9 = arith.constant 0 : index
    %c0_10 = arith.constant 0 : index
    %c0_11 = arith.constant 0 : index
    %6 = vector.load %arg2[%c0_8, %c0_9, %c0_10, %c0_11] : memref<1x8x8x2xf32, #tpu.memory_space<vmem>>, vector<1x8x8x2xf32>
    %7 = vector.shape_cast %6 : vector<1x8x8x2xf32> to vector<8x8x2xf32>
    %cst_12 = arith.constant 0.000000e+00 : bf16
    %8 = vector.broadcast %cst_12 : bf16 to vector<10x10x2xbf16>
    %c0_13 = arith.constant 0 : index
    %c0_14 = arith.constant 0 : index
    %c0_15 = arith.constant 0 : index
    %9 = vector.load %arg16[%c0_13, %c0_14, %c0_15] : memref<10x10x2xbf16, #tpu.memory_space<vmem>>, vector<10x10x2xbf16>
    tpu.vector_store %arg16[%c0_13, %c0_14, %c0_15], %8 {strides = array<i32>} : memref<10x10x2xbf16, #tpu.memory_space<vmem>>, vector<10x10x2xbf16>,
    %10 = arith.truncf %7 : vector<8x8x2xf32> to vector<8x8x2xbf16>
    %c1_16 = arith.constant 1 : index
    %c1_17 = arith.constant 1 : index
    %c0_18 = arith.constant 0 : index
    %11 = vector.load %arg16[%c1_16, %c1_17, %c0_18] : memref<10x10x2xbf16, #tpu.memory_space<vmem>>, vector<8x8x2xbf16>
    tpu.vector_store %arg16[%c1_16, %c1_17, %c0_18], %10 {strides = array<i32>} : memref<10x10x2xbf16, #tpu.memory_space<vmem>>, vector<8x8x2xbf16>,
    %c0_19 = arith.constant 0 : index
    %c0_20 = arith.constant 0 : index
    %c0_21 = arith.constant 0 : index
    %c0_22 = arith.constant 0 : index
    %12 = vector.load %arg3[%c0_19, %c0_20, %c0_21, %c0_22] : memref<1x4x4x2xf32, #tpu.memory_space<vmem>>, vector<1x4x4x2xf32>
    %13 = vector.shape_cast %12 : vector<1x4x4x2xf32> to vector<4x4x2xf32>
    %cst_23 = arith.constant 0.000000e+00 : bf16
    %14 = vector.broadcast %cst_23 : bf16 to vector<6x6x2xbf16>
    %c0_24 = arith.constant 0 : index
    %c0_25 = arith.constant 0 : index
    %c0_26 = arith.constant 0 : index
    %15 = vector.load %arg18[%c0_24, %c0_25, %c0_26] : memref<6x6x2xbf16, #tpu.memory_space<vmem>>, vector<6x6x2xbf16>
    tpu.vector_store %arg18[%c0_24, %c0_25, %c0_26], %14 {strides = array<i32>} : memref<6x6x2xbf16, #tpu.memory_space<vmem>>, vector<6x6x2xbf16>,
    %16 = arith.truncf %13 : vector<4x4x2xf32> to vector<4x4x2xbf16>
    %c1_27 = arith.constant 1 : index
    %c1_28 = arith.constant 1 : index
    %c0_29 = arith.constant 0 : index
    %17 = vector.load %arg18[%c1_27, %c1_28, %c0_29] : memref<6x6x2xbf16, #tpu.memory_space<vmem>>, vector<4x4x2xbf16>
    tpu.vector_store %arg18[%c1_27, %c1_28, %c0_29], %16 {strides = array<i32>} : memref<6x6x2xbf16, #tpu.memory_space<vmem>>, vector<4x4x2xbf16>,
    %c0_30 = arith.constant 0 : index
    %c0_31 = arith.constant 0 : index
    %c0_32 = arith.constant 0 : index
    %c0_33 = arith.constant 0 : index
    %18 = tpu.strided_load %arg1[%c0_30, %c0_31, %c0_32, %c0_33] {strides = array<i32: 1, 2, 1, 1>} : memref<1x16x16x4xf32, #tpu.memory_space<vmem>>, vector<1x8x16x4xf32>
    %19 = vector.shape_cast %18 : vector<1x8x16x4xf32> to vector<8x16x4xf32>
    %c0_34 = arith.constant 0 : index
    %c1_35 = arith.constant 1 : index
    %c0_36 = arith.constant 0 : index
    %c0_37 = arith.constant 0 : index
    %20 = tpu.strided_load %arg1[%c0_34, %c1_35, %c0_36, %c0_37] {strides = array<i32: 1, 2, 1, 1>} : memref<1x16x16x4xf32, #tpu.memory_space<vmem>>, vector<1x8x16x4xf32>
    %21 = vector.shape_cast %20 : vector<1x8x16x4xf32> to vector<8x16x4xf32>
    %22 = arith.addf %19, %21 : vector<8x16x4xf32>
    %c0_38 = arith.constant 0 : index
    %c0_39 = arith.constant 0 : index
    %c0_40 = arith.constant 0 : index
    %23 = vector.load %arg19[%c0_38, %c0_39, %c0_40] : memref<8x16x4xf32, #tpu.memory_space<vmem>>, vector<8x16x4xf32>
    tpu.vector_store %arg19[%c0_38, %c0_39, %c0_40], %22 {strides = array<i32>} : memref<8x16x4xf32, #tpu.memory_space<vmem>>, vector<8x16x4xf32>,
    %c0_41 = arith.constant 0 : index
    %c0_42 = arith.constant 0 : index
    %c0_43 = arith.constant 0 : index
    %24 = tpu.strided_load %arg19[%c0_41, %c0_42, %c0_43] {strides = array<i32: 1, 2, 1>} : memref<8x16x4xf32, #tpu.memory_space<vmem>>, vector<8x8x4xf32>
    %c0_44 = arith.constant 0 : index
    %c1_45 = arith.constant 1 : index
    %c0_46 = arith.constant 0 : index
    %25 = tpu.strided_load %arg19[%c0_44, %c1_45, %c0_46] {strides = array<i32: 1, 2, 1>} : memref<8x16x4xf32, #tpu.memory_space<vmem>>, vector<8x8x4xf32>
    %26 = arith.addf %24, %25 : vector<8x8x4xf32>
    %cst_47 = arith.constant 2.500000e-01 : f32
    %27 = vector.broadcast %cst_47 : f32 to vector<8x8x4xf32>
    %28 = arith.mulf %27, %26 : vector<8x8x4xf32>
    %cst_48 = arith.constant 0.000000e+00 : bf16
    %29 = vector.broadcast %cst_48 : bf16 to vector<10x10x4xbf16>
    %c0_49 = arith.constant 0 : index
    %c0_50 = arith.constant 0 : index
    %c0_51 = arith.constant 0 : index
    %30 = vector.load %arg15[%c0_49, %c0_50, %c0_51] : memref<10x10x4xbf16, #tpu.memory_space<vmem>>, vector<10x10x4xbf16>
    tpu.vector_store %arg15[%c0_49, %c0_50, %c0_51], %29 {strides = array<i32>} : memref<10x10x4xbf16, #tpu.memory_space<vmem>>, vector<10x10x4xbf16>,
    %31 = arith.truncf %28 : vector<8x8x4xf32> to vector<8x8x4xbf16>
    %c1_52 = arith.constant 1 : index
    %c1_53 = arith.constant 1 : index
    %c0_54 = arith.constant 0 : index
    %32 = vector.load %arg15[%c1_52, %c1_53, %c0_54] : memref<10x10x4xbf16, #tpu.memory_space<vmem>>, vector<8x8x4xbf16>
    tpu.vector_store %arg15[%c1_52, %c1_53, %c0_54], %31 {strides = array<i32>} : memref<10x10x4xbf16, #tpu.memory_space<vmem>>, vector<8x8x4xbf16>,
    %c0_55 = arith.constant 0 : index
    %c0_56 = arith.constant 0 : index
    %c0_57 = arith.constant 0 : index
    %c0_58 = arith.constant 0 : index
    %33 = tpu.strided_load %arg2[%c0_55, %c0_56, %c0_57, %c0_58] {strides = array<i32: 1, 2, 1, 1>} : memref<1x8x8x2xf32, #tpu.memory_space<vmem>>, vector<1x4x8x2xf32>
    %34 = vector.shape_cast %33 : vector<1x4x8x2xf32> to vector<4x8x2xf32>
    %c0_59 = arith.constant 0 : index
    %c1_60 = arith.constant 1 : index
    %c0_61 = arith.constant 0 : index
    %c0_62 = arith.constant 0 : index
    %35 = tpu.strided_load %arg2[%c0_59, %c1_60, %c0_61, %c0_62] {strides = array<i32: 1, 2, 1, 1>} : memref<1x8x8x2xf32, #tpu.memory_space<vmem>>, vector<1x4x8x2xf32>
    %36 = vector.shape_cast %35 : vector<1x4x8x2xf32> to vector<4x8x2xf32>
    %37 = arith.addf %34, %36 : vector<4x8x2xf32>
    %c0_63 = arith.constant 0 : index
    %c0_64 = arith.constant 0 : index
    %c0_65 = arith.constant 0 : index
    %38 = vector.load %arg20[%c0_63, %c0_64, %c0_65] : memref<4x8x2xf32, #tpu.memory_space<vmem>>, vector<4x8x2xf32>
    tpu.vector_store %arg20[%c0_63, %c0_64, %c0_65], %37 {strides = array<i32>} : memref<4x8x2xf32, #tpu.memory_space<vmem>>, vector<4x8x2xf32>,
    %c0_66 = arith.constant 0 : index
    %c0_67 = arith.constant 0 : index
    %c0_68 = arith.constant 0 : index
    %39 = tpu.strided_load %arg20[%c0_66, %c0_67, %c0_68] {strides = array<i32: 1, 2, 1>} : memref<4x8x2xf32, #tpu.memory_space<vmem>>, vector<4x4x2xf32>
    %c0_69 = arith.constant 0 : index
    %c1_70 = arith.constant 1 : index
    %c0_71 = arith.constant 0 : index
    %40 = tpu.strided_load %arg20[%c0_69, %c1_70, %c0_71] {strides = array<i32: 1, 2, 1>} : memref<4x8x2xf32, #tpu.memory_space<vmem>>, vector<4x4x2xf32>
    %41 = arith.addf %39, %40 : vector<4x4x2xf32>
    %cst_72 = arith.constant 2.500000e-01 : f32
    %42 = vector.broadcast %cst_72 : f32 to vector<4x4x2xf32>
    %43 = arith.mulf %42, %41 : vector<4x4x2xf32>
    %cst_73 = arith.constant 0.000000e+00 : bf16
    %44 = vector.broadcast %cst_73 : bf16 to vector<6x6x2xbf16>
    %c0_74 = arith.constant 0 : index
    %c0_75 = arith.constant 0 : index
    %c0_76 = arith.constant 0 : index
    %45 = vector.load %arg17[%c0_74, %c0_75, %c0_76] : memref<6x6x2xbf16, #tpu.memory_space<vmem>>, vector<6x6x2xbf16>
    tpu.vector_store %arg17[%c0_74, %c0_75, %c0_76], %44 {strides = array<i32>} : memref<6x6x2xbf16, #tpu.memory_space<vmem>>, vector<6x6x2xbf16>,
    %46 = arith.truncf %43 : vector<4x4x2xf32> to vector<4x4x2xbf16>
    %c1_77 = arith.constant 1 : index
    %c1_78 = arith.constant 1 : index
    %c0_79 = arith.constant 0 : index
    %47 = vector.load %arg17[%c1_77, %c1_78, %c0_79] : memref<6x6x2xbf16, #tpu.memory_space<vmem>>, vector<4x4x2xbf16>
    tpu.vector_store %arg17[%c1_77, %c1_78, %c0_79], %46 {strides = array<i32>} : memref<6x6x2xbf16, #tpu.memory_space<vmem>>, vector<4x4x2xbf16>,
    %c0_80 = arith.constant 0 : index
    %c0_81 = arith.constant 0 : index
    %c0_82 = arith.constant 0 : index
    %48 = vector.load %arg14[%c0_80, %c0_81, %c0_82] : memref<18x18x4xbf16, #tpu.memory_space<vmem>>, vector<16x16x4xbf16>
    %c0_83 = arith.constant 0 : index
    %c1_84 = arith.constant 1 : index
    %c0_85 = arith.constant 0 : index
    %49 = vector.load %arg14[%c0_83, %c1_84, %c0_85] : memref<18x18x4xbf16, #tpu.memory_space<vmem>>, vector<16x16x4xbf16>
    %c0_86 = arith.constant 0 : index
    %c2 = arith.constant 2 : index
    %c0_87 = arith.constant 0 : index
    %50 = vector.load %arg14[%c0_86, %c2, %c0_87] : memref<18x18x4xbf16, #tpu.memory_space<vmem>>, vector<16x16x4xbf16>
    %c1_88 = arith.constant 1 : index
    %c0_89 = arith.constant 0 : index
    %c0_90 = arith.constant 0 : index
    %51 = vector.load %arg14[%c1_88, %c0_89, %c0_90] : memref<18x18x4xbf16, #tpu.memory_space<vmem>>, vector<16x16x4xbf16>
    %c1_91 = arith.constant 1 : index
    %c1_92 = arith.constant 1 : index
    %c0_93 = arith.constant 0 : index
    %52 = vector.load %arg14[%c1_91, %c1_92, %c0_93] : memref<18x18x4xbf16, #tpu.memory_space<vmem>>, vector<16x16x4xbf16>
    %c1_94 = arith.constant 1 : index
    %c2_95 = arith.constant 2 : index
    %c0_96 = arith.constant 0 : index
    %53 = vector.load %arg14[%c1_94, %c2_95, %c0_96] : memref<18x18x4xbf16, #tpu.memory_space<vmem>>, vector<16x16x4xbf16>
    %c2_97 = arith.constant 2 : index
    %c0_98 = arith.constant 0 : index
    %c0_99 = arith.constant 0 : index
    %54 = vector.load %arg14[%c2_97, %c0_98, %c0_99] : memref<18x18x4xbf16, #tpu.memory_space<vmem>>, vector<16x16x4xbf16>
    %c2_100 = arith.constant 2 : index
    %c1_101 = arith.constant 1 : index
    %c0_102 = arith.constant 0 : index
    %55 = vector.load %arg14[%c2_100, %c1_101, %c0_102] : memref<18x18x4xbf16, #tpu.memory_space<vmem>>, vector<16x16x4xbf16>
    %c2_103 = arith.constant 2 : index
    %c2_104 = arith.constant 2 : index
    %c0_105 = arith.constant 0 : index
    %56 = vector.load %arg14[%c2_103, %c2_104, %c0_105] : memref<18x18x4xbf16, #tpu.memory_space<vmem>>, vector<16x16x4xbf16>
    %57 = tpu.concatenate %48, %49, %50, %51, %52, %53, %54, %55, %56 in 2 : vector<16x16x4xbf16>, vector<16x16x4xbf16>, vector<16x16x4xbf16>, vector<16x16x4xbf16>, vector<16x16x4xbf16>, vector<16x16x4xbf16>, vector<16x16x4xbf16>, vector<16x16x4xbf16>, vector<16x16x4xbf16> -> vector<16x16x36xbf16>
    %58 = vector.shape_cast %57 : vector<16x16x36xbf16> to vector<256x36xbf16>
    %c0_106 = arith.constant 0 : index
    %c0_107 = arith.constant 0 : index
    %c0_108 = arith.constant 0 : index
    %59 = vector.load %arg15[%c0_106, %c0_107, %c0_108] : memref<10x10x4xbf16, #tpu.memory_space<vmem>>, vector<8x8x4xbf16>
    %c0_109 = arith.constant 0 : index
    %c1_110 = arith.constant 1 : index
    %c0_111 = arith.constant 0 : index
    %60 = vector.load %arg15[%c0_109, %c1_110, %c0_111] : memref<10x10x4xbf16, #tpu.memory_space<vmem>>, vector<8x8x4xbf16>
    %c0_112 = arith.constant 0 : index
    %c2_113 = arith.constant 2 : index
    %c0_114 = arith.constant 0 : index
    %61 = vector.load %arg15[%c0_112, %c2_113, %c0_114] : memref<10x10x4xbf16, #tpu.memory_space<vmem>>, vector<8x8x4xbf16>
    %c1_115 = arith.constant 1 : index
    %c0_116 = arith.constant 0 : index
    %c0_117 = arith.constant 0 : index
    %62 = vector.load %arg15[%c1_115, %c0_116, %c0_117] : memref<10x10x4xbf16, #tpu.memory_space<vmem>>, vector<8x8x4xbf16>
    %c1_118 = arith.constant 1 : index
    %c1_119 = arith.constant 1 : index
    %c0_120 = arith.constant 0 : index
    %63 = vector.load %arg15[%c1_118, %c1_119, %c0_120] : memref<10x10x4xbf16, #tpu.memory_space<vmem>>, vector<8x8x4xbf16>
    %c1_121 = arith.constant 1 : index
    %c2_122 = arith.constant 2 : index
    %c0_123 = arith.constant 0 : index
    %64 = vector.load %arg15[%c1_121, %c2_122, %c0_123] : memref<10x10x4xbf16, #tpu.memory_space<vmem>>, vector<8x8x4xbf16>
    %c2_124 = arith.constant 2 : index
    %c0_125 = arith.constant 0 : index
    %c0_126 = arith.constant 0 : index
    %65 = vector.load %arg15[%c2_124, %c0_125, %c0_126] : memref<10x10x4xbf16, #tpu.memory_space<vmem>>, vector<8x8x4xbf16>
    %c2_127 = arith.constant 2 : index
    %c1_128 = arith.constant 1 : index
    %c0_129 = arith.constant 0 : index
    %66 = vector.load %arg15[%c2_127, %c1_128, %c0_129] : memref<10x10x4xbf16, #tpu.memory_space<vmem>>, vector<8x8x4xbf16>
    %c2_130 = arith.constant 2 : index
    %c2_131 = arith.constant 2 : index
    %c0_132 = arith.constant 0 : index
    %67 = vector.load %arg15[%c2_130, %c2_131, %c0_132] : memref<10x10x4xbf16, #tpu.memory_space<vmem>>, vector<8x8x4xbf16>
    %68 = tpu.concatenate %59, %60, %61, %62, %63, %64, %65, %66, %67 in 2 : vector<8x8x4xbf16>, vector<8x8x4xbf16>, vector<8x8x4xbf16>, vector<8x8x4xbf16>, vector<8x8x4xbf16>, vector<8x8x4xbf16>, vector<8x8x4xbf16>, vector<8x8x4xbf16>, vector<8x8x4xbf16> -> vector<8x8x36xbf16>
    %69 = vector.shape_cast %68 : vector<8x8x36xbf16> to vector<64x36xbf16>
    %c0_133 = arith.constant 0 : index
    %c0_134 = arith.constant 0 : index
    %c0_135 = arith.constant 0 : index
    %70 = vector.load %arg16[%c0_133, %c0_134, %c0_135] : memref<10x10x2xbf16, #tpu.memory_space<vmem>>, vector<8x8x2xbf16>
    %c0_136 = arith.constant 0 : index
    %c1_137 = arith.constant 1 : index
    %c0_138 = arith.constant 0 : index
    %71 = vector.load %arg16[%c0_136, %c1_137, %c0_138] : memref<10x10x2xbf16, #tpu.memory_space<vmem>>, vector<8x8x2xbf16>
    %c0_139 = arith.constant 0 : index
    %c2_140 = arith.constant 2 : index
    %c0_141 = arith.constant 0 : index
    %72 = vector.load %arg16[%c0_139, %c2_140, %c0_141] : memref<10x10x2xbf16, #tpu.memory_space<vmem>>, vector<8x8x2xbf16>
    %c1_142 = arith.constant 1 : index
    %c0_143 = arith.constant 0 : index
    %c0_144 = arith.constant 0 : index
    %73 = vector.load %arg16[%c1_142, %c0_143, %c0_144] : memref<10x10x2xbf16, #tpu.memory_space<vmem>>, vector<8x8x2xbf16>
    %c1_145 = arith.constant 1 : index
    %c1_146 = arith.constant 1 : index
    %c0_147 = arith.constant 0 : index
    %74 = vector.load %arg16[%c1_145, %c1_146, %c0_147] : memref<10x10x2xbf16, #tpu.memory_space<vmem>>, vector<8x8x2xbf16>
    %c1_148 = arith.constant 1 : index
    %c2_149 = arith.constant 2 : index
    %c0_150 = arith.constant 0 : index
    %75 = vector.load %arg16[%c1_148, %c2_149, %c0_150] : memref<10x10x2xbf16, #tpu.memory_space<vmem>>, vector<8x8x2xbf16>
    %c2_151 = arith.constant 2 : index
    %c0_152 = arith.constant 0 : index
    %c0_153 = arith.constant 0 : index
    %76 = vector.load %arg16[%c2_151, %c0_152, %c0_153] : memref<10x10x2xbf16, #tpu.memory_space<vmem>>, vector<8x8x2xbf16>
    %c2_154 = arith.constant 2 : index
    %c1_155 = arith.constant 1 : index
    %c0_156 = arith.constant 0 : index
    %77 = vector.load %arg16[%c2_154, %c1_155, %c0_156] : memref<10x10x2xbf16, #tpu.memory_space<vmem>>, vector<8x8x2xbf16>
    %c2_157 = arith.constant 2 : index
    %c2_158 = arith.constant 2 : index
    %c0_159 = arith.constant 0 : index
    %78 = vector.load %arg16[%c2_157, %c2_158, %c0_159] : memref<10x10x2xbf16, #tpu.memory_space<vmem>>, vector<8x8x2xbf16>
    %79 = tpu.concatenate %70, %71, %72, %73, %74, %75, %76, %77, %78 in 2 : vector<8x8x2xbf16>, vector<8x8x2xbf16>, vector<8x8x2xbf16>, vector<8x8x2xbf16>, vector<8x8x2xbf16>, vector<8x8x2xbf16>, vector<8x8x2xbf16>, vector<8x8x2xbf16>, vector<8x8x2xbf16> -> vector<8x8x18xbf16>
    %80 = vector.shape_cast %79 : vector<8x8x18xbf16> to vector<64x18xbf16>
    %c0_160 = arith.constant 0 : index
    %c0_161 = arith.constant 0 : index
    %c0_162 = arith.constant 0 : index
    %81 = vector.load %arg17[%c0_160, %c0_161, %c0_162] : memref<6x6x2xbf16, #tpu.memory_space<vmem>>, vector<4x4x2xbf16>
    %c0_163 = arith.constant 0 : index
    %c1_164 = arith.constant 1 : index
    %c0_165 = arith.constant 0 : index
    %82 = vector.load %arg17[%c0_163, %c1_164, %c0_165] : memref<6x6x2xbf16, #tpu.memory_space<vmem>>, vector<4x4x2xbf16>
    %c0_166 = arith.constant 0 : index
    %c2_167 = arith.constant 2 : index
    %c0_168 = arith.constant 0 : index
    %83 = vector.load %arg17[%c0_166, %c2_167, %c0_168] : memref<6x6x2xbf16, #tpu.memory_space<vmem>>, vector<4x4x2xbf16>
    %c1_169 = arith.constant 1 : index
    %c0_170 = arith.constant 0 : index
    %c0_171 = arith.constant 0 : index
    %84 = vector.load %arg17[%c1_169, %c0_170, %c0_171] : memref<6x6x2xbf16, #tpu.memory_space<vmem>>, vector<4x4x2xbf16>
    %c1_172 = arith.constant 1 : index
    %c1_173 = arith.constant 1 : index
    %c0_174 = arith.constant 0 : index
    %85 = vector.load %arg17[%c1_172, %c1_173, %c0_174] : memref<6x6x2xbf16, #tpu.memory_space<vmem>>, vector<4x4x2xbf16>
    %c1_175 = arith.constant 1 : index
    %c2_176 = arith.constant 2 : index
    %c0_177 = arith.constant 0 : index
    %86 = vector.load %arg17[%c1_175, %c2_176, %c0_177] : memref<6x6x2xbf16, #tpu.memory_space<vmem>>, vector<4x4x2xbf16>
    %c2_178 = arith.constant 2 : index
    %c0_179 = arith.constant 0 : index
    %c0_180 = arith.constant 0 : index
    %87 = vector.load %arg17[%c2_178, %c0_179, %c0_180] : memref<6x6x2xbf16, #tpu.memory_space<vmem>>, vector<4x4x2xbf16>
    %c2_181 = arith.constant 2 : index
    %c1_182 = arith.constant 1 : index
    %c0_183 = arith.constant 0 : index
    %88 = vector.load %arg17[%c2_181, %c1_182, %c0_183] : memref<6x6x2xbf16, #tpu.memory_space<vmem>>, vector<4x4x2xbf16>
    %c2_184 = arith.constant 2 : index
    %c2_185 = arith.constant 2 : index
    %c0_186 = arith.constant 0 : index
    %89 = vector.load %arg17[%c2_184, %c2_185, %c0_186] : memref<6x6x2xbf16, #tpu.memory_space<vmem>>, vector<4x4x2xbf16>
    %90 = tpu.concatenate %81, %82, %83, %84, %85, %86, %87, %88, %89 in 2 : vector<4x4x2xbf16>, vector<4x4x2xbf16>, vector<4x4x2xbf16>, vector<4x4x2xbf16>, vector<4x4x2xbf16>, vector<4x4x2xbf16>, vector<4x4x2xbf16>, vector<4x4x2xbf16>, vector<4x4x2xbf16> -> vector<4x4x18xbf16>
    %91 = vector.shape_cast %90 : vector<4x4x18xbf16> to vector<16x18xbf16>
    %c0_187 = arith.constant 0 : index
    %c0_188 = arith.constant 0 : index
    %c0_189 = arith.constant 0 : index
    %92 = vector.load %arg18[%c0_187, %c0_188, %c0_189] : memref<6x6x2xbf16, #tpu.memory_space<vmem>>, vector<4x4x2xbf16>
    %c0_190 = arith.constant 0 : index
    %c1_191 = arith.constant 1 : index
    %c0_192 = arith.constant 0 : index
    %93 = vector.load %arg18[%c0_190, %c1_191, %c0_192] : memref<6x6x2xbf16, #tpu.memory_space<vmem>>, vector<4x4x2xbf16>
    %c0_193 = arith.constant 0 : index
    %c2_194 = arith.constant 2 : index
    %c0_195 = arith.constant 0 : index
    %94 = vector.load %arg18[%c0_193, %c2_194, %c0_195] : memref<6x6x2xbf16, #tpu.memory_space<vmem>>, vector<4x4x2xbf16>
    %c1_196 = arith.constant 1 : index
    %c0_197 = arith.constant 0 : index
    %c0_198 = arith.constant 0 : index
    %95 = vector.load %arg18[%c1_196, %c0_197, %c0_198] : memref<6x6x2xbf16, #tpu.memory_space<vmem>>, vector<4x4x2xbf16>
    %c1_199 = arith.constant 1 : index
    %c1_200 = arith.constant 1 : index
    %c0_201 = arith.constant 0 : index
    %96 = vector.load %arg18[%c1_199, %c1_200, %c0_201] : memref<6x6x2xbf16, #tpu.memory_space<vmem>>, vector<4x4x2xbf16>
    %c1_202 = arith.constant 1 : index
    %c2_203 = arith.constant 2 : index
    %c0_204 = arith.constant 0 : index
    %97 = vector.load %arg18[%c1_202, %c2_203, %c0_204] : memref<6x6x2xbf16, #tpu.memory_space<vmem>>, vector<4x4x2xbf16>
    %c2_205 = arith.constant 2 : index
    %c0_206 = arith.constant 0 : index
    %c0_207 = arith.constant 0 : index
    %98 = vector.load %arg18[%c2_205, %c0_206, %c0_207] : memref<6x6x2xbf16, #tpu.memory_space<vmem>>, vector<4x4x2xbf16>
    %c2_208 = arith.constant 2 : index
    %c1_209 = arith.constant 1 : index
    %c0_210 = arith.constant 0 : index
    %99 = vector.load %arg18[%c2_208, %c1_209, %c0_210] : memref<6x6x2xbf16, #tpu.memory_space<vmem>>, vector<4x4x2xbf16>
    %c2_211 = arith.constant 2 : index
    %c2_212 = arith.constant 2 : index
    %c0_213 = arith.constant 0 : index
    %100 = vector.load %arg18[%c2_211, %c2_212, %c0_213] : memref<6x6x2xbf16, #tpu.memory_space<vmem>>, vector<4x4x2xbf16>
    %101 = tpu.concatenate %92, %93, %94, %95, %96, %97, %98, %99, %100 in 2 : vector<4x4x2xbf16>, vector<4x4x2xbf16>, vector<4x4x2xbf16>, vector<4x4x2xbf16>, vector<4x4x2xbf16>, vector<4x4x2xbf16>, vector<4x4x2xbf16>, vector<4x4x2xbf16>, vector<4x4x2xbf16> -> vector<4x4x18xbf16>
    %102 = vector.shape_cast %101 : vector<4x4x18xbf16> to vector<16x18xbf16>
    %c0_214 = arith.constant 0 : index
    %c0_215 = arith.constant 0 : index
    %103 = vector.load %arg4[%c0_214, %c0_215] : memref<4x36xbf16, #tpu.memory_space<vmem>>, vector<4x36xbf16>
    %cst_216 = arith.constant dense<0.000000e+00> : vector<4x256xf32>
    %104 = tpu.matmul %103, %58, %cst_216 {dimension_numbers = #tpu.dot_dimension_numbers<[1], [1], [0], [0], [0, 0, 1, 0], [], []>} : vector<4x36xbf16>, vector<256x36xbf16>, vector<4x256xf32> -> vector<4x256xf32>
    %c0_217 = arith.constant 0 : index
    %c0_218 = arith.constant 0 : index
    %105 = vector.load %arg5[%c0_217, %c0_218] : memref<2x36xbf16, #tpu.memory_space<vmem>>, vector<2x36xbf16>
    %cst_219 = arith.constant dense<0.000000e+00> : vector<2x64xf32>
    %106 = tpu.matmul %105, %69, %cst_219 {dimension_numbers = #tpu.dot_dimension_numbers<[1], [1], [0], [0], [0, 0, 1, 0], [], []>} : vector<2x36xbf16>, vector<64x36xbf16>, vector<2x64xf32> -> vector<2x64xf32>
    %c0_220 = arith.constant 0 : index
    %c0_221 = arith.constant 0 : index
    %107 = vector.load %arg6[%c0_220, %c0_221] : memref<6x18xbf16, #tpu.memory_space<vmem>>, vector<6x18xbf16>
    %cst_222 = arith.constant dense<0.000000e+00> : vector<6x64xf32>
    %108 = tpu.matmul %107, %80, %cst_222 {dimension_numbers = #tpu.dot_dimension_numbers<[1], [1], [0], [0], [0, 0, 1, 0], [], []>} : vector<6x18xbf16>, vector<64x18xbf16>, vector<6x64xf32> -> vector<6x64xf32>
    %c0_223 = arith.constant 0 : index
    %c0_224 = arith.constant 0 : index
    %109 = vector.load %arg7[%c0_223, %c0_224] : memref<2x18xbf16, #tpu.memory_space<vmem>>, vector<2x18xbf16>
    %cst_225 = arith.constant dense<0.000000e+00> : vector<2x16xf32>
    %110 = tpu.matmul %109, %91, %cst_225 {dimension_numbers = #tpu.dot_dimension_numbers<[1], [1], [0], [0], [0, 0, 1, 0], [], []>} : vector<2x18xbf16>, vector<16x18xbf16>, vector<2x16xf32> -> vector<2x16xf32>
    %c0_226 = arith.constant 0 : index
    %c0_227 = arith.constant 0 : index
    %111 = vector.load %arg8[%c0_226, %c0_227] : memref<4x18xbf16, #tpu.memory_space<vmem>>, vector<4x18xbf16>
    %cst_228 = arith.constant dense<0.000000e+00> : vector<4x16xf32>
    %112 = tpu.matmul %111, %102, %cst_228 {dimension_numbers = #tpu.dot_dimension_numbers<[1], [1], [0], [0], [0, 0, 1, 0], [], []>} : vector<4x18xbf16>, vector<16x18xbf16>, vector<4x16xf32> -> vector<4x16xf32>
    %113 = vector.extract_strided_slice %108 {offsets = [0, 0], sizes = [4, 64], strides = [1, 1]} : vector<6x64xf32> to vector<4x64xf32>
    %c0_229 = arith.constant 0 : index
    %c0_230 = arith.constant 0 : index
    %114 = vector.load %arg9[%c0_229, %c0_230] : memref<64x256xf32, #tpu.memory_space<vmem>>, vector<64x256xf32>
    %cst_231 = arith.constant dense<0.000000e+00> : vector<4x256xf32>
    %115 = tpu.matmul %113, %114, %cst_231 {dimension_numbers = #tpu.dot_dimension_numbers<[1], [0], [0], [1], [0, 0, 1, 1], [], []>} : vector<4x64xf32>, vector<64x256xf32>, vector<4x256xf32> -> vector<4x256xf32>
    %116 = vector.extract_strided_slice %112 {offsets = [0, 0], sizes = [2, 16], strides = [1, 1]} : vector<4x16xf32> to vector<2x16xf32>
    %c0_232 = arith.constant 0 : index
    %c0_233 = arith.constant 0 : index
    %117 = vector.load %arg10[%c0_232, %c0_233] : memref<16x64xf32, #tpu.memory_space<vmem>>, vector<16x64xf32>
    %cst_234 = arith.constant dense<0.000000e+00> : vector<2x64xf32>
    %118 = tpu.matmul %116, %117, %cst_234 {dimension_numbers = #tpu.dot_dimension_numbers<[1], [0], [0], [1], [0, 0, 1, 1], [], []>} : vector<2x16xf32>, vector<16x64xf32>, vector<2x64xf32> -> vector<2x64xf32>
    %119 = arith.addf %104, %115 : vector<4x256xf32>
    %c0_235 = arith.constant 0 : index
    %c0_236 = arith.constant 0 : index
    %c0_237 = arith.constant 0 : index
    %120 = vector.load %arg11[%c0_235, %c0_236, %c0_237] : memref<1x4x256xf32, #tpu.memory_space<vmem>>, vector<1x4x256xf32>
    %121 = vector.shape_cast %120 : vector<1x4x256xf32> to vector<4x256xf32>
    %122 = vector.shape_cast %119 : vector<4x256xf32> to vector<1x4x256xf32>
    tpu.vector_store %arg11[%c0_235, %c0_236, %c0_237], %122 {strides = array<i32>} : memref<1x4x256xf32, #tpu.memory_space<vmem>>, vector<1x4x256xf32>,
    %123 = vector.extract_strided_slice %108 {offsets = [4, 0], sizes = [2, 64], strides = [1, 1]} : vector<6x64xf32> to vector<2x64xf32>
    %124 = arith.addf %106, %123 : vector<2x64xf32>
    %125 = arith.addf %124, %118 : vector<2x64xf32>
    %c0_238 = arith.constant 0 : index
    %c0_239 = arith.constant 0 : index
    %c0_240 = arith.constant 0 : index
    %126 = vector.load %arg12[%c0_238, %c0_239, %c0_240] : memref<1x2x64xf32, #tpu.memory_space<vmem>>, vector<1x2x64xf32>
    %127 = vector.shape_cast %126 : vector<1x2x64xf32> to vector<2x64xf32>
    %128 = vector.shape_cast %125 : vector<2x64xf32> to vector<1x2x64xf32>
    tpu.vector_store %arg12[%c0_238, %c0_239, %c0_240], %128 {strides = array<i32>} : memref<1x2x64xf32, #tpu.memory_space<vmem>>, vector<1x2x64xf32>,
    %129 = vector.extract_strided_slice %112 {offsets = [2, 0], sizes = [2, 16], strides = [1, 1]} : vector<4x16xf32> to vector<2x16xf32>
    %130 = arith.addf %110, %129 : vector<2x16xf32>
    %c0_241 = arith.constant 0 : index
    %c0_242 = arith.constant 0 : index
    %c0_243 = arith.constant 0 : index
    %131 = vector.load %arg13[%c0_241, %c0_242, %c0_243] : memref<1x2x16xf32, #tpu.memory_space<vmem>>, vector<1x2x16xf32>
    %132 = vector.shape_cast %131 : vector<1x2x16xf32> to vector<2x16xf32>
    %133 = vector.shape_cast %130 : vector<2x16xf32> to vector<1x2x16xf32>
    tpu.vector_store %arg13[%c0_241, %c0_242, %c0_243], %133 {strides = array<i32>} : memref<1x2x16xf32, #tpu.memory_space<vmem>>, vector<1x2x16xf32>,
    return
  }
  func.func @transform_0(%arg0: i32) -> (i32, i32, i32, i32) {
    %c0_i32 = arith.constant 0 : i32
    %c0_i32_0 = arith.constant 0 : i32
    %c0_i32_1 = arith.constant 0 : i32
    %c0_i32_2 = arith.constant 0 : i32
    return %arg0, %c0_i32, %c0_i32_0, %c0_i32_1 : i32, i32, i32, i32
  }
  func.func @transform_1(%arg0: i32) -> (i32, i32, i32, i32) {
    %c0_i32 = arith.constant 0 : i32
    %c0_i32_0 = arith.constant 0 : i32
    %c0_i32_1 = arith.constant 0 : i32
    %c0_i32_2 = arith.constant 0 : i32
    return %arg0, %c0_i32, %c0_i32_0, %c0_i32_1 : i32, i32, i32, i32
  }
  func.func @transform_2(%arg0: i32) -> (i32, i32, i32, i32) {
    %c0_i32 = arith.constant 0 : i32
    %c0_i32_0 = arith.constant 0 : i32
    %c0_i32_1 = arith.constant 0 : i32
    %c0_i32_2 = arith.constant 0 : i32
    return %arg0, %c0_i32, %c0_i32_0, %c0_i32_1 : i32, i32, i32, i32
  }
  func.func @transform_3(%arg0: i32) -> (i32, i32) {
    %c0_i32 = arith.constant 0 : i32
    %c0_i32_0 = arith.constant 0 : i32
    %c0_i32_1 = arith.constant 0 : i32
    return %c0_i32, %c0_i32_0 : i32, i32
  }
  func.func @transform_4(%arg0: i32) -> (i32, i32) {
    %c0_i32 = arith.constant 0 : i32
    %c0_i32_0 = arith.constant 0 : i32
    %c0_i32_1 = arith.constant 0 : i32
    return %c0_i32, %c0_i32_0 : i32, i32
  }
  func.func @transform_5(%arg0: i32) -> (i32, i32) {
    %c0_i32 = arith.constant 0 : i32
    %c0_i32_0 = arith.constant 0 : i32
    %c0_i32_1 = arith.constant 0 : i32
    return %c0_i32, %c0_i32_0 : i32, i32
  }
  func.func @transform_6(%arg0: i32) -> (i32, i32) {
    %c0_i32 = arith.constant 0 : i32
    %c0_i32_0 = arith.constant 0 : i32
    %c0_i32_1 = arith.constant 0 : i32
    return %c0_i32, %c0_i32_0 : i32, i32
  }
  func.func @transform_7(%arg0: i32) -> (i32, i32) {
    %c0_i32 = arith.constant 0 : i32
    %c0_i32_0 = arith.constant 0 : i32
    %c0_i32_1 = arith.constant 0 : i32
    return %c0_i32, %c0_i32_0 : i32, i32
  }
  func.func @transform_8(%arg0: i32) -> (i32, i32) {
    %c0_i32 = arith.constant 0 : i32
    %c0_i32_0 = arith.constant 0 : i32
    %c0_i32_1 = arith.constant 0 : i32
    return %c0_i32, %c0_i32_0 : i32, i32
  }
  func.func @transform_9(%arg0: i32) -> (i32, i32) {
    %c0_i32 = arith.constant 0 : i32
    %c0_i32_0 = arith.constant 0 : i32
    %c0_i32_1 = arith.constant 0 : i32
    return %c0_i32, %c0_i32_0 : i32, i32
  }
  func.func @transform_10(%arg0: i32) -> (i32, i32, i32) {
    %c0_i32 = arith.constant 0 : i32
    %c0_i32_0 = arith.constant 0 : i32
    %c0_i32_1 = arith.constant 0 : i32
    return %arg0, %c0_i32, %c0_i32_0 : i32, i32, i32
  }
  func.func @transform_11(%arg0: i32) -> (i32, i32, i32) {
    %c0_i32 = arith.constant 0 : i32
    %c0_i32_0 = arith.constant 0 : i32
    %c0_i32_1 = arith.constant 0 : i32
    return %arg0, %c0_i32, %c0_i32_0 : i32, i32, i32
  }
  func.func @transform_12(%arg0: i32) -> (i32, i32, i32) {
    %c0_i32 = arith.constant 0 : i32
    %c0_i32_0 = arith.constant 0 : i32
    %c0_i32_1 = arith.constant 0 : i32
    return %arg0, %c0_i32, %c0_i32_0 : i32, i32, i32
  }
}

</mosaic_0001>

<llo_original>
// kernel: multi_octave_forward.1
$region0: #{multi_octave_forward.1}
  #allocation0 [shape = 'u32[]', space=smem, size = 0x4, offset = 0x4, fixed_abs, tag = 'smem constant byte address 0x4 - core index']
  #allocation1 [shape = 'u32[144,128]{1,0:T(1,128)}', space=vmem, size = 0x12000, scoped, tag = 'internal scratch']
  #allocation2 [shape = 'bf16[18,18,4]{2,1,0:T(8,128)(2,1)}', space=vmem, size = 0x1b000, scoped, tag = 'scratch operand']
  #allocation3 [shape = 'bf16[10,10,4]{2,1,0:T(8,128)(2,1)}', space=vmem, size = 0xa000, scoped, tag = 'scratch operand']
  #allocation4 [shape = 'bf16[10,10,2]{2,1,0:T(8,128)(2,1)}', space=vmem, size = 0xa000, scoped, tag = 'scratch operand']
  #allocation5 [shape = 'bf16[6,6,2]{2,1,0:T(8,128)(2,1)}', space=vmem, size = 0x3000, scoped, tag = 'scratch operand']
  #allocation6 [shape = 'bf16[6,6,2]{2,1,0:T(8,128)(2,1)}', space=vmem, size = 0x3000, scoped, tag = 'scratch operand']
  #allocation7 [shape = 'f32[8,16,4]{2,1,0:T(8,128)}', space=vmem, size = 0x10000, scoped, tag = 'scratch operand']
  #allocation8 [shape = 'f32[4,8,2]{2,1,0:T(8,128)}', space=vmem, size = 0x4000, scoped, tag = 'scratch operand']
  %s0 = inlined_call_operand.vmem [shape: f32[2,16,16,4], index: 0, kind: input, shape index: {}]
  %s1 = inlined_call_operand.vmem [shape: f32[2,8,8,2], index: 1, kind: input, shape index: {}]
  %s2 = inlined_call_operand.vmem [shape: f32[2,4,4,2], index: 2, kind: input, shape index: {}]
  %s3 = inlined_call_operand.vmem [shape: bf16[4,36], index: 3, kind: input, shape index: {}]
  %s4 = inlined_call_operand.vmem [shape: bf16[2,36], index: 4, kind: input, shape index: {}]
  %s5 = inlined_call_operand.vmem [shape: bf16[6,18], index: 5, kind: input, shape index: {}]
  %s6 = inlined_call_operand.vmem [shape: bf16[2,18], index: 6, kind: input, shape index: {}]
  %s7 = inlined_call_operand.vmem [shape: bf16[4,18], index: 7, kind: input, shape index: {}]
  %s8 = inlined_call_operand.vmem [shape: f32[64,256], index: 8, kind: input, shape index: {}]
  %s9 = inlined_call_operand.vmem [shape: f32[16,64], index: 9, kind: input, shape index: {}]
  %s10 = inlined_call_operand.vmem [shape: f32[2,4,256], index: 10, kind: output, shape index: {0}]
  %s11 = inlined_call_operand.vmem [shape: f32[2,2,64], index: 11, kind: output, shape index: {1}]
  %s12 = inlined_call_operand.vmem [shape: f32[2,2,16], index: 12, kind: output, shape index: {2}]
  %13 = xla_tuple %s10, %s11, %s12
  %s14 = sld [smem:[#allocation0]]
  $region89: #{multi_octave_forward.1} parent=0
    _
  %s16 = ssub.s32 1, %s14
  %s17 = scalar_select 0, %s16, %s14
  loop: start=0, step=1, limit=4
  $region2: #{multi_octave_forward.1} parent=0 // loop_pre_header
    _
  $region3: #{multi_octave_forward.1} parent=0 // loop_header
    %s19 = sphi 0, %s23
    %p20 = scmp.ge.s32.totalorder %s19, 4
    %s29 = sphi 0, %s31
    %s32 = sphi 0, %s29
    %s33 = sphi 0, %s32
    %s49 = sphi 0, %s33
    %s55 = sphi 0, %s57
    %s58 = sphi 0, %s55
    %s59 = sphi 0, %s58
    %s75 = sphi 0, %s59
    %s81 = sphi 0, %s83
    %s84 = sphi 0, %s81
    %s85 = sphi 0, %s84
    %s101 = sphi 0, %s85
    %s105 = sphi 0, %s105
    %s107 = sphi 0, %s105
    %s108 = sphi 0, %s107
    %s122 = sphi 0, %s108
    %s126 = sphi 0, %s126
    %s128 = sphi 0, %s126
    %s129 = sphi 0, %s128
    %s143 = sphi 0, %s129
    %s147 = sphi 0, %s147
    %s149 = sphi 0, %s147
    %s150 = sphi 0, %s149
    %s164 = sphi 0, %s150
    %s168 = sphi 0, %s168
    %s170 = sphi 0, %s168
    %s171 = sphi 0, %s170
    %s185 = sphi 0, %s171
    %s189 = sphi 0, %s189
    %s191 = sphi 0, %s189
    %s192 = sphi 0, %s191
    %s206 = sphi 0, %s192
    %s210 = sphi 0, %s210
    %s212 = sphi 0, %s210
    %s213 = sphi 0, %s212
    %s227 = sphi 0, %s213
    %s231 = sphi 0, %s231
    %s233 = sphi 0, %s231
    %s234 = sphi 0, %s233
    %s248 = sphi 0, %s234
    %s254 = sphi 0, %s256
    %s257 = sphi 0, %s254
    %s258 = sphi 0, %s257
    %s274 = sphi 0, %s258
    %s280 = sphi 0, %s282
    %s283 = sphi 0, %s280
    %s284 = sphi 0, %s283
    %s300 = sphi 0, %s284
    %s306 = sphi 0, %s308
    %s309 = sphi 0, %s306
    %s310 = sphi 0, %s309
    %s326 = sphi 0, %s310
  $region4: #{multi_octave_forward.1} parent=0 // loop_header_branch
    %22 = sbr.rel (%p20) target = $region8
  $region5: #{multi_octave_forward.1} parent=0 // loop_body
    %s24 = ssub.s32 %s19, 1
    %s25 = ssub.s32 %s19, 2
    %s26 = sadd.s32 %s19, 1
    %s27 = ssub.s32 %s19, %s26
    %p28 = scmp.eq.s32.totalorder %s27, 0
    %s30 = sadd.s32 %s29, 1
    %s31 = scalar_select %p28, %s29, %s30
    %p34 = pneg %p28
    %p35 = scmp.eq.s32.totalorder %s19, 1
    %p36 = por %p34, %p35
    %p37 = scmp.ne.s32.totalorder %s29, %s32
    %p38 = scmp.eq.s32.totalorder %s19, 0
    %p39 = por %p37, %p38
    %p40 = scmp.ne.s32.totalorder %s29, %s32
    %p41 = scmp.eq.s32.totalorder %s24, 1
    %p42 = por %p40, %p41
    %p43 = scmp.ne.s32.totalorder %s32, %s33
    %p44 = scmp.eq.s32.totalorder %s24, 0
    %p45 = por %p43, %p44
    %p46 = scmp.ne.s32.totalorder %s32, %s33
    %p47 = scmp.eq.s32.totalorder %s25, 1
    %p48 = por %p46, %p47
    %p50 = scmp.ne.s32.totalorder %s33, %s49
    %p51 = scmp.eq.s32.totalorder %s25, 0
    %p52 = por %p50, %p51
    %s53 = ssub.s32 %s19, %s26
    %p54 = scmp.eq.s32.totalorder %s53, 0
    %s56 = sadd.s32 %s55, 1
    %s57 = scalar_select %p54, %s55, %s56
    %p60 = pneg %p54
    %p61 = scmp.eq.s32.totalorder %s19, 1
    %p62 = por %p60, %p61
    %p63 = scmp.ne.s32.totalorder %s55, %s58
    %p64 = scmp.eq.s32.totalorder %s19, 0
    %p65 = por %p63, %p64
    %p66 = scmp.ne.s32.totalorder %s55, %s58
    %p67 = scmp.eq.s32.totalorder %s24, 1
    %p68 = por %p66, %p67
    %p69 = scmp.ne.s32.totalorder %s58, %s59
    %p70 = scmp.eq.s32.totalorder %s24, 0
    %p71 = por %p69, %p70
    %p72 = scmp.ne.s32.totalorder %s58, %s59
    %p73 = scmp.eq.s32.totalorder %s25, 1
    %p74 = por %p72, %p73
    %p76 = scmp.ne.s32.totalorder %s59, %s75
    %p77 = scmp.eq.s32.totalorder %s25, 0
    %p78 = por %p76, %p77
    %s79 = ssub.s32 %s19, %s26
    %p80 = scmp.eq.s32.totalorder %s79, 0
    %s82 = sadd.s32 %s81, 1
    %s83 = scalar_select %p80, %s81, %s82
    %p86 = pneg %p80
    %p87 = scmp.eq.s32.totalorder %s19, 1
    %p88 = por %p86, %p87
    %p89 = scmp.ne.s32.totalorder %s81, %s84
    %p90 = scmp.eq.s32.totalorder %s19, 0
    %p91 = por %p89, %p90
    %p92 = scmp.ne.s32.totalorder %s81, %s84
    %p93 = scmp.eq.s32.totalorder %s24, 1
    %p94 = por %p92, %p93
    %p95 = scmp.ne.s32.totalorder %s84, %s85
    %p96 = scmp.eq.s32.totalorder %s24, 0
    %p97 = por %p95, %p96
    %p98 = scmp.ne.s32.totalorder %s84, %s85
    %p99 = scmp.eq.s32.totalorder %s25, 1
    %p100 = por %p98, %p99
    %p102 = scmp.ne.s32.totalorder %s85, %s101
    %p103 = scmp.eq.s32.totalorder %s25, 0
    %p104 = por %p102, %p103
    %s106 = sadd.s32 %s105, 1
    %p109 = scmp.eq.s32.totalorder %s19, 1
    %p110 = scmp.ne.s32.totalorder %s105, %s107
    %p111 = scmp.eq.s32.totalorder %s19, 0
    %p112 = por %p110, %p111
    %p113 = scmp.ne.s32.totalorder %s105, %s107
    %p114 = scmp.eq.s32.totalorder %s24, 1
    %p115 = por %p113, %p114
    %p116 = scmp.ne.s32.totalorder %s107, %s108
    %p117 = scmp.eq.s32.totalorder %s24, 0
    %p118 = por %p116, %p117
    %p119 = scmp.ne.s32.totalorder %s107, %s108
    %p120 = scmp.eq.s32.totalorder %s25, 1
    %p121 = por %p119, %p120
    %p123 = scmp.ne.s32.totalorder %s108, %s122
    %p124 = scmp.eq.s32.totalorder %s25, 0
    %p125 = por %p123, %p124
    %s127 = sadd.s32 %s126, 1
    %p130 = scmp.eq.s32.totalorder %s19, 1
    %p131 = scmp.ne.s32.totalorder %s126, %s128
    %p132 = scmp.eq.s32.totalorder %s19, 0
    %p133 = por %p131, %p132
    %p134 = scmp.ne.s32.totalorder %s126, %s128
    %p135 = scmp.eq.s32.totalorder %s24, 1
    %p136 = por %p134, %p135
    %p137 = scmp.ne.s32.totalorder %s128, %s129
    %p138 = scmp.eq.s32.totalorder %s24, 0
    %p139 = por %p137, %p138
    %p140 = scmp.ne.s32.totalorder %s128, %s129
    %p141 = scmp.eq.s32.totalorder %s25, 1
    %p142 = por %p140, %p141
    %p144 = scmp.ne.s32.totalorder %s129, %s143
    %p145 = scmp.eq.s32.totalorder %s25, 0
    %p146 = por %p144, %p145
    %s148 = sadd.s32 %s147, 1
    %p151 = scmp.eq.s32.totalorder %s19, 1
    %p152 = scmp.ne.s32.totalorder %s147, %s149
    %p153 = scmp.eq.s32.totalorder %s19, 0
    %p154 = por %p152, %p153
    %p155 = scmp.ne.s32.totalorder %s147, %s149
    %p156 = scmp.eq.s32.totalorder %s24, 1
    %p157 = por %p155, %p156
    %p158 = scmp.ne.s32.totalorder %s149, %s150
    %p159 = scmp.eq.s32.totalorder %s24, 0
    %p160 = por %p158, %p159
    %p161 = scmp.ne.s32.totalorder %s149, %s150
    %p162 = scmp.eq.s32.totalorder %s25, 1
    %p163 = por %p161, %p162
    %p165 = scmp.ne.s32.totalorder %s150, %s164
    %p166 = scmp.eq.s32.totalorder %s25, 0
    %p167 = por %p165, %p166
    %s169 = sadd.s32 %s168, 1
    %p172 = scmp.eq.s32.totalorder %s19, 1
    %p173 = scmp.ne.s32.totalorder %s168, %s170
    %p174 = scmp.eq.s32.totalorder %s19, 0
    %p175 = por %p173, %p174
    %p176 = scmp.ne.s32.totalorder %s168, %s170
    %p177 = scmp.eq.s32.totalorder %s24, 1
    %p178 = por %p176, %p177
    %p179 = scmp.ne.s32.totalorder %s170, %s171
    %p180 = scmp.eq.s32.totalorder %s24, 0
    %p181 = por %p179, %p180
    %p182 = scmp.ne.s32.totalorder %s170, %s171
    %p183 = scmp.eq.s32.totalorder %s25, 1
    %p184 = por %p182, %p183
    %p186 = scmp.ne.s32.totalorder %s171, %s185
    %p187 = scmp.eq.s32.totalorder %s25, 0
    %p188 = por %p186, %p187
    %s190 = sadd.s32 %s189, 1
    %p193 = scmp.eq.s32.totalorder %s19, 1
    %p194 = scmp.ne.s32.totalorder %s189, %s191
    %p195 = scmp.eq.s32.totalorder %s19, 0
    %p196 = por %p194, %p195
    %p197 = scmp.ne.s32.totalorder %s189, %s191
    %p198 = scmp.eq.s32.totalorder %s24, 1
    %p199 = por %p197, %p198
    %p200 = scmp.ne.s32.totalorder %s191, %s192
    %p201 = scmp.eq.s32.totalorder %s24, 0
    %p202 = por %p200, %p201
    %p203 = scmp.ne.s32.totalorder %s191, %s192
    %p204 = scmp.eq.s32.totalorder %s25, 1
    %p205 = por %p203, %p204
    %p207 = scmp.ne.s32.totalorder %s192, %s206
    %p208 = scmp.eq.s32.totalorder %s25, 0
    %p209 = por %p207, %p208
    %s211 = sadd.s32 %s210, 1
    %p214 = scmp.eq.s32.totalorder %s19, 1
    %p215 = scmp.ne.s32.totalorder %s210, %s212
    %p216 = scmp.eq.s32.totalorder %s19, 0
    %p217 = por %p215, %p216
    %p218 = scmp.ne.s32.totalorder %s210, %s212
    %p219 = scmp.eq.s32.totalorder %s24, 1
    %p220 = por %p218, %p219
    %p221 = scmp.ne.s32.totalorder %s212, %s213
    %p222 = scmp.eq.s32.totalorder %s24, 0
    %p223 = por %p221, %p222
    %p224 = scmp.ne.s32.totalorder %s212, %s213
    %p225 = scmp.eq.s32.totalorder %s25, 1
    %p226 = por %p224, %p225
    %p228 = scmp.ne.s32.totalorder %s213, %s227
    %p229 = scmp.eq.s32.totalorder %s25, 0
    %p230 = por %p228, %p229
    %s232 = sadd.s32 %s231, 1
    %p235 = scmp.eq.s32.totalorder %s19, 1
    %p236 = scmp.ne.s32.totalorder %s231, %s233
    %p237 = scmp.eq.s32.totalorder %s19, 0
    %p238 = por %p236, %p237
    %p239 = scmp.ne.s32.totalorder %s231, %s233
    %p240 = scmp.eq.s32.totalorder %s24, 1
    %p241 = por %p239, %p240
    %p242 = scmp.ne.s32.totalorder %s233, %s234
    %p243 = scmp.eq.s32.totalorder %s24, 0
    %p244 = por %p242, %p243
    %p245 = scmp.ne.s32.totalorder %s233, %s234
    %p246 = scmp.eq.s32.totalorder %s25, 1
    %p247 = por %p245, %p246
    %p249 = scmp.ne.s32.totalorder %s234, %s248
    %p250 = scmp.eq.s32.totalorder %s25, 0
    %p251 = por %p249, %p250
    %s252 = ssub.s32 %s19, %s26
    %p253 = scmp.eq.s32.totalorder %s252, 0
    %s255 = sadd.s32 %s254, 1
    %s256 = scalar_select %p253, %s254, %s255
    %p259 = pneg %p253
    %p260 = scmp.eq.s32.totalorder %s19, 1
    %p261 = por %p259, %p260
    %p262 = scmp.ne.s32.totalorder %s254, %s257
    %p263 = scmp.eq.s32.totalorder %s19, 0
    %p264 = por %p262, %p263
    %p265 = scmp.ne.s32.totalorder %s254, %s257
    %p266 = scmp.eq.s32.totalorder %s24, 1
    %p267 = por %p265, %p266
    %p268 = scmp.ne.s32.totalorder %s257, %s258
    %p269 = scmp.eq.s32.totalorder %s24, 0
    %p270 = por %p268, %p269
    %p271 = scmp.ne.s32.totalorder %s257, %s258
    %p272 = scmp.eq.s32.totalorder %s25, 1
    %p273 = por %p271, %p272
    %p275 = scmp.ne.s32.totalorder %s258, %s274
    %p276 = scmp.eq.s32.totalorder %s25, 0
    %p277 = por %p275, %p276
    %s278 = ssub.s32 %s19, %s26
    %p279 = scmp.eq.s32.totalorder %s278, 0
    %s281 = sadd.s32 %s280, 1
    %s282 = scalar_select %p279, %s280, %s281
    %p285 = pneg %p279
    %p286 = scmp.eq.s32.totalorder %s19, 1
    %p287 = por %p285, %p286
    %p288 = scmp.ne.s32.totalorder %s280, %s283
    %p289 = scmp.eq.s32.totalorder %s19, 0
    %p290 = por %p288, %p289
    %p291 = scmp.ne.s32.totalorder %s280, %s283
    %p292 = scmp.eq.s32.totalorder %s24, 1
    %p293 = por %p291, %p292
    %p294 = scmp.ne.s32.totalorder %s283, %s284
    %p295 = scmp.eq.s32.totalorder %s24, 0
    %p296 = por %p294, %p295
    %p297 = scmp.ne.s32.totalorder %s283, %s284
    %p298 = scmp.eq.s32.totalorder %s25, 1
    %p299 = por %p297, %p298
    %p301 = scmp.ne.s32.totalorder %s284, %s300
    %p302 = scmp.eq.s32.totalorder %s25, 0
    %p303 = por %p301, %p302
    %s304 = ssub.s32 %s19, %s26
    %p305 = scmp.eq.s32.totalorder %s304, 0
    %s307 = sadd.s32 %s306, 1
    %s308 = scalar_select %p305, %s306, %s307
    %p311 = pneg %p305
    %p312 = scmp.eq.s32.totalorder %s19, 1
    %p313 = por %p311, %p312
    %p314 = scmp.ne.s32.totalorder %s306, %s309
    %p315 = scmp.eq.s32.totalorder %s19, 0
    %p316 = por %p314, %p315
    %p317 = scmp.ne.s32.totalorder %s306, %s309
    %p318 = scmp.eq.s32.totalorder %s24, 1
    %p319 = por %p317, %p318
    %p320 = scmp.ne.s32.totalorder %s309, %s310
    %p321 = scmp.eq.s32.totalorder %s24, 0
    %p322 = por %p320, %p321
    %p323 = scmp.ne.s32.totalorder %s309, %s310
    %p324 = scmp.eq.s32.totalorder %s25, 1
    %p325 = por %p323, %p324
    %p327 = scmp.ne.s32.totalorder %s310, %s326
    %p328 = scmp.eq.s32.totalorder %s25, 0
    %p329 = por %p327, %p328
    %p330 = scmp.le.s32.totalorder 1, %s19
    %p331 = scmp.lt.s32.totalorder %s19, 3
    %p332 = pnand %p330, %p331
    %p333 = pneg %p332
    // Predicated region
    $region9: #{multi_octave_forward.1} parent=5 // pred_check
      _
    $region10: #{multi_octave_forward.1} parent=5 // pred_check_branch
      %335 = sbr.rel (%p332) target = $region12
    $region11: #{multi_octave_forward.1} parent=5 // pred_region
      %s336 = ssub.s32 %s19, 1
      // Predicated region
      $region13: #{multi_octave_forward.1} parent=11 // pred_check
        %p337 = pneg %p118
      $region14: #{multi_octave_forward.1} parent=11 // pred_check_branch
        %339 = sbr.rel (%p337) target = $region16
      $region15: #{multi_octave_forward.1} parent=11 // pred_region
        _
      $region16: #{multi_octave_forward.1} parent=11 // pred_fallthru
        _
      // Predicated region
      $region17: #{multi_octave_forward.1} parent=11 // pred_check
        %p340 = pneg %p139
      $region18: #{multi_octave_forward.1} parent=11 // pred_check_branch
        %342 = sbr.rel (%p340) target = $region20
      $region19: #{multi_octave_forward.1} parent=11 // pred_region
        _
      $region20: #{multi_octave_forward.1} parent=11 // pred_fallthru
        _
      // Predicated region
      $region21: #{multi_octave_forward.1} parent=11 // pred_check
        %p343 = pneg %p160
      $region22: #{multi_octave_forward.1} parent=11 // pred_check_branch
        %345 = sbr.rel (%p343) target = $region24
      $region23: #{multi_octave_forward.1} parent=11 // pred_region
        _
      $region24: #{multi_octave_forward.1} parent=11 // pred_fallthru
        _
      // Predicated region
      $region25: #{multi_octave_forward.1} parent=11 // pred_check
        %p346 = pneg %p181
      $region26: #{multi_octave_forward.1} parent=11 // pred_check_branch
        %348 = sbr.rel (%p346) target = $region28
      $region27: #{multi_octave_forward.1} parent=11 // pred_region
        _
      $region28: #{multi_octave_forward.1} parent=11 // pred_fallthru
        _
      // Predicated region
      $region29: #{multi_octave_forward.1} parent=11 // pred_check
        %p349 = pneg %p202
      $region30: #{multi_octave_forward.1} parent=11 // pred_check_branch
        %351 = sbr.rel (%p349) target = $region32
      $region31: #{multi_octave_forward.1} parent=11 // pred_region
        _
      $region32: #{multi_octave_forward.1} parent=11 // pred_fallthru
        _
      // Predicated region
      $region33: #{multi_octave_forward.1} parent=11 // pred_check
        %p352 = pneg %p223
      $region34: #{multi_octave_forward.1} parent=11 // pred_check_branch
        %354 = sbr.rel (%p352) target = $region36
      $region35: #{multi_octave_forward.1} parent=11 // pred_region
        _
      $region36: #{multi_octave_forward.1} parent=11 // pred_fallthru
        _
      // Predicated region
      $region37: #{multi_octave_forward.1} parent=11 // pred_check
        %p355 = pneg %p244
      $region38: #{multi_octave_forward.1} parent=11 // pred_check_branch
        %357 = sbr.rel (%p355) target = $region40
      $region39: #{multi_octave_forward.1} parent=11 // pred_region
        _
      $region40: #{multi_octave_forward.1} parent=11 // pred_fallthru
        _
    $region12: #{multi_octave_forward.1} parent=5 // pred_fallthru
      _
    %p358 = scmp.lt.s32.totalorder %s19, 2
    // Predicated region
    $region41: #{multi_octave_forward.1} parent=5 // pred_check
      %p359 = pneg %p358
    $region42: #{multi_octave_forward.1} parent=5 // pred_check_branch
      %361 = sbr.rel (%p359) target = $region44
    $region43: #{multi_octave_forward.1} parent=5 // pred_region
      // Predicated region
      $region45: #{multi_octave_forward.1} parent=43 // pred_check
        %p362 = pneg %p39
      $region46: #{multi_octave_forward.1} parent=43 // pred_check_branch
        %364 = sbr.rel (%p362) target = $region48
      $region47: #{multi_octave_forward.1} parent=43 // pred_region
        %p365 = scmp.lt.s32.totalorder %s19, 1
        %s366 = scalar_select %p365, %s19, 1
        %s367 = smul.addr %s366, 32
        %s368 = smul.addr %s367, 8
        %s369 = scalar_lea.vmem %s0, %s368
      $region48: #{multi_octave_forward.1} parent=43 // pred_fallthru
        _
      // Predicated region
      $region49: #{multi_octave_forward.1} parent=43 // pred_check
        %p370 = pneg %p65
      $region50: #{multi_octave_forward.1} parent=43 // pred_check_branch
        %372 = sbr.rel (%p370) target = $region52
      $region51: #{multi_octave_forward.1} parent=43 // pred_region
        %p373 = scmp.lt.s32.totalorder %s19, 1
        %s374 = scalar_select %p373, %s19, 1
        %s375 = smul.addr %s374, 8
        %s376 = smul.addr %s375, 8
        %s377 = scalar_lea.vmem %s1, %s376
      $region52: #{multi_octave_forward.1} parent=43 // pred_fallthru
        _
      // Predicated region
      $region53: #{multi_octave_forward.1} parent=43 // pred_check
        %p378 = pneg %p91
      $region54: #{multi_octave_forward.1} parent=43 // pred_check_branch
        %380 = sbr.rel (%p378) target = $region56
      $region55: #{multi_octave_forward.1} parent=43 // pred_region
        %p381 = scmp.lt.s32.totalorder %s19, 1
        %s382 = scalar_select %p381, %s19, 1
        %s383 = smul.addr %s382, 4
        %s384 = smul.addr %s383, 4
        %s385 = scalar_lea.vmem %s2, %s384
      $region56: #{multi_octave_forward.1} parent=43 // pred_fallthru
        _
    $region44: #{multi_octave_forward.1} parent=5 // pred_fallthru
      _
    %p386 = scmp.le.s32.totalorder 1, %s19
    %p387 = scmp.lt.s32.totalorder %s19, 3
    %p388 = pnand %p386, %p387
    %p389 = pneg %p388
    // Predicated region
    $region57: #{multi_octave_forward.1} parent=5 // pred_check
      _
    $region58: #{multi_octave_forward.1} parent=5 // pred_check_branch
      %391 = sbr.rel (%p388) target = $region60
    $region59: #{multi_octave_forward.1} parent=5 // pred_region
      %s392 = ssub.s32 %s19, 1
      %p393 = scmp.lt.s32.totalorder %s24, 1
      %s394 = scalar_select %p393, %s24, 1
      %s395 = smul.addr %s394, 32
      %s396 = smul.addr %s395, 8
      %s397 = scalar_lea.vmem %s0, %s396
      %p398 = pneg %p45
      %p399 = pneg %p42
      %p400 = scmp.lt.s32.totalorder %s24, 1
      %s401 = scalar_select %p400, %s24, 1
      %s402 = smul.addr %s401, 8
      %s403 = smul.addr %s402, 8
      %s404 = scalar_lea.vmem %s1, %s403
      %p405 = pneg %p71
      %p406 = pneg %p68
      %p407 = scmp.lt.s32.totalorder %s24, 1
      %s408 = scalar_select %p407, %s24, 1
      %s409 = smul.addr %s408, 4
      %s410 = smul.addr %s409, 4
      %s411 = scalar_lea.vmem %s2, %s410
      %p412 = pneg %p97
      %p413 = pneg %p94
      %p414 = pneg %p118
      %p415 = pneg %p115
      %p416 = pneg %p139
      %p417 = pneg %p136
      %p418 = pneg %p160
      %p419 = pneg %p157
      %p420 = pneg %p181
      %p421 = pneg %p178
      %p422 = pneg %p202
      %p423 = pneg %p199
      %p424 = pneg %p223
      %p425 = pneg %p220
      %p426 = pneg %p244
      %p427 = pneg %p241
      %p428 = pneg %p270
      %p429 = pneg %p267
      %p430 = scmp.lt.s32.totalorder %s24, 1
      %s431 = scalar_select %p430, %s24, 1
      %s432 = smul.addr %s431, 2
      %s433 = smul.addr %s432, 4
      %s434 = scalar_lea.vmem %s10, %s433
      %p435 = pneg %p296
      %p436 = pneg %p293
      %p437 = scmp.lt.s32.totalorder %s24, 1
      %s438 = scalar_select %p437, %s24, 1
      %s439 = smul.addr %s438, 2
      %s440 = scalar_lea.vmem %s11, %s439
      %p441 = pneg %p322
      %p442 = pneg %p319
      %p443 = scmp.lt.s32.totalorder %s24, 1
      %s444 = scalar_select %p443, %s24, 1
      %s445 = smul.addr %s444, 2
      %s446 = scalar_lea.vmem %s12, %s445
      %p447 = scmp.lt.s32.totalorder %s24, 1
      %s448 = scalar_select %p447, %s24, 1
      %s449 = smul.addr %s448, 32
      %s450 = smul.addr %s449, 8
      %s451 = scalar_lea.vmem %s0, %s450
      %p452 = scmp.lt.s32.totalorder %s24, 1
      %s453 = scalar_select %p452, %s24, 1
      %s454 = smul.addr %s453, 8
      %s455 = smul.addr %s454, 8
      %s456 = scalar_lea.vmem %s1, %s455
      %p457 = scmp.lt.s32.totalorder %s24, 1
      %s458 = scalar_select %p457, %s24, 1
      %s459 = smul.addr %s458, 4
      %s460 = smul.addr %s459, 4
      %s461 = scalar_lea.vmem %s2, %s460
      %p462 = scmp.lt.s32.totalorder %s24, 1
      %s463 = scalar_select %p462, %s24, 1
      %s464 = smul.addr %s463, 2
      %s465 = smul.addr %s464, 4
      %s466 = scalar_lea.vmem %s10, %s465
      %p467 = scmp.lt.s32.totalorder %s24, 1
      %s468 = scalar_select %p467, %s24, 1
      %s469 = smul.addr %s468, 2
      %s470 = scalar_lea.vmem %s11, %s469
      %p471 = scmp.lt.s32.totalorder %s24, 1
      %s472 = scalar_select %p471, %s24, 1
      %s473 = smul.addr %s472, 2
      %s474 = scalar_lea.vmem %s12, %s473
      %v476 = vld [vmem:[%s451] sm:$0xff]
      %v477 = vld [vmem:[%s451 + $0x8] sm:$0xff]
      %v478 = vld [vmem:[%s451 + $0x10] sm:$0xff]
      %v479 = vld [vmem:[%s451 + $0x18] sm:$0xff]
      %v480 = vld [vmem:[%s451 + $0x20] sm:$0xff]
      %v481 = vld [vmem:[%s451 + $0x28] sm:$0xff]
      %v482 = vld [vmem:[%s451 + $0x30] sm:$0xff]
      %v483 = vld [vmem:[%s451 + $0x38] sm:$0xff]
      %v484 = vld [vmem:[%s451 + $0x40] sm:$0xff]
      %v485 = vld [vmem:[%s451 + $0x48] sm:$0xff]
      %v486 = vld [vmem:[%s451 + $0x50] sm:$0xff]
      %v487 = vld [vmem:[%s451 + $0x58] sm:$0xff]
      %v488 = vld [vmem:[%s451 + $0x60] sm:$0xff]
      %v489 = vld [vmem:[%s451 + $0x68] sm:$0xff]
      %v490 = vld [vmem:[%s451 + $0x70] sm:$0xff]
      %v491 = vld [vmem:[%s451 + $0x78] sm:$0xff]
      %v492 = vld [vmem:[%s451 + $0x80] sm:$0xff]
      %v493 = vld [vmem:[%s451 + $0x88] sm:$0xff]
      %v494 = vld [vmem:[%s451 + $0x90] sm:$0xff]
      %v495 = vld [vmem:[%s451 + $0x98] sm:$0xff]
      %v496 = vld [vmem:[%s451 + $0xa0] sm:$0xff]
      %v497 = vld [vmem:[%s451 + $0xa8] sm:$0xff]
      %v498 = vld [vmem:[%s451 + $0xb0] sm:$0xff]
      %v499 = vld [vmem:[%s451 + $0xb8] sm:$0xff]
      %v500 = vld [vmem:[%s451 + $0xc0] sm:$0xff]
      %v501 = vld [vmem:[%s451 + $0xc8] sm:$0xff]
      %v502 = vld [vmem:[%s451 + $0xd0] sm:$0xff]
      %v503 = vld [vmem:[%s451 + $0xd8] sm:$0xff]
      %v504 = vld [vmem:[%s451 + $0xe0] sm:$0xff]
      %v505 = vld [vmem:[%s451 + $0xe8] sm:$0xff]
      %v506 = vld [vmem:[%s451 + $0xf0] sm:$0xff]
      %v507 = vld [vmem:[%s451 + $0xf8] sm:$0xff]
      %vm508 = vcmask 27648
      %509 = vst.msk [vmem:[#allocation2] sm:$0xf] %vm508, 0
      %510 = vst.msk [vmem:[#allocation2 + $0x4] sm:$0xf] %vm508, 0
      %vm511 = vcmask 24576
      %512 = vst.msk [vmem:[#allocation2 + $0x8] sm:$0x1] %vm511, 0
      %513 = vst.msk [vmem:[#allocation2 + $0xc] sm:$0xf] %vm508, 0
      %514 = vst.msk [vmem:[#allocation2 + $0x10] sm:$0xf] %vm508, 0
      %515 = vst.msk [vmem:[#allocation2 + $0x14] sm:$0x1] %vm511, 0
      %516 = vst.msk [vmem:[#allocation2 + $0x18] sm:$0xf] %vm508, 0
      %517 = vst.msk [vmem:[#allocation2 + $0x1c] sm:$0xf] %vm508, 0
      %518 = vst.msk [vmem:[#allocation2 + $0x20] sm:$0x1] %vm511, 0
      %519 = vst.msk [vmem:[#allocation2 + $0x24] sm:$0xf] %vm508, 0
      %520 = vst.msk [vmem:[#allocation2 + $0x28] sm:$0xf] %vm508, 0
      %521 = vst.msk [vmem:[#allocation2 + $0x2c] sm:$0x1] %vm511, 0
      %522 = vst.msk [vmem:[#allocation2 + $0x30] sm:$0xf] %vm508, 0
      %523 = vst.msk [vmem:[#allocation2 + $0x34] sm:$0xf] %vm508, 0
      %524 = vst.msk [vmem:[#allocation2 + $0x38] sm:$0x1] %vm511, 0
      %525 = vst.msk [vmem:[#allocation2 + $0x3c] sm:$0xf] %vm508, 0
      %526 = vst.msk [vmem:[#allocation2 + $0x40] sm:$0xf] %vm508, 0
      %527 = vst.msk [vmem:[#allocation2 + $0x44] sm:$0x1] %vm511, 0
      %528 = vst.msk [vmem:[#allocation2 + $0x48] sm:$0xf] %vm508, 0
      %529 = vst.msk [vmem:[#allocation2 + $0x4c] sm:$0xf] %vm508, 0
      %530 = vst.msk [vmem:[#allocation2 + $0x50] sm:$0x1] %vm511, 0
      %531 = vst.msk [vmem:[#allocation2 + $0x54] sm:$0xf] %vm508, 0
      %532 = vst.msk [vmem:[#allocation2 + $0x58] sm:$0xf] %vm508, 0
      %533 = vst.msk [vmem:[#allocation2 + $0x5c] sm:$0x1] %vm511, 0
      %534 = vst.msk [vmem:[#allocation2 + $0x60] sm:$0xf] %vm508, 0
      %535 = vst.msk [vmem:[#allocation2 + $0x64] sm:$0xf] %vm508, 0
      %536 = vst.msk [vmem:[#allocation2 + $0x68] sm:$0x1] %vm511, 0
      %537 = vst.msk [vmem:[#allocation2 + $0x6c] sm:$0xf] %vm508, 0
      %538 = vst.msk [vmem:[#allocation2 + $0x70] sm:$0xf] %vm508, 0
      %539 = vst.msk [vmem:[#allocation2 + $0x74] sm:$0x1] %vm511, 0
      %540 = vst.msk [vmem:[#allocation2 + $0x78] sm:$0xf] %vm508, 0
      %541 = vst.msk [vmem:[#allocation2 + $0x7c] sm:$0xf] %vm508, 0
      %542 = vst.msk [vmem:[#allocation2 + $0x80] sm:$0x1] %vm511, 0
      %543 = vst.msk [vmem:[#allocation2 + $0x84] sm:$0xf] %vm508, 0
      %544 = vst.msk [vmem:[#allocation2 + $0x88] sm:$0xf] %vm508, 0
      %545 = vst.msk [vmem:[#allocation2 + $0x8c] sm:$0x1] %vm511, 0
      %546 = vst.msk [vmem:[#allocation2 + $0x90] sm:$0xf] %vm508, 0
      %547 = vst.msk [vmem:[#allocation2 + $0x94] sm:$0xf] %vm508, 0
      %548 = vst.msk [vmem:[#allocation2 + $0x98] sm:$0x1] %vm511, 0
      %549 = vst.msk [vmem:[#allocation2 + $0x9c] sm:$0xf] %vm508, 0
      %550 = vst.msk [vmem:[#allocation2 + $0xa0] sm:$0xf] %vm508, 0
      %551 = vst.msk [vmem:[#allocation2 + $0xa4] sm:$0x1] %vm511, 0
      %552 = vst.msk [vmem:[#allocation2 + $0xa8] sm:$0xf] %vm508, 0
      %553 = vst.msk [vmem:[#allocation2 + $0xac] sm:$0xf] %vm508, 0
      %554 = vst.msk [vmem:[#allocation2 + $0xb0] sm:$0x1] %vm511, 0
      %555 = vst.msk [vmem:[#allocation2 + $0xb4] sm:$0xf] %vm508, 0
      %556 = vst.msk [vmem:[#allocation2 + $0xb8] sm:$0xf] %vm508, 0
      %557 = vst.msk [vmem:[#allocation2 + $0xbc] sm:$0x1] %vm511, 0
      %558 = vst.msk [vmem:[#allocation2 + $0xc0] sm:$0xf] %vm508, 0
      %559 = vst.msk [vmem:[#allocation2 + $0xc4] sm:$0xf] %vm508, 0
      %560 = vst.msk [vmem:[#allocation2 + $0xc8] sm:$0x1] %vm511, 0
      %561 = vst.msk [vmem:[#allocation2 + $0xcc] sm:$0xf] %vm508, 0
      %562 = vst.msk [vmem:[#allocation2 + $0xd0] sm:$0xf] %vm508, 0
      %563 = vst.msk [vmem:[#allocation2 + $0xd4] sm:$0x1] %vm511, 0
      %v564 = vpack.c.bf16 %v477, %v476
      %v565 = vpack.c.bf16 %v479, %v478
      %v566 = vpack.c.bf16 %v481, %v480
      %v567 = vpack.c.bf16 %v483, %v482
      %v568 = vpack.c.bf16 %v485, %v484
      %v569 = vpack.c.bf16 %v487, %v486
      %v570 = vpack.c.bf16 %v489, %v488
      %v571 = vpack.c.bf16 %v491, %v490
      %v572 = vpack.c.bf16 %v493, %v492
      %v573 = vpack.c.bf16 %v495, %v494
      %v574 = vpack.c.bf16 %v497, %v496
      %v575 = vpack.c.bf16 %v499, %v498
      %v576 = vpack.c.bf16 %v501, %v500
      %v577 = vpack.c.bf16 %v503, %v502
      %v578 = vpack.c.bf16 %v505, %v504
      %v579 = vpack.c.bf16 %v507, %v506
      %v596 = vunpack.c.l.b16 %v564
      %v597 = vunpack.c.h.b16 %v564
      %v598 = vunpack.c.l.b16 %v565
      %v599 = vunpack.c.h.b16 %v565
      %v600 = vunpack.c.l.b16 %v566
      %v601 = vunpack.c.h.b16 %v566
      %v602 = vunpack.c.l.b16 %v567
      %v603 = vunpack.c.h.b16 %v567
      %v604 = vunpack.c.l.b16 %v568
      %v605 = vunpack.c.h.b16 %v568
      %v606 = vunpack.c.l.b16 %v569
      %v607 = vunpack.c.h.b16 %v569
      %v608 = vunpack.c.l.b16 %v570
      %v609 = vunpack.c.h.b16 %v570
      %v610 = vunpack.c.l.b16 %v571
      %v611 = vunpack.c.h.b16 %v571
      %v612 = vunpack.c.l.b16 %v572
      %v613 = vunpack.c.h.b16 %v572
      %v614 = vunpack.c.l.b16 %v573
      %v615 = vunpack.c.h.b16 %v573
      %v616 = vunpack.c.l.b16 %v574
      %v617 = vunpack.c.h.b16 %v574
      %v618 = vunpack.c.l.b16 %v575
      %v619 = vunpack.c.h.b16 %v575
      %v620 = vunpack.c.l.b16 %v576
      %v621 = vunpack.c.h.b16 %v576
      %v622 = vunpack.c.l.b16 %v577
      %v623 = vunpack.c.h.b16 %v577
      %v624 = vunpack.c.l.b16 %v578
      %v625 = vunpack.c.h.b16 %v578
      %v626 = vunpack.c.l.b16 %v579
      %v627 = vunpack.c.h.b16 %v579
      %v628 = vpack.c.b16 %v596, %v596
      %v629 = vpack.c.b16 %v597, %v597
      %v630 = vpack.c.b16 %v598, %v598
      %v631 = vpack.c.b16 %v599, %v599
      %v632 = vpack.c.b16 %v600, %v600
      %v633 = vpack.c.b16 %v601, %v601
      %v634 = vpack.c.b16 %v602, %v602
      %v635 = vpack.c.b16 %v603, %v603
      %v636 = vpack.c.b16 %v604, %v604
      %v637 = vpack.c.b16 %v605, %v605
      %v638 = vpack.c.b16 %v606, %v606
      %v639 = vpack.c.b16 %v607, %v607
      %v640 = vpack.c.b16 %v608, %v608
      %v641 = vpack.c.b16 %v609, %v609
      %v642 = vpack.c.b16 %v610, %v610
      %v643 = vpack.c.b16 %v611, %v611
      %v644 = vpack.c.b16 %v612, %v612
      %v645 = vpack.c.b16 %v613, %v613
      %v646 = vpack.c.b16 %v614, %v614
      %v647 = vpack.c.b16 %v615, %v615
      %v648 = vpack.c.b16 %v616, %v616
      %v649 = vpack.c.b16 %v617, %v617
      %v650 = vpack.c.b16 %v618, %v618
      %v651 = vpack.c.b16 %v619, %v619
      %v652 = vpack.c.b16 %v620, %v620
      %v653 = vpack.c.b16 %v621, %v621
      %v654 = vpack.c.b16 %v622, %v622
      %v655 = vpack.c.b16 %v623, %v623
      %v656 = vpack.c.b16 %v624, %v624
      %v657 = vpack.c.b16 %v625, %v625
      %v658 = vpack.c.b16 %v626, %v626
      %v659 = vpack.c.b16 %v627, %v627
      %vm660 = vsmask.f32 256
      %vm661 = vsmask.f32 4368
      %vm662 = vmor %vm660, %vm661
      %v664 = vshrl.u32 %v628, 16
      %v666 = vrot.slane %v664, 7
      %v667 = vshll.u32 %v628, 16
      %v669 = vor.u32 %v666, %v667
      %v670 = vrot.slane %v666, 4
      %v672 = vshrl.u32 %v629, 16
      %v674 = vrot.slane %v672, 7
      %v675 = vshll.u32 %v629, 16
      %v677 = vor.u32 %v674, %v675
      %v678 = vsel %vm662, %v670, %v677
      %v679 = vrot.slane %v674, 4
      %v681 = vshrl.u32 %v630, 16
      %v683 = vrot.slane %v681, 7
      %v684 = vshll.u32 %v630, 16
      %v686 = vor.u32 %v683, %v684
      %v687 = vrot.slane %v683, 4
      %v689 = vshrl.u32 %v631, 16
      %v691 = vrot.slane %v689, 7
      %v692 = vshll.u32 %v631, 16
      %v694 = vor.u32 %v691, %v692
      %v695 = vsel %vm662, %v687, %v694
      %v696 = vrot.slane %v691, 4
      %v698 = vshrl.u32 %v632, 16
      %v700 = vrot.slane %v698, 7
      %v701 = vshll.u32 %v632, 16
      %v703 = vor.u32 %v700, %v701
      %v704 = vrot.slane %v700, 4
      %v706 = vshrl.u32 %v633, 16
      %v708 = vrot.slane %v706, 7
      %v709 = vshll.u32 %v633, 16
      %v711 = vor.u32 %v708, %v709
      %v712 = vsel %vm662, %v704, %v711
      %v713 = vrot.slane %v708, 4
      %v715 = vshrl.u32 %v634, 16
      %v717 = vrot.slane %v715, 7
      %v718 = vshll.u32 %v634, 16
      %v720 = vor.u32 %v717, %v718
      %v721 = vrot.slane %v717, 4
      %v723 = vshrl.u32 %v635, 16
      %v725 = vrot.slane %v723, 7
      %v726 = vshll.u32 %v635, 16
      %v728 = vor.u32 %v725, %v726
      %v729 = vsel %vm662, %v721, %v728
      %v730 = vrot.slane %v725, 4
      %v732 = vshrl.u32 %v636, 16
      %v734 = vrot.slane %v732, 7
      %v735 = vshll.u32 %v636, 16
      %v737 = vor.u32 %v734, %v735
      %v738 = vrot.slane %v734, 4
      %v740 = vshrl.u32 %v637, 16
      %v742 = vrot.slane %v740, 7
      %v743 = vshll.u32 %v637, 16
      %v745 = vor.u32 %v742, %v743
      %v746 = vsel %vm662, %v738, %v745
      %v747 = vrot.slane %v742, 4
      %v749 = vshrl.u32 %v638, 16
      %v751 = vrot.slane %v749, 7
      %v752 = vshll.u32 %v638, 16
      %v754 = vor.u32 %v751, %v752
      %v755 = vrot.slane %v751, 4
      %v757 = vshrl.u32 %v639, 16
      %v759 = vrot.slane %v757, 7
      %v760 = vshll.u32 %v639, 16
      %v762 = vor.u32 %v759, %v760
      %v763 = vsel %vm662, %v755, %v762
      %v764 = vrot.slane %v759, 4
      %v766 = vshrl.u32 %v640, 16
      %v768 = vrot.slane %v766, 7
      %v769 = vshll.u32 %v640, 16
      %v771 = vor.u32 %v768, %v769
      %v772 = vrot.slane %v768, 4
      %v774 = vshrl.u32 %v641, 16
      %v776 = vrot.slane %v774, 7
      %v777 = vshll.u32 %v641, 16
      %v779 = vor.u32 %v776, %v777
      %v780 = vsel %vm662, %v772, %v779
      %v781 = vrot.slane %v776, 4
      %v783 = vshrl.u32 %v642, 16
      %v785 = vrot.slane %v783, 7
      %v786 = vshll.u32 %v642, 16
      %v788 = vor.u32 %v785, %v786
      %v789 = vrot.slane %v785, 4
      %v791 = vshrl.u32 %v643, 16
      %v793 = vrot.slane %v791, 7
      %v794 = vshll.u32 %v643, 16
      %v796 = vor.u32 %v793, %v794
      %v797 = vsel %vm662, %v789, %v796
      %v798 = vrot.slane %v793, 4
      %v800 = vshrl.u32 %v644, 16
      %v802 = vrot.slane %v800, 7
      %v803 = vshll.u32 %v644, 16
      %v805 = vor.u32 %v802, %v803
      %v806 = vrot.slane %v802, 4
      %v808 = vshrl.u32 %v645, 16
      %v810 = vrot.slane %v808, 7
      %v811 = vshll.u32 %v645, 16
      %v813 = vor.u32 %v810, %v811
      %v814 = vsel %vm662, %v806, %v813
      %v815 = vrot.slane %v810, 4
      %v817 = vshrl.u32 %v646, 16
      %v819 = vrot.slane %v817, 7
      %v820 = vshll.u32 %v646, 16
      %v822 = vor.u32 %v819, %v820
      %v823 = vrot.slane %v819, 4
      %v825 = vshrl.u32 %v647, 16
      %v827 = vrot.slane %v825, 7
      %v828 = vshll.u32 %v647, 16
      %v830 = vor.u32 %v827, %v828
      %v831 = vsel %vm662, %v823, %v830
      %v832 = vrot.slane %v827, 4
      %v834 = vshrl.u32 %v648, 16
      %v836 = vrot.slane %v834, 7
      %v837 = vshll.u32 %v648, 16
      %v839 = vor.u32 %v836, %v837
      %v840 = vrot.slane %v836, 4
      %v842 = vshrl.u32 %v649, 16
      %v844 = vrot.slane %v842, 7
      %v845 = vshll.u32 %v649, 16
      %v847 = vor.u32 %v844, %v845
      %v848 = vsel %vm662, %v840, %v847
      %v849 = vrot.slane %v844, 4
      %v851 = vshrl.u32 %v650, 16
      %v853 = vrot.slane %v851, 7
      %v854 = vshll.u32 %v650, 16
      %v856 = vor.u32 %v853, %v854
      %v857 = vrot.slane %v853, 4
      %v859 = vshrl.u32 %v651, 16
      %v861 = vrot.slane %v859, 7
      %v862 = vshll.u32 %v651, 16
      %v864 = vor.u32 %v861, %v862
      %v865 = vsel %vm662, %v857, %v864
      %v866 = vrot.slane %v861, 4
      %v868 = vshrl.u32 %v652, 16
      %v870 = vrot.slane %v868, 7
      %v871 = vshll.u32 %v652, 16
      %v873 = vor.u32 %v870, %v871
      %v874 = vrot.slane %v870, 4
      %v876 = vshrl.u32 %v653, 16
      %v878 = vrot.slane %v876, 7
      %v879 = vshll.u32 %v653, 16
      %v881 = vor.u32 %v878, %v879
      %v882 = vsel %vm662, %v874, %v881
      %v883 = vrot.slane %v878, 4
      %v885 = vshrl.u32 %v654, 16
      %v887 = vrot.slane %v885, 7
      %v888 = vshll.u32 %v654, 16
      %v890 = vor.u32 %v887, %v888
      %v891 = vrot.slane %v887, 4
      %v893 = vshrl.u32 %v655, 16
      %v895 = vrot.slane %v893, 7
      %v896 = vshll.u32 %v655, 16
      %v898 = vor.u32 %v895, %v896
      %v899 = vsel %vm662, %v891, %v898
      %v900 = vrot.slane %v895, 4
      %v902 = vshrl.u32 %v656, 16
      %v904 = vrot.slane %v902, 7
      %v905 = vshll.u32 %v656, 16
      %v907 = vor.u32 %v904, %v905
      %v908 = vrot.slane %v904, 4
      %v910 = vshrl.u32 %v657, 16
      %v912 = vrot.slane %v910, 7
      %v913 = vshll.u32 %v657, 16
      %v915 = vor.u32 %v912, %v913
      %v916 = vsel %vm662, %v908, %v915
      %v917 = vrot.slane %v912, 4
      %v919 = vshrl.u32 %v658, 16
      %v921 = vrot.slane %v919, 7
      %v922 = vshll.u32 %v658, 16
      %v924 = vor.u32 %v921, %v922
      %v925 = vrot.slane %v921, 4
      %v927 = vshrl.u32 %v659, 16
      %v929 = vrot.slane %v927, 7
      %v930 = vshll.u32 %v659, 16
      %v932 = vor.u32 %v929, %v930
      %v933 = vsel %vm662, %v925, %v932
      %v934 = vrot.slane %v929, 4
      %s983 = scalar_lea.vmem [#allocation2], 12
      %vm984 = vcmask 27648
      %vm985 = vsmask.f32 7938
      %vm986 = vmand %vm984, %vm985
      %v987 = vld [vmem:[%s983] sm:$0xf]
      %v988 = vsel %vm986, %v669, %v987
      %989 = vst [vmem:[%s983] sm:$0xf] %v988
      %990 = vst.msk [vmem:[%s983 + $0x4] sm:$0xf] %vm508, %v678
      %vm991 = vcmask 24576
      %vm992 = vmand %vm991, %vm660
      %v993 = vld [vmem:[%s983 + $0x8] sm:$0x1]
      %v994 = vsel %vm992, %v679, %v993
      %995 = vst [vmem:[%s983 + $0x8] sm:$0x1] %v994
      %v996 = vld [vmem:[%s983 + $0xc] sm:$0xf]
      %v997 = vsel %vm986, %v686, %v996
      %998 = vst [vmem:[%s983 + $0xc] sm:$0xf] %v997
      %999 = vst.msk [vmem:[%s983 + $0x10] sm:$0xf] %vm508, %v695
      %v1000 = vld [vmem:[%s983 + $0x14] sm:$0x1]
      %v1001 = vsel %vm992, %v696, %v1000
      %1002 = vst [vmem:[%s983 + $0x14] sm:$0x1] %v1001
      %v1003 = vld [vmem:[%s983 + $0x18] sm:$0xf]
      %v1004 = vsel %vm986, %v703, %v1003
      %1005 = vst [vmem:[%s983 + $0x18] sm:$0xf] %v1004
      %1006 = vst.msk [vmem:[%s983 + $0x1c] sm:$0xf] %vm508, %v712
      %v1007 = vld [vmem:[%s983 + $0x20] sm:$0x1]
      %v1008 = vsel %vm992, %v713, %v1007
      %1009 = vst [vmem:[%s983 + $0x20] sm:$0x1] %v1008
      %v1010 = vld [vmem:[%s983 + $0x24] sm:$0xf]
      %v1011 = vsel %vm986, %v720, %v1010
      %1012 = vst [vmem:[%s983 + $0x24] sm:$0xf] %v1011
      %1013 = vst.msk [vmem:[%s983 + $0x28] sm:$0xf] %vm508, %v729
      %v1014 = vld [vmem:[%s983 + $0x2c] sm:$0x1]
      %v1015 = vsel %vm992, %v730, %v1014
      %1016 = vst [vmem:[%s983 + $0x2c] sm:$0x1] %v1015
      %v1017 = vld [vmem:[%s983 + $0x30] sm:$0xf]
      %v1018 = vsel %vm986, %v737, %v1017
      %1019 = vst [vmem:[%s983 + $0x30] sm:$0xf] %v1018
      %1020 = vst.msk [vmem:[%s983 + $0x34] sm:$0xf] %vm508, %v746
      %v1021 = vld [vmem:[%s983 + $0x38] sm:$0x1]
      %v1022 = vsel %vm992, %v747, %v1021
      %1023 = vst [vmem:[%s983 + $0x38] sm:$0x1] %v1022
      %v1024 = vld [vmem:[%s983 + $0x3c] sm:$0xf]
      %v1025 = vsel %vm986, %v754, %v1024
      %1026 = vst [vmem:[%s983 + $0x3c] sm:$0xf] %v1025
      %1027 = vst.msk [vmem:[%s983 + $0x40] sm:$0xf] %vm508, %v763
      %v1028 = vld [vmem:[%s983 + $0x44] sm:$0x1]
      %v1029 = vsel %vm992, %v764, %v1028
      %1030 = vst [vmem:[%s983 + $0x44] sm:$0x1] %v1029
      %v1031 = vld [vmem:[%s983 + $0x48] sm:$0xf]
      %v1032 = vsel %vm986, %v771, %v1031
      %1033 = vst [vmem:[%s983 + $0x48] sm:$0xf] %v1032
      %1034 = vst.msk [vmem:[%s983 + $0x4c] sm:$0xf] %vm508, %v780
      %v1035 = vld [vmem:[%s983 + $0x50] sm:$0x1]
      %v1036 = vsel %vm992, %v781, %v1035
      %1037 = vst [vmem:[%s983 + $0x50] sm:$0x1] %v1036
      %v1038 = vld [vmem:[%s983 + $0x54] sm:$0xf]
      %v1039 = vsel %vm986, %v788, %v1038
      %1040 = vst [vmem:[%s983 + $0x54] sm:$0xf] %v1039
      %1041 = vst.msk [vmem:[%s983 + $0x58] sm:$0xf] %vm508, %v797
      %v1042 = vld [vmem:[%s983 + $0x5c] sm:$0x1]
      %v1043 = vsel %vm992, %v798, %v1042
      %1044 = vst [vmem:[%s983 + $0x5c] sm:$0x1] %v1043
      %v1045 = vld [vmem:[%s983 + $0x60] sm:$0xf]
      %v1046 = vsel %vm986, %v805, %v1045
      %1047 = vst [vmem:[%s983 + $0x60] sm:$0xf] %v1046
      %1048 = vst.msk [vmem:[%s983 + $0x64] sm:$0xf] %vm508, %v814
      %v1049 = vld [vmem:[%s983 + $0x68] sm:$0x1]
      %v1050 = vsel %vm992, %v815, %v1049
      %1051 = vst [vmem:[%s983 + $0x68] sm:$0x1] %v1050
      %v1052 = vld [vmem:[%s983 + $0x6c] sm:$0xf]
      %v1053 = vsel %vm986, %v822, %v1052
      %1054 = vst [vmem:[%s983 + $0x6c] sm:$0xf] %v1053
      %1055 = vst.msk [vmem:[%s983 + $0x70] sm:$0xf] %vm508, %v831
      %v1056 = vld [vmem:[%s983 + $0x74] sm:$0x1]
      %v1057 = vsel %vm992, %v832, %v1056
      %1058 = vst [vmem:[%s983 + $0x74] sm:$0x1] %v1057
      %v1059 = vld [vmem:[%s983 + $0x78] sm:$0xf]
      %v1060 = vsel %vm986, %v839, %v1059
      %1061 = vst [vmem:[%s983 + $0x78] sm:$0xf] %v1060
      %1062 = vst.msk [vmem:[%s983 + $0x7c] sm:$0xf] %vm508, %v848
      %v1063 = vld [vmem:[%s983 + $0x80] sm:$0x1]
      %v1064 = vsel %vm992, %v849, %v1063
      %1065 = vst [vmem:[%s983 + $0x80] sm:$0x1] %v1064
      %v1066 = vld [vmem:[%s983 + $0x84] sm:$0xf]
      %v1067 = vsel %vm986, %v856, %v1066
      %1068 = vst [vmem:[%s983 + $0x84] sm:$0xf] %v1067
      %1069 = vst.msk [vmem:[%s983 + $0x88] sm:$0xf] %vm508, %v865
      %v1070 = vld [vmem:[%s983 + $0x8c] sm:$0x1]
      %v1071 = vsel %vm992, %v866, %v1070
      %1072 = vst [vmem:[%s983 + $0x8c] sm:$0x1] %v1071
      %v1073 = vld [vmem:[%s983 + $0x90] sm:$0xf]
      %v1074 = vsel %vm986, %v873, %v1073
      %1075 = vst [vmem:[%s983 + $0x90] sm:$0xf] %v1074
      %1076 = vst.msk [vmem:[%s983 + $0x94] sm:$0xf] %vm508, %v882
      %v1077 = vld [vmem:[%s983 + $0x98] sm:$0x1]
      %v1078 = vsel %vm992, %v883, %v1077
      %1079 = vst [vmem:[%s983 + $0x98] sm:$0x1] %v1078
      %v1080 = vld [vmem:[%s983 + $0x9c] sm:$0xf]
      %v1081 = vsel %vm986, %v890, %v1080
      %1082 = vst [vmem:[%s983 + $0x9c] sm:$0xf] %v1081
      %1083 = vst.msk [vmem:[%s983 + $0xa0] sm:$0xf] %vm508, %v899
      %v1084 = vld [vmem:[%s983 + $0xa4] sm:$0x1]
      %v1085 = vsel %vm992, %v900, %v1084
      %1086 = vst [vmem:[%s983 + $0xa4] sm:$0x1] %v1085
      %v1087 = vld [vmem:[%s983 + $0xa8] sm:$0xf]
      %v1088 = vsel %vm986, %v907, %v1087
      %1089 = vst [vmem:[%s983 + $0xa8] sm:$0xf] %v1088
      %1090 = vst.msk [vmem:[%s983 + $0xac] sm:$0xf] %vm508, %v916
      %v1091 = vld [vmem:[%s983 + $0xb0] sm:$0x1]
      %v1092 = vsel %vm992, %v917, %v1091
      %1093 = vst [vmem:[%s983 + $0xb0] sm:$0x1] %v1092
      %v1094 = vld [vmem:[%s983 + $0xb4] sm:$0xf]
      %v1095 = vsel %vm986, %v924, %v1094
      %1096 = vst [vmem:[%s983 + $0xb4] sm:$0xf] %v1095
      %1097 = vst.msk [vmem:[%s983 + $0xb8] sm:$0xf] %vm508, %v933
      %v1098 = vld [vmem:[%s983 + $0xbc] sm:$0x1]
      %v1099 = vsel %vm992, %v934, %v1098
      %1100 = vst [vmem:[%s983 + $0xbc] sm:$0x1] %v1099
      %v1101 = vld [vmem:[%s456] sm:$0xff]
      %v1102 = vld [vmem:[%s456 + $0x8] sm:$0xff]
      %v1103 = vld [vmem:[%s456 + $0x10] sm:$0xff]
      %v1104 = vld [vmem:[%s456 + $0x18] sm:$0xff]
      %v1105 = vld [vmem:[%s456 + $0x20] sm:$0xff]
      %v1106 = vld [vmem:[%s456 + $0x28] sm:$0xff]
      %v1107 = vld [vmem:[%s456 + $0x30] sm:$0xff]
      %v1108 = vld [vmem:[%s456 + $0x38] sm:$0xff]
      %vm1109 = vcmask 11264
      %1110 = vst.msk [vmem:[#allocation4] sm:$0xf] %vm1109, 0
      %vm1111 = vcmask 8192
      %1112 = vst.msk [vmem:[#allocation4 + $0x4] sm:$0x1] %vm1111, 0
      %1113 = vst.msk [vmem:[#allocation4 + $0x8] sm:$0xf] %vm1109, 0
      %1114 = vst.msk [vmem:[#allocation4 + $0xc] sm:$0x1] %vm1111, 0
      %1115 = vst.msk [vmem:[#allocation4 + $0x10] sm:$0xf] %vm1109, 0
      %1116 = vst.msk [vmem:[#allocation4 + $0x14] sm:$0x1] %vm1111, 0
      %1117 = vst.msk [vmem:[#allocation4 + $0x18] sm:$0xf] %vm1109, 0
      %1118 = vst.msk [vmem:[#allocation4 + $0x1c] sm:$0x1] %vm1111, 0
      %1119 = vst.msk [vmem:[#allocation4 + $0x20] sm:$0xf] %vm1109, 0
      %1120 = vst.msk [vmem:[#allocation4 + $0x24] sm:$0x1] %vm1111, 0
      %1121 = vst.msk [vmem:[#allocation4 + $0x28] sm:$0xf] %vm1109, 0
      %1122 = vst.msk [vmem:[#allocation4 + $0x2c] sm:$0x1] %vm1111, 0
      %1123 = vst.msk [vmem:[#allocation4 + $0x30] sm:$0xf] %vm1109, 0
      %1124 = vst.msk [vmem:[#allocation4 + $0x34] sm:$0x1] %vm1111, 0
      %1125 = vst.msk [vmem:[#allocation4 + $0x38] sm:$0xf] %vm1109, 0
      %1126 = vst.msk [vmem:[#allocation4 + $0x3c] sm:$0x1] %vm1111, 0
      %1127 = vst.msk [vmem:[#allocation4 + $0x40] sm:$0xf] %vm1109, 0
      %1128 = vst.msk [vmem:[#allocation4 + $0x44] sm:$0x1] %vm1111, 0
      %1129 = vst.msk [vmem:[#allocation4 + $0x48] sm:$0xf] %vm1109, 0
      %1130 = vst.msk [vmem:[#allocation4 + $0x4c] sm:$0x1] %vm1111, 0
      %v1131 = vpack.c.bf16 %v1101, %v1101
      %v1132 = vpack.c.bf16 %v1102, %v1102
      %v1133 = vpack.c.bf16 %v1103, %v1103
      %v1134 = vpack.c.bf16 %v1104, %v1104
      %v1135 = vpack.c.bf16 %v1105, %v1105
      %v1136 = vpack.c.bf16 %v1106, %v1106
      %v1137 = vpack.c.bf16 %v1107, %v1107
      %v1138 = vpack.c.bf16 %v1108, %v1108
      %v1147 = vunpack.c.l.b16 %v1131
      %v1148 = vunpack.c.l.b16 %v1132
      %v1149 = vunpack.c.l.b16 %v1133
      %v1150 = vunpack.c.l.b16 %v1134
      %v1151 = vunpack.c.l.b16 %v1135
      %v1152 = vunpack.c.l.b16 %v1136
      %v1153 = vunpack.c.l.b16 %v1137
      %v1154 = vunpack.c.l.b16 %v1138
      %v1155 = vpack.c.b16 %v1147, %v1147
      %v1156 = vpack.c.b16 %v1148, %v1148
      %v1157 = vpack.c.b16 %v1149, %v1149
      %v1158 = vpack.c.b16 %v1150, %v1150
      %v1159 = vpack.c.b16 %v1151, %v1151
      %v1160 = vpack.c.b16 %v1152, %v1152
      %v1161 = vpack.c.b16 %v1153, %v1153
      %v1162 = vpack.c.b16 %v1154, %v1154
      %v1164 = vshrl.u32 %v1155, 16
      %v1166 = vrot.slane %v1164, 7
      %v1167 = vshll.u32 %v1155, 16
      %v1169 = vor.u32 %v1166, %v1167
      %v1170 = vrot.slane %v1166, 4
      %v1172 = vshrl.u32 %v1156, 16
      %v1174 = vrot.slane %v1172, 7
      %v1175 = vshll.u32 %v1156, 16
      %v1177 = vor.u32 %v1174, %v1175
      %v1178 = vrot.slane %v1174, 4
      %v1180 = vshrl.u32 %v1157, 16
      %v1182 = vrot.slane %v1180, 7
      %v1183 = vshll.u32 %v1157, 16
      %v1185 = vor.u32 %v1182, %v1183
      %v1186 = vrot.slane %v1182, 4
      %v1188 = vshrl.u32 %v1158, 16
      %v1190 = vrot.slane %v1188, 7
      %v1191 = vshll.u32 %v1158, 16
      %v1193 = vor.u32 %v1190, %v1191
      %v1194 = vrot.slane %v1190, 4
      %v1196 = vshrl.u32 %v1159, 16
      %v1198 = vrot.slane %v1196, 7
      %v1199 = vshll.u32 %v1159, 16
      %v1201 = vor.u32 %v1198, %v1199
      %v1202 = vrot.slane %v1198, 4
      %v1204 = vshrl.u32 %v1160, 16
      %v1206 = vrot.slane %v1204, 7
      %v1207 = vshll.u32 %v1160, 16
      %v1209 = vor.u32 %v1206, %v1207
      %v1210 = vrot.slane %v1206, 4
      %v1212 = vshrl.u32 %v1161, 16
      %v1214 = vrot.slane %v1212, 7
      %v1215 = vshll.u32 %v1161, 16
      %v1217 = vor.u32 %v1214, %v1215
      %v1218 = vrot.slane %v1214, 4
      %v1220 = vshrl.u32 %v1162, 16
      %v1222 = vrot.slane %v1220, 7
      %v1223 = vshll.u32 %v1162, 16
      %v1225 = vor.u32 %v1222, %v1223
      %v1226 = vrot.slane %v1222, 4
      %s1243 = scalar_lea.vmem [#allocation4], 8
      %vm1244 = vcmask 11264
      %vm1245 = vmand %vm1244, %vm985
      %v1246 = vld [vmem:[%s1243] sm:$0xf]
      %v1247 = vsel %vm1245, %v1169, %v1246
      %1248 = vst [vmem:[%s1243] sm:$0xf] %v1247
      %vm1249 = vcmask 8192
      %vm1250 = vmand %vm1249, %vm660
      %v1251 = vld [vmem:[%s1243 + $0x4] sm:$0x1]
      %v1252 = vsel %vm1250, %v1170, %v1251
      %1253 = vst [vmem:[%s1243 + $0x4] sm:$0x1] %v1252
      %v1254 = vld [vmem:[%s1243 + $0x8] sm:$0xf]
      %v1255 = vsel %vm1245, %v1177, %v1254
      %1256 = vst [vmem:[%s1243 + $0x8] sm:$0xf] %v1255
      %v1257 = vld [vmem:[%s1243 + $0xc] sm:$0x1]
      %v1258 = vsel %vm1250, %v1178, %v1257
      %1259 = vst [vmem:[%s1243 + $0xc] sm:$0x1] %v1258
      %v1260 = vld [vmem:[%s1243 + $0x10] sm:$0xf]
      %v1261 = vsel %vm1245, %v1185, %v1260
      %1262 = vst [vmem:[%s1243 + $0x10] sm:$0xf] %v1261
      %v1263 = vld [vmem:[%s1243 + $0x14] sm:$0x1]
      %v1264 = vsel %vm1250, %v1186, %v1263
      %1265 = vst [vmem:[%s1243 + $0x14] sm:$0x1] %v1264
      %v1266 = vld [vmem:[%s1243 + $0x18] sm:$0xf]
      %v1267 = vsel %vm1245, %v1193, %v1266
      %1268 = vst [vmem:[%s1243 + $0x18] sm:$0xf] %v1267
      %v1269 = vld [vmem:[%s1243 + $0x1c] sm:$0x1]
      %v1270 = vsel %vm1250, %v1194, %v1269
      %1271 = vst [vmem:[%s1243 + $0x1c] sm:$0x1] %v1270
      %v1272 = vld [vmem:[%s1243 + $0x20] sm:$0xf]
      %v1273 = vsel %vm1245, %v1201, %v1272
      %1274 = vst [vmem:[%s1243 + $0x20] sm:$0xf] %v1273
      %v1275 = vld [vmem:[%s1243 + $0x24] sm:$0x1]
      %v1276 = vsel %vm1250, %v1202, %v1275
      %1277 = vst [vmem:[%s1243 + $0x24] sm:$0x1] %v1276
      %v1278 = vld [vmem:[%s1243 + $0x28] sm:$0xf]
      %v1279 = vsel %vm1245, %v1209, %v1278
      %1280 = vst [vmem:[%s1243 + $0x28] sm:$0xf] %v1279
      %v1281 = vld [vmem:[%s1243 + $0x2c] sm:$0x1]
      %v1282 = vsel %vm1250, %v1210, %v1281
      %1283 = vst [vmem:[%s1243 + $0x2c] sm:$0x1] %v1282
      %v1284 = vld [vmem:[%s1243 + $0x30] sm:$0xf]
      %v1285 = vsel %vm1245, %v1217, %v1284
      %1286 = vst [vmem:[%s1243 + $0x30] sm:$0xf] %v1285
      %v1287 = vld [vmem:[%s1243 + $0x34] sm:$0x1]
      %v1288 = vsel %vm1250, %v1218, %v1287
      %1289 = vst [vmem:[%s1243 + $0x34] sm:$0x1] %v1288
      %v1290 = vld [vmem:[%s1243 + $0x38] sm:$0xf]
      %v1291 = vsel %vm1245, %v1225, %v1290
      %1292 = vst [vmem:[%s1243 + $0x38] sm:$0xf] %v1291
      %v1293 = vld [vmem:[%s1243 + $0x3c] sm:$0x1]
      %v1294 = vsel %vm1250, %v1226, %v1293
      %1295 = vst [vmem:[%s1243 + $0x3c] sm:$0x1] %v1294
      %v1296 = vld [vmem:[%s461] sm:$0xf]
      %v1297 = vld [vmem:[%s461 + $0x4] sm:$0xf]
      %v1298 = vld [vmem:[%s461 + $0x8] sm:$0xf]
      %v1299 = vld [vmem:[%s461 + $0xc] sm:$0xf]
      %vm1300 = vcmask 10240
      %1301 = vst.msk [vmem:[#allocation6] sm:$0x7] %vm1300, 0
      %1302 = vst.msk [vmem:[#allocation6 + $0x4] sm:$0x7] %vm1300, 0
      %1303 = vst.msk [vmem:[#allocation6 + $0x8] sm:$0x7] %vm1300, 0
      %1304 = vst.msk [vmem:[#allocation6 + $0xc] sm:$0x7] %vm1300, 0
      %1305 = vst.msk [vmem:[#allocation6 + $0x10] sm:$0x7] %vm1300, 0
      %1306 = vst.msk [vmem:[#allocation6 + $0x14] sm:$0x7] %vm1300, 0
      %v1307 = vpack.c.bf16 %v1296, %v1296
      %v1308 = vpack.c.bf16 %v1297, %v1297
      %v1309 = vpack.c.bf16 %v1298, %v1298
      %v1310 = vpack.c.bf16 %v1299, %v1299
      %v1315 = vunpack.c.l.b16 %v1307
      %v1316 = vunpack.c.l.b16 %v1308
      %v1317 = vunpack.c.l.b16 %v1309
      %v1318 = vunpack.c.l.b16 %v1310
      %v1319 = vpack.c.b16 %v1315, %v1315
      %v1320 = vpack.c.b16 %v1316, %v1316
      %v1321 = vpack.c.b16 %v1317, %v1317
      %v1322 = vpack.c.b16 %v1318, %v1318
      %v1324 = vshrl.u32 %v1319, 16
      %v1326 = vrot.slane %v1324, 7
      %v1327 = vshll.u32 %v1319, 16
      %v1329 = vor.u32 %v1326, %v1327
      %v1331 = vshrl.u32 %v1320, 16
      %v1333 = vrot.slane %v1331, 7
      %v1334 = vshll.u32 %v1320, 16
      %v1336 = vor.u32 %v1333, %v1334
      %v1338 = vshrl.u32 %v1321, 16
      %v1340 = vrot.slane %v1338, 7
      %v1341 = vshll.u32 %v1321, 16
      %v1343 = vor.u32 %v1340, %v1341
      %v1345 = vshrl.u32 %v1322, 16
      %v1347 = vrot.slane %v1345, 7
      %v1348 = vshll.u32 %v1322, 16
      %v1350 = vor.u32 %v1347, %v1348
      %s1355 = scalar_lea.vmem [#allocation6], 4
      %vm1356 = vcmask 10240
      %vm1357 = vsmask.f32 2306
      %vm1358 = vmand %vm1356, %vm1357
      %v1359 = vld [vmem:[%s1355] sm:$0x7]
      %v1360 = vsel %vm1358, %v1329, %v1359
      %1361 = vst [vmem:[%s1355] sm:$0x7] %v1360
      %v1362 = vld [vmem:[%s1355 + $0x4] sm:$0x7]
      %v1363 = vsel %vm1358, %v1336, %v1362
      %1364 = vst [vmem:[%s1355 + $0x4] sm:$0x7] %v1363
      %v1365 = vld [vmem:[%s1355 + $0x8] sm:$0x7]
      %v1366 = vsel %vm1358, %v1343, %v1365
      %1367 = vst [vmem:[%s1355 + $0x8] sm:$0x7] %v1366
      %v1368 = vld [vmem:[%s1355 + $0xc] sm:$0x7]
      %v1369 = vsel %vm1358, %v1350, %v1368
      %1370 = vst [vmem:[%s1355 + $0xc] sm:$0x7] %v1369
      %v1371 = vld [vmem:[%s451] sm:$0xff]
      %v1372 = vld [vmem:[%s451 + $0x8] sm:$0xff]
      %v1373 = vld [vmem:[%s451 + $0x20] sm:$0xff]
      %v1374 = vld [vmem:[%s451 + $0x28] sm:$0xff]
      %v1375 = vld [vmem:[%s451 + $0x40] sm:$0xff]
      %v1376 = vld [vmem:[%s451 + $0x48] sm:$0xff]
      %v1377 = vld [vmem:[%s451 + $0x60] sm:$0xff]
      %v1378 = vld [vmem:[%s451 + $0x68] sm:$0xff]
      %v1379 = vld [vmem:[%s451 + $0x80] sm:$0xff]
      %v1380 = vld [vmem:[%s451 + $0x88] sm:$0xff]
      %v1381 = vld [vmem:[%s451 + $0xa0] sm:$0xff]
      %v1382 = vld [vmem:[%s451 + $0xa8] sm:$0xff]
      %v1383 = vld [vmem:[%s451 + $0xc0] sm:$0xff]
      %v1384 = vld [vmem:[%s451 + $0xc8] sm:$0xff]
      %v1385 = vld [vmem:[%s451 + $0xe0] sm:$0xff]
      %v1386 = vld [vmem:[%s451 + $0xe8] sm:$0xff]
      %s1387 = scalar_lea.vmem %s451, 16
      %v1388 = vld [vmem:[%s1387] sm:$0xff]
      %v1389 = vld [vmem:[%s1387 + $0x8] sm:$0xff]
      %v1390 = vld [vmem:[%s1387 + $0x20] sm:$0xff]
      %v1391 = vld [vmem:[%s1387 + $0x28] sm:$0xff]
      %v1392 = vld [vmem:[%s1387 + $0x40] sm:$0xff]
      %v1393 = vld [vmem:[%s1387 + $0x48] sm:$0xff]
      %v1394 = vld [vmem:[%s1387 + $0x60] sm:$0xff]
      %v1395 = vld [vmem:[%s1387 + $0x68] sm:$0xff]
      %v1396 = vld [vmem:[%s1387 + $0x80] sm:$0xff]
      %v1397 = vld [vmem:[%s1387 + $0x88] sm:$0xff]
      %v1398 = vld [vmem:[%s1387 + $0xa0] sm:$0xff]
      %v1399 = vld [vmem:[%s1387 + $0xa8] sm:$0xff]
      %v1400 = vld [vmem:[%s1387 + $0xc0] sm:$0xff]
      %v1401 = vld [vmem:[%s1387 + $0xc8] sm:$0xff]
      %v1402 = vld [vmem:[%s1387 + $0xe0] sm:$0xff]
      %v1403 = vld [vmem:[%s1387 + $0xe8] sm:$0xff]
      %v1404 = vadd.f32 %v1371, %v1388
      %v1405 = vadd.f32 %v1372, %v1389
      %v1406 = vadd.f32 %v1373, %v1390
      %v1407 = vadd.f32 %v1374, %v1391
      %v1408 = vadd.f32 %v1375, %v1392
      %v1409 = vadd.f32 %v1376, %v1393
      %v1410 = vadd.f32 %v1377, %v1394
      %v1411 = vadd.f32 %v1378, %v1395
      %v1412 = vadd.f32 %v1379, %v1396
      %v1413 = vadd.f32 %v1380, %v1397
      %v1414 = vadd.f32 %v1381, %v1398
      %v1415 = vadd.f32 %v1382, %v1399
      %v1416 = vadd.f32 %v1383, %v1400
      %v1417 = vadd.f32 %v1384, %v1401
      %v1418 = vadd.f32 %v1385, %v1402
      %v1419 = vadd.f32 %v1386, %v1403
      %vm1420 = vcmask 31744
      %1421 = vst.msk [vmem:[#allocation7] sm:$0xff] %vm1420, %v1404
      %1422 = vst.msk [vmem:[#allocation7 + $0x8] sm:$0xff] %vm1420, %v1405
      %1423 = vst.msk [vmem:[#allocation7 + $0x10] sm:$0xff] %vm1420, %v1406
      %1424 = vst.msk [vmem:[#allocation7 + $0x18] sm:$0xff] %vm1420, %v1407
      %1425 = vst.msk [vmem:[#allocation7 + $0x20] sm:$0xff] %vm1420, %v1408
      %1426 = vst.msk [vmem:[#allocation7 + $0x28] sm:$0xff] %vm1420, %v1409
      %1427 = vst.msk [vmem:[#allocation7 + $0x30] sm:$0xff] %vm1420, %v1410
      %1428 = vst.msk [vmem:[#allocation7 + $0x38] sm:$0xff] %vm1420, %v1411
      %1429 = vst.msk [vmem:[#allocation7 + $0x40] sm:$0xff] %vm1420, %v1412
      %1430 = vst.msk [vmem:[#allocation7 + $0x48] sm:$0xff] %vm1420, %v1413
      %1431 = vst.msk [vmem:[#allocation7 + $0x50] sm:$0xff] %vm1420, %v1414
      %1432 = vst.msk [vmem:[#allocation7 + $0x58] sm:$0xff] %vm1420, %v1415
      %1433 = vst.msk [vmem:[#allocation7 + $0x60] sm:$0xff] %vm1420, %v1416
      %1434 = vst.msk [vmem:[#allocation7 + $0x68] sm:$0xff] %vm1420, %v1417
      %1435 = vst.msk [vmem:[#allocation7 + $0x70] sm:$0xff] %vm1420, %v1418
      %1436 = vst.msk [vmem:[#allocation7 + $0x78] sm:$0xff] %vm1420, %v1419
      %v1437 = vld [vmem:[#allocation7] ss:$2 sm:$0xff]
      %s1438 = scalar_lea.vmem [#allocation7], 16
      %v1439 = vld [vmem:[%s1438] ss:$2 sm:$0xff]
      %s1440 = scalar_lea.vmem [#allocation7], 32
      %v1441 = vld [vmem:[%s1440] ss:$2 sm:$0xff]
      %s1442 = scalar_lea.vmem [#allocation7], 48
      %v1443 = vld [vmem:[%s1442] ss:$2 sm:$0xff]
      %s1444 = scalar_lea.vmem [#allocation7], 64
      %v1445 = vld [vmem:[%s1444] ss:$2 sm:$0xff]
      %s1446 = scalar_lea.vmem [#allocation7], 80
      %v1447 = vld [vmem:[%s1446] ss:$2 sm:$0xff]
      %s1448 = scalar_lea.vmem [#allocation7], 96
      %v1449 = vld [vmem:[%s1448] ss:$2 sm:$0xff]
      %s1450 = scalar_lea.vmem [#allocation7], 112
      %v1451 = vld [vmem:[%s1450] ss:$2 sm:$0xff]
      %s1452 = scalar_lea.vmem [#allocation7], 1
      %v1453 = vld [vmem:[%s1452] ss:$2 sm:$0xff]
      %s1454 = scalar_lea.vmem [#allocation7], 17
      %v1455 = vld [vmem:[%s1454] ss:$2 sm:$0xff]
      %s1456 = scalar_lea.vmem [#allocation7], 33
      %v1457 = vld [vmem:[%s1456] ss:$2 sm:$0xff]
      %s1458 = scalar_lea.vmem [#allocation7], 49
      %v1459 = vld [vmem:[%s1458] ss:$2 sm:$0xff]
      %s1460 = scalar_lea.vmem [#allocation7], 65
      %v1461 = vld [vmem:[%s1460] ss:$2 sm:$0xff]
      %s1462 = scalar_lea.vmem [#allocation7], 81
      %v1463 = vld [vmem:[%s1462] ss:$2 sm:$0xff]
      %s1464 = scalar_lea.vmem [#allocation7], 97
      %v1465 = vld [vmem:[%s1464] ss:$2 sm:$0xff]
      %s1466 = scalar_lea.vmem [#allocation7], 113
      %v1467 = vld [vmem:[%s1466] ss:$2 sm:$0xff]
      %v1468 = vadd.f32 %v1437, %v1453
      %v1469 = vadd.f32 %v1439, %v1455
      %v1470 = vadd.f32 %v1441, %v1457
      %v1471 = vadd.f32 %v1443, %v1459
      %v1472 = vadd.f32 %v1445, %v1461
      %v1473 = vadd.f32 %v1447, %v1463
      %v1474 = vadd.f32 %v1449, %v1465
      %v1475 = vadd.f32 %v1451, %v1467
      %v1476 = vmul.f32 %v1468, 0.25
      %v1477 = vmul.f32 %v1469, 0.25
      %v1478 = vmul.f32 %v1470, 0.25
      %v1479 = vmul.f32 %v1471, 0.25
      %v1480 = vmul.f32 %v1472, 0.25
      %v1481 = vmul.f32 %v1473, 0.25
      %v1482 = vmul.f32 %v1474, 0.25
      %v1483 = vmul.f32 %v1475, 0.25
      %1484 = vst.msk [vmem:[#allocation3] sm:$0xf] %vm508, 0
      %1485 = vst.msk [vmem:[#allocation3 + $0x4] sm:$0x1] %vm511, 0
      %1486 = vst.msk [vmem:[#allocation3 + $0x8] sm:$0xf] %vm508, 0
      %1487 = vst.msk [vmem:[#allocation3 + $0xc] sm:$0x1] %vm511, 0
      %1488 = vst.msk [vmem:[#allocation3 + $0x10] sm:$0xf] %vm508, 0
      %1489 = vst.msk [vmem:[#allocation3 + $0x14] sm:$0x1] %vm511, 0
      %1490 = vst.msk [vmem:[#allocation3 + $0x18] sm:$0xf] %vm508, 0
      %1491 = vst.msk [vmem:[#allocation3 + $0x1c] sm:$0x1] %vm511, 0
      %1492 = vst.msk [vmem:[#allocation3 + $0x20] sm:$0xf] %vm508, 0
      %1493 = vst.msk [vmem:[#allocation3 + $0x24] sm:$0x1] %vm511, 0
      %1494 = vst.msk [vmem:[#allocation3 + $0x28] sm:$0xf] %vm508, 0
      %1495 = vst.msk [vmem:[#allocation3 + $0x2c] sm:$0x1] %vm511, 0
      %1496 = vst.msk [vmem:[#allocation3 + $0x30] sm:$0xf] %vm508, 0
      %1497 = vst.msk [vmem:[#allocation3 + $0x34] sm:$0x1] %vm511, 0
      %1498 = vst.msk [vmem:[#allocation3 + $0x38] sm:$0xf] %vm508, 0
      %1499 = vst.msk [vmem:[#allocation3 + $0x3c] sm:$0x1] %vm511, 0
      %1500 = vst.msk [vmem:[#allocation3 + $0x40] sm:$0xf] %vm508, 0
      %1501 = vst.msk [vmem:[#allocation3 + $0x44] sm:$0x1] %vm511, 0
      %1502 = vst.msk [vmem:[#allocation3 + $0x48] sm:$0xf] %vm508, 0
      %1503 = vst.msk [vmem:[#allocation3 + $0x4c] sm:$0x1] %vm511, 0
      %v1504 = vpack.c.bf16 %v1476, %v1476
      %v1505 = vpack.c.bf16 %v1477, %v1477
      %v1506 = vpack.c.bf16 %v1478, %v1478
      %v1507 = vpack.c.bf16 %v1479, %v1479
      %v1508 = vpack.c.bf16 %v1480, %v1480
      %v1509 = vpack.c.bf16 %v1481, %v1481
      %v1510 = vpack.c.bf16 %v1482, %v1482
      %v1511 = vpack.c.bf16 %v1483, %v1483
      %v1520 = vunpack.c.l.b16 %v1504
      %v1521 = vunpack.c.l.b16 %v1505
      %v1522 = vunpack.c.l.b16 %v1506
      %v1523 = vunpack.c.l.b16 %v1507
      %v1524 = vunpack.c.l.b16 %v1508
      %v1525 = vunpack.c.l.b16 %v1509
      %v1526 = vunpack.c.l.b16 %v1510
      %v1527 = vunpack.c.l.b16 %v1511
      %v1528 = vpack.c.b16 %v1520, %v1520
      %v1529 = vpack.c.b16 %v1521, %v1521
      %v1530 = vpack.c.b16 %v1522, %v1522
      %v1531 = vpack.c.b16 %v1523, %v1523
      %v1532 = vpack.c.b16 %v1524, %v1524
      %v1533 = vpack.c.b16 %v1525, %v1525
      %v1534 = vpack.c.b16 %v1526, %v1526
      %v1535 = vpack.c.b16 %v1527, %v1527
      %v1537 = vshrl.u32 %v1528, 16
      %v1539 = vrot.slane %v1537, 7
      %v1540 = vshll.u32 %v1528, 16
      %v1542 = vor.u32 %v1539, %v1540
      %v1543 = vrot.slane %v1539, 4
      %v1545 = vshrl.u32 %v1529, 16
      %v1547 = vrot.slane %v1545, 7
      %v1548 = vshll.u32 %v1529, 16
      %v1550 = vor.u32 %v1547, %v1548
      %v1551 = vrot.slane %v1547, 4
      %v1553 = vshrl.u32 %v1530, 16
      %v1555 = vrot.slane %v1553, 7
      %v1556 = vshll.u32 %v1530, 16
      %v1558 = vor.u32 %v1555, %v1556
      %v1559 = vrot.slane %v1555, 4
      %v1561 = vshrl.u32 %v1531, 16
      %v1563 = vrot.slane %v1561, 7
      %v1564 = vshll.u32 %v1531, 16
      %v1566 = vor.u32 %v1563, %v1564
      %v1567 = vrot.slane %v1563, 4
      %v1569 = vshrl.u32 %v1532, 16
      %v1571 = vrot.slane %v1569, 7
      %v1572 = vshll.u32 %v1532, 16
      %v1574 = vor.u32 %v1571, %v1572
      %v1575 = vrot.slane %v1571, 4
      %v1577 = vshrl.u32 %v1533, 16
      %v1579 = vrot.slane %v1577, 7
      %v1580 = vshll.u32 %v1533, 16
      %v1582 = vor.u32 %v1579, %v1580
      %v1583 = vrot.slane %v1579, 4
      %v1585 = vshrl.u32 %v1534, 16
      %v1587 = vrot.slane %v1585, 7
      %v1588 = vshll.u32 %v1534, 16
      %v1590 = vor.u32 %v1587, %v1588
      %v1591 = vrot.slane %v1587, 4
      %v1593 = vshrl.u32 %v1535, 16
      %v1595 = vrot.slane %v1593, 7
      %v1596 = vshll.u32 %v1535, 16
      %v1598 = vor.u32 %v1595, %v1596
      %v1599 = vrot.slane %v1595, 4
      %s1616 = scalar_lea.vmem [#allocation3], 8
      %v1617 = vld [vmem:[%s1616] sm:$0xf]
      %v1618 = vsel %vm986, %v1542, %v1617
      %1619 = vst [vmem:[%s1616] sm:$0xf] %v1618
      %v1620 = vld [vmem:[%s1616 + $0x4] sm:$0x1]
      %v1621 = vsel %vm992, %v1543, %v1620
      %1622 = vst [vmem:[%s1616 + $0x4] sm:$0x1] %v1621
      %v1623 = vld [vmem:[%s1616 + $0x8] sm:$0xf]
      %v1624 = vsel %vm986, %v1550, %v1623
      %1625 = vst [vmem:[%s1616 + $0x8] sm:$0xf] %v1624
      %v1626 = vld [vmem:[%s1616 + $0xc] sm:$0x1]
      %v1627 = vsel %vm992, %v1551, %v1626
      %1628 = vst [vmem:[%s1616 + $0xc] sm:$0x1] %v1627
      %v1629 = vld [vmem:[%s1616 + $0x10] sm:$0xf]
      %v1630 = vsel %vm986, %v1558, %v1629
      %1631 = vst [vmem:[%s1616 + $0x10] sm:$0xf] %v1630
      %v1632 = vld [vmem:[%s1616 + $0x14] sm:$0x1]
      %v1633 = vsel %vm992, %v1559, %v1632
      %1634 = vst [vmem:[%s1616 + $0x14] sm:$0x1] %v1633
      %v1635 = vld [vmem:[%s1616 + $0x18] sm:$0xf]
      %v1636 = vsel %vm986, %v1566, %v1635
      %1637 = vst [vmem:[%s1616 + $0x18] sm:$0xf] %v1636
      %v1638 = vld [vmem:[%s1616 + $0x1c] sm:$0x1]
      %v1639 = vsel %vm992, %v1567, %v1638
      %1640 = vst [vmem:[%s1616 + $0x1c] sm:$0x1] %v1639
      %v1641 = vld [vmem:[%s1616 + $0x20] sm:$0xf]
      %v1642 = vsel %vm986, %v1574, %v1641
      %1643 = vst [vmem:[%s1616 + $0x20] sm:$0xf] %v1642
      %v1644 = vld [vmem:[%s1616 + $0x24] sm:$0x1]
      %v1645 = vsel %vm992, %v1575, %v1644
      %1646 = vst [vmem:[%s1616 + $0x24] sm:$0x1] %v1645
      %v1647 = vld [vmem:[%s1616 + $0x28] sm:$0xf]
      %v1648 = vsel %vm986, %v1582, %v1647
      %1649 = vst [vmem:[%s1616 + $0x28] sm:$0xf] %v1648
      %v1650 = vld [vmem:[%s1616 + $0x2c] sm:$0x1]
      %v1651 = vsel %vm992, %v1583, %v1650
      %1652 = vst [vmem:[%s1616 + $0x2c] sm:$0x1] %v1651
      %v1653 = vld [vmem:[%s1616 + $0x30] sm:$0xf]
      %v1654 = vsel %vm986, %v1590, %v1653
      %1655 = vst [vmem:[%s1616 + $0x30] sm:$0xf] %v1654
      %v1656 = vld [vmem:[%s1616 + $0x34] sm:$0x1]
      %v1657 = vsel %vm992, %v1591, %v1656
      %1658 = vst [vmem:[%s1616 + $0x34] sm:$0x1] %v1657
      %v1659 = vld [vmem:[%s1616 + $0x38] sm:$0xf]
      %v1660 = vsel %vm986, %v1598, %v1659
      %1661 = vst [vmem:[%s1616 + $0x38] sm:$0xf] %v1660
      %v1662 = vld [vmem:[%s1616 + $0x3c] sm:$0x1]
      %v1663 = vsel %vm992, %v1599, %v1662
      %1664 = vst [vmem:[%s1616 + $0x3c] sm:$0x1] %v1663
      %v1665 = vld [vmem:[%s456] sm:$0xff]
      %v1666 = vld [vmem:[%s456 + $0x10] sm:$0xff]
      %v1667 = vld [vmem:[%s456 + $0x20] sm:$0xff]
      %v1668 = vld [vmem:[%s456 + $0x30] sm:$0xff]
      %s1669 = scalar_lea.vmem %s456, 8
      %v1670 = vld [vmem:[%s1669] sm:$0xff]
      %v1671 = vld [vmem:[%s1669 + $0x10] sm:$0xff]
      %v1672 = vld [vmem:[%s1669 + $0x20] sm:$0xff]
      %v1673 = vld [vmem:[%s1669 + $0x30] sm:$0xff]
      %v1674 = vadd.f32 %v1665, %v1670
      %v1675 = vadd.f32 %v1666, %v1671
      %v1676 = vadd.f32 %v1667, %v1672
      %v1677 = vadd.f32 %v1668, %v1673
      %vm1678 = vcmask 15360
      %1679 = vst.msk [vmem:[#allocation8] sm:$0xff] %vm1678, %v1674
      %1680 = vst.msk [vmem:[#allocation8 + $0x8] sm:$0xff] %vm1678, %v1675
      %1681 = vst.msk [vmem:[#allocation8 + $0x10] sm:$0xff] %vm1678, %v1676
      %1682 = vst.msk [vmem:[#allocation8 + $0x18] sm:$0xff] %vm1678, %v1677
      %v1683 = vld [vmem:[#allocation8] ss:$2 sm:$0xf]
      %s1684 = scalar_lea.vmem [#allocation8], 8
      %v1685 = vld [vmem:[%s1684] ss:$2 sm:$0xf]
      %s1686 = scalar_lea.vmem [#allocation8], 16
      %v1687 = vld [vmem:[%s1686] ss:$2 sm:$0xf]
      %s1688 = scalar_lea.vmem [#allocation8], 24
      %v1689 = vld [vmem:[%s1688] ss:$2 sm:$0xf]
      %s1690 = scalar_lea.vmem [#allocation8], 1
      %v1691 = vld [vmem:[%s1690] ss:$2 sm:$0xf]
      %s1692 = scalar_lea.vmem [#allocation8], 9
      %v1693 = vld [vmem:[%s1692] ss:$2 sm:$0xf]
      %s1694 = scalar_lea.vmem [#allocation8], 17
      %v1695 = vld [vmem:[%s1694] ss:$2 sm:$0xf]
      %s1696 = scalar_lea.vmem [#allocation8], 25
      %v1697 = vld [vmem:[%s1696] ss:$2 sm:$0xf]
      %v1698 = vadd.f32 %v1683, %v1691
      %v1699 = vadd.f32 %v1685, %v1693
      %v1700 = vadd.f32 %v1687, %v1695
      %v1701 = vadd.f32 %v1689, %v1697
      %v1702 = vmul.f32 %v1698, 0.25
      %v1703 = vmul.f32 %v1699, 0.25
      %v1704 = vmul.f32 %v1700, 0.25
      %v1705 = vmul.f32 %v1701, 0.25
      %1706 = vst.msk [vmem:[#allocation5] sm:$0x7] %vm1300, 0
      %1707 = vst.msk [vmem:[#allocation5 + $0x4] sm:$0x7] %vm1300, 0
      %1708 = vst.msk [vmem:[#allocation5 + $0x8] sm:$0x7] %vm1300, 0
      %1709 = vst.msk [vmem:[#allocation5 + $0xc] sm:$0x7] %vm1300, 0
      %1710 = vst.msk [vmem:[#allocation5 + $0x10] sm:$0x7] %vm1300, 0
      %1711 = vst.msk [vmem:[#allocation5 + $0x14] sm:$0x7] %vm1300, 0
      %v1712 = vpack.c.bf16 %v1702, %v1702
      %v1713 = vpack.c.bf16 %v1703, %v1703
      %v1714 = vpack.c.bf16 %v1704, %v1704
      %v1715 = vpack.c.bf16 %v1705, %v1705
      %v1720 = vunpack.c.l.b16 %v1712
      %v1721 = vunpack.c.l.b16 %v1713
      %v1722 = vunpack.c.l.b16 %v1714
      %v1723 = vunpack.c.l.b16 %v1715
      %v1724 = vpack.c.b16 %v1720, %v1720
      %v1725 = vpack.c.b16 %v1721, %v1721
      %v1726 = vpack.c.b16 %v1722, %v1722
      %v1727 = vpack.c.b16 %v1723, %v1723
      %v1729 = vshrl.u32 %v1724, 16
      %v1731 = vrot.slane %v1729, 7
      %v1732 = vshll.u32 %v1724, 16
      %v1734 = vor.u32 %v1731, %v1732
      %v1736 = vshrl.u32 %v1725, 16
      %v1738 = vrot.slane %v1736, 7
      %v1739 = vshll.u32 %v1725, 16
      %v1741 = vor.u32 %v1738, %v1739
      %v1743 = vshrl.u32 %v1726, 16
      %v1745 = vrot.slane %v1743, 7
      %v1746 = vshll.u32 %v1726, 16
      %v1748 = vor.u32 %v1745, %v1746
      %v1750 = vshrl.u32 %v1727, 16
      %v1752 = vrot.slane %v1750, 7
      %v1753 = vshll.u32 %v1727, 16
      %v1755 = vor.u32 %v1752, %v1753
      %s1760 = scalar_lea.vmem [#allocation5], 4
      %v1761 = vld [vmem:[%s1760] sm:$0x7]
      %v1762 = vsel %vm1358, %v1734, %v1761
      %1763 = vst [vmem:[%s1760] sm:$0x7] %v1762
      %v1764 = vld [vmem:[%s1760 + $0x4] sm:$0x7]
      %v1765 = vsel %vm1358, %v1741, %v1764
      %1766 = vst [vmem:[%s1760 + $0x4] sm:$0x7] %v1765
      %v1767 = vld [vmem:[%s1760 + $0x8] sm:$0x7]
      %v1768 = vsel %vm1358, %v1748, %v1767
      %1769 = vst [vmem:[%s1760 + $0x8] sm:$0x7] %v1768
      %v1770 = vld [vmem:[%s1760 + $0xc] sm:$0x7]
      %v1771 = vsel %vm1358, %v1755, %v1770
      %1772 = vst [vmem:[%s1760 + $0xc] sm:$0x7] %v1771
      %v1773 = vld [vmem:[#allocation2] sm:$0xf]
      %v1774 = vld [vmem:[#allocation2 + $0x4] sm:$0xf]
      %v1775 = vld [vmem:[#allocation2 + $0xc] sm:$0xf]
      %v1776 = vld [vmem:[#allocation2 + $0x10] sm:$0xf]
      %v1777 = vld [vmem:[#allocation2 + $0x18] sm:$0xf]
      %v1778 = vld [vmem:[#allocation2 + $0x1c] sm:$0xf]
      %v1779 = vld [vmem:[#allocation2 + $0x24] sm:$0xf]
      %v1780 = vld [vmem:[#allocation2 + $0x28] sm:$0xf]
      %v1781 = vld [vmem:[#allocation2 + $0x30] sm:$0xf]
      %v1782 = vld [vmem:[#allocation2 + $0x34] sm:$0xf]
      %v1783 = vld [vmem:[#allocation2 + $0x3c] sm:$0xf]
      %v1784 = vld [vmem:[#allocation2 + $0x40] sm:$0xf]
      %v1785 = vld [vmem:[#allocation2 + $0x48] sm:$0xf]
      %v1786 = vld [vmem:[#allocation2 + $0x4c] sm:$0xf]
      %v1787 = vld [vmem:[#allocation2 + $0x54] sm:$0xf]
      %v1788 = vld [vmem:[#allocation2 + $0x58] sm:$0xf]
      %v1789 = vld [vmem:[#allocation2 + $0x60] sm:$0xf]
      %v1790 = vld [vmem:[#allocation2 + $0x64] sm:$0xf]
      %v1791 = vld [vmem:[#allocation2 + $0x6c] sm:$0xf]
      %v1792 = vld [vmem:[#allocation2 + $0x70] sm:$0xf]
      %v1793 = vld [vmem:[#allocation2 + $0x78] sm:$0xf]
      %v1794 = vld [vmem:[#allocation2 + $0x7c] sm:$0xf]
      %v1795 = vld [vmem:[#allocation2 + $0x84] sm:$0xf]
      %v1796 = vld [vmem:[#allocation2 + $0x88] sm:$0xf]
      %v1797 = vld [vmem:[#allocation2 + $0x90] sm:$0xf]
      %v1798 = vld [vmem:[#allocation2 + $0x94] sm:$0xf]
      %v1799 = vld [vmem:[#allocation2 + $0x9c] sm:$0xf]
      %v1800 = vld [vmem:[#allocation2 + $0xa0] sm:$0xf]
      %v1801 = vld [vmem:[#allocation2 + $0xa8] sm:$0xf]
      %v1802 = vld [vmem:[#allocation2 + $0xac] sm:$0xf]
      %v1803 = vld [vmem:[#allocation2 + $0xb4] sm:$0xf]
      %v1804 = vld [vmem:[#allocation2 + $0xb8] sm:$0xf]
      %v1805 = vld [vmem:[#allocation2 + $0x8] sm:$0x1]
      %v1806 = vld [vmem:[#allocation2 + $0x14] sm:$0x1]
      %v1807 = vld [vmem:[#allocation2 + $0x20] sm:$0x1]
      %v1808 = vld [vmem:[#allocation2 + $0x2c] sm:$0x1]
      %v1809 = vld [vmem:[#allocation2 + $0x38] sm:$0x1]
      %v1810 = vld [vmem:[#allocation2 + $0x44] sm:$0x1]
      %v1811 = vld [vmem:[#allocation2 + $0x50] sm:$0x1]
      %v1812 = vld [vmem:[#allocation2 + $0x5c] sm:$0x1]
      %v1813 = vld [vmem:[#allocation2 + $0x68] sm:$0x1]
      %v1814 = vld [vmem:[#allocation2 + $0x74] sm:$0x1]
      %v1815 = vld [vmem:[#allocation2 + $0x80] sm:$0x1]
      %v1816 = vld [vmem:[#allocation2 + $0x8c] sm:$0x1]
      %v1817 = vld [vmem:[#allocation2 + $0x98] sm:$0x1]
      %v1818 = vld [vmem:[#allocation2 + $0xa4] sm:$0x1]
      %v1819 = vld [vmem:[#allocation2 + $0xb0] sm:$0x1]
      %v1820 = vld [vmem:[#allocation2 + $0xbc] sm:$0x1]
      %v1821 = vld [vmem:[#allocation2] sm:$0xe]
      %v1822 = vld [vmem:[#allocation2 + $0xc] sm:$0xe]
      %v1823 = vld [vmem:[#allocation2 + $0x18] sm:$0xe]
      %v1824 = vld [vmem:[#allocation2 + $0x24] sm:$0xe]
      %v1825 = vld [vmem:[#allocation2 + $0x30] sm:$0xe]
      %v1826 = vld [vmem:[#allocation2 + $0x3c] sm:$0xe]
      %v1827 = vld [vmem:[#allocation2 + $0x48] sm:$0xe]
      %v1828 = vld [vmem:[#allocation2 + $0x54] sm:$0xe]
      %v1829 = vld [vmem:[#allocation2 + $0x60] sm:$0xe]
      %v1830 = vld [vmem:[#allocation2 + $0x6c] sm:$0xe]
      %v1831 = vld [vmem:[#allocation2 + $0x78] sm:$0xe]
      %v1832 = vld [vmem:[#allocation2 + $0x84] sm:$0xe]
      %v1833 = vld [vmem:[#allocation2 + $0x90] sm:$0xe]
      %v1834 = vld [vmem:[#allocation2 + $0x9c] sm:$0xe]
      %v1835 = vld [vmem:[#allocation2 + $0xa8] sm:$0xe]
      %v1836 = vld [vmem:[#allocation2 + $0xb4] sm:$0xe]
      %v1837 = vld [vmem:[%s983] sm:$0xf]
      %v1838 = vld [vmem:[%s983 + $0x4] sm:$0xf]
      %v1839 = vld [vmem:[%s983 + $0xc] sm:$0xf]
      %v1840 = vld [vmem:[%s983 + $0x10] sm:$0xf]
      %v1841 = vld [vmem:[%s983 + $0x18] sm:$0xf]
      %v1842 = vld [vmem:[%s983 + $0x1c] sm:$0xf]
      %v1843 = vld [vmem:[%s983 + $0x24] sm:$0xf]
      %v1844 = vld [vmem:[%s983 + $0x28] sm:$0xf]
      %v1845 = vld [vmem:[%s983 + $0x30] sm:$0xf]
      %v1846 = vld [vmem:[%s983 + $0x34] sm:$0xf]
      %v1847 = vld [vmem:[%s983 + $0x3c] sm:$0xf]
      %v1848 = vld [vmem:[%s983 + $0x40] sm:$0xf]
      %v1849 = vld [vmem:[%s983 + $0x48] sm:$0xf]
      %v1850 = vld [vmem:[%s983 + $0x4c] sm:$0xf]
      %v1851 = vld [vmem:[%s983 + $0x54] sm:$0xf]
      %v1852 = vld [vmem:[%s983 + $0x58] sm:$0xf]
      %v1853 = vld [vmem:[%s983 + $0x60] sm:$0xf]
      %v1854 = vld [vmem:[%s983 + $0x64] sm:$0xf]
      %v1855 = vld [vmem:[%s983 + $0x6c] sm:$0xf]
      %v1856 = vld [vmem:[%s983 + $0x70] sm:$0xf]
      %v1857 = vld [vmem:[%s983 + $0x78] sm:$0xf]
      %v1858 = vld [vmem:[%s983 + $0x7c] sm:$0xf]
      %v1859 = vld [vmem:[%s983 + $0x84] sm:$0xf]
      %v1860 = vld [vmem:[%s983 + $0x88] sm:$0xf]
      %v1861 = vld [vmem:[%s983 + $0x90] sm:$0xf]
      %v1862 = vld [vmem:[%s983 + $0x94] sm:$0xf]
      %v1863 = vld [vmem:[%s983 + $0x9c] sm:$0xf]
      %v1864 = vld [vmem:[%s983 + $0xa0] sm:$0xf]
      %v1865 = vld [vmem:[%s983 + $0xa8] sm:$0xf]
      %v1866 = vld [vmem:[%s983 + $0xac] sm:$0xf]
      %v1867 = vld [vmem:[%s983 + $0xb4] sm:$0xf]
      %v1868 = vld [vmem:[%s983 + $0xb8] sm:$0xf]
      %v1869 = vld [vmem:[%s983 + $0x8] sm:$0x1]
      %v1870 = vld [vmem:[%s983 + $0x14] sm:$0x1]
      %v1871 = vld [vmem:[%s983 + $0x20] sm:$0x1]
      %v1872 = vld [vmem:[%s983 + $0x2c] sm:$0x1]
      %v1873 = vld [vmem:[%s983 + $0x38] sm:$0x1]
      %v1874 = vld [vmem:[%s983 + $0x44] sm:$0x1]
      %v1875 = vld [vmem:[%s983 + $0x50] sm:$0x1]
      %v1876 = vld [vmem:[%s983 + $0x5c] sm:$0x1]
      %v1877 = vld [vmem:[%s983 + $0x68] sm:$0x1]
      %v1878 = vld [vmem:[%s983 + $0x74] sm:$0x1]
      %v1879 = vld [vmem:[%s983 + $0x80] sm:$0x1]
      %v1880 = vld [vmem:[%s983 + $0x8c] sm:$0x1]
      %v1881 = vld [vmem:[%s983 + $0x98] sm:$0x1]
      %v1882 = vld [vmem:[%s983 + $0xa4] sm:$0x1]
      %v1883 = vld [vmem:[%s983 + $0xb0] sm:$0x1]
      %v1884 = vld [vmem:[%s983 + $0xbc] sm:$0x1]
      %v1885 = vld [vmem:[%s983] sm:$0xe]
      %v1886 = vld [vmem:[%s983 + $0xc] sm:$0xe]
      %v1887 = vld [vmem:[%s983 + $0x18] sm:$0xe]
      %v1888 = vld [vmem:[%s983 + $0x24] sm:$0xe]
      %v1889 = vld [vmem:[%s983 + $0x30] sm:$0xe]
      %v1890 = vld [vmem:[%s983 + $0x3c] sm:$0xe]
      %v1891 = vld [vmem:[%s983 + $0x48] sm:$0xe]
      %v1892 = vld [vmem:[%s983 + $0x54] sm:$0xe]
      %v1893 = vld [vmem:[%s983 + $0x60] sm:$0xe]
      %v1894 = vld [vmem:[%s983 + $0x6c] sm:$0xe]
      %v1895 = vld [vmem:[%s983 + $0x78] sm:$0xe]
      %v1896 = vld [vmem:[%s983 + $0x84] sm:$0xe]
      %v1897 = vld [vmem:[%s983 + $0x90] sm:$0xe]
      %v1898 = vld [vmem:[%s983 + $0x9c] sm:$0xe]
      %v1899 = vld [vmem:[%s983 + $0xa8] sm:$0xe]
      %v1900 = vld [vmem:[%s983 + $0xb4] sm:$0xe]
      %s1901 = scalar_lea.vmem [#allocation2], 24
      %v1902 = vld [vmem:[%s1901] sm:$0xf]
      %v1903 = vld [vmem:[%s1901 + $0x4] sm:$0xf]
      %v1904 = vld [vmem:[%s1901 + $0xc] sm:$0xf]
      %v1905 = vld [vmem:[%s1901 + $0x10] sm:$0xf]
      %v1906 = vld [vmem:[%s1901 + $0x18] sm:$0xf]
      %v1907 = vld [vmem:[%s1901 + $0x1c] sm:$0xf]
      %v1908 = vld [vmem:[%s1901 + $0x24] sm:$0xf]
      %v1909 = vld [vmem:[%s1901 + $0x28] sm:$0xf]
      %v1910 = vld [vmem:[%s1901 + $0x30] sm:$0xf]
      %v1911 = vld [vmem:[%s1901 + $0x34] sm:$0xf]
      %v1912 = vld [vmem:[%s1901 + $0x3c] sm:$0xf]
      %v1913 = vld [vmem:[%s1901 + $0x40] sm:$0xf]
      %v1914 = vld [vmem:[%s1901 + $0x48] sm:$0xf]
      %v1915 = vld [vmem:[%s1901 + $0x4c] sm:$0xf]
      %v1916 = vld [vmem:[%s1901 + $0x54] sm:$0xf]
      %v1917 = vld [vmem:[%s1901 + $0x58] sm:$0xf]
      %v1918 = vld [vmem:[%s1901 + $0x60] sm:$0xf]
      %v1919 = vld [vmem:[%s1901 + $0x64] sm:$0xf]
      %v1920 = vld [vmem:[%s1901 + $0x6c] sm:$0xf]
      %v1921 = vld [vmem:[%s1901 + $0x70] sm:$0xf]
      %v1922 = vld [vmem:[%s1901 + $0x78] sm:$0xf]
      %v1923 = vld [vmem:[%s1901 + $0x7c] sm:$0xf]
      %v1924 = vld [vmem:[%s1901 + $0x84] sm:$0xf]
      %v1925 = vld [vmem:[%s1901 + $0x88] sm:$0xf]
      %v1926 = vld [vmem:[%s1901 + $0x90] sm:$0xf]
      %v1927 = vld [vmem:[%s1901 + $0x94] sm:$0xf]
      %v1928 = vld [vmem:[%s1901 + $0x9c] sm:$0xf]
      %v1929 = vld [vmem:[%s1901 + $0xa0] sm:$0xf]
      %v1930 = vld [vmem:[%s1901 + $0xa8] sm:$0xf]
      %v1931 = vld [vmem:[%s1901 + $0xac] sm:$0xf]
      %v1932 = vld [vmem:[%s1901 + $0xb4] sm:$0xf]
      %v1933 = vld [vmem:[%s1901 + $0xb8] sm:$0xf]
      %v1934 = vld [vmem:[%s1901 + $0x8] sm:$0x1]
      %v1935 = vld [vmem:[%s1901 + $0x14] sm:$0x1]
      %v1936 = vld [vmem:[%s1901 + $0x20] sm:$0x1]
      %v1937 = vld [vmem:[%s1901 + $0x2c] sm:$0x1]
      %v1938 = vld [vmem:[%s1901 + $0x38] sm:$0x1]
      %v1939 = vld [vmem:[%s1901 + $0x44] sm:$0x1]
      %v1940 = vld [vmem:[%s1901 + $0x50] sm:$0x1]
      %v1941 = vld [vmem:[%s1901 + $0x5c] sm:$0x1]
      %v1942 = vld [vmem:[%s1901 + $0x68] sm:$0x1]
      %v1943 = vld [vmem:[%s1901 + $0x74] sm:$0x1]
      %v1944 = vld [vmem:[%s1901 + $0x80] sm:$0x1]
      %v1945 = vld [vmem:[%s1901 + $0x8c] sm:$0x1]
      %v1946 = vld [vmem:[%s1901 + $0x98] sm:$0x1]
      %v1947 = vld [vmem:[%s1901 + $0xa4] sm:$0x1]
      %v1948 = vld [vmem:[%s1901 + $0xb0] sm:$0x1]
      %v1949 = vld [vmem:[%s1901 + $0xbc] sm:$0x1]
      %v1950 = vld [vmem:[%s1901] sm:$0xe]
      %v1951 = vld [vmem:[%s1901 + $0xc] sm:$0xe]
      %v1952 = vld [vmem:[%s1901 + $0x18] sm:$0xe]
      %v1953 = vld [vmem:[%s1901 + $0x24] sm:$0xe]
      %v1954 = vld [vmem:[%s1901 + $0x30] sm:$0xe]
      %v1955 = vld [vmem:[%s1901 + $0x3c] sm:$0xe]
      %v1956 = vld [vmem:[%s1901 + $0x48] sm:$0xe]
      %v1957 = vld [vmem:[%s1901 + $0x54] sm:$0xe]
      %v1958 = vld [vmem:[%s1901 + $0x60] sm:$0xe]
      %v1959 = vld [vmem:[%s1901 + $0x6c] sm:$0xe]
      %v1960 = vld [vmem:[%s1901 + $0x78] sm:$0xe]
      %v1961 = vld [vmem:[%s1901 + $0x84] sm:$0xe]
      %v1962 = vld [vmem:[%s1901 + $0x90] sm:$0xe]
      %v1963 = vld [vmem:[%s1901 + $0x9c] sm:$0xe]
      %v1964 = vld [vmem:[%s1901 + $0xa8] sm:$0xe]
      %v1965 = vld [vmem:[%s1901 + $0xb4] sm:$0xe]
      %v1998 = vunpack.c.l.b16 %v1773
      %v1999 = vunpack.c.l.b16 %v1774
      %v2000 = vunpack.c.l.b16 %v1775
      %v2001 = vunpack.c.l.b16 %v1776
      %v2002 = vunpack.c.l.b16 %v1777
      %v2003 = vunpack.c.l.b16 %v1778
      %v2004 = vunpack.c.l.b16 %v1779
      %v2005 = vunpack.c.l.b16 %v1780
      %v2006 = vunpack.c.l.b16 %v1781
      %v2007 = vunpack.c.l.b16 %v1782
      %v2008 = vunpack.c.l.b16 %v1783
      %v2009 = vunpack.c.l.b16 %v1784
      %v2010 = vunpack.c.l.b16 %v1785
      %v2011 = vunpack.c.l.b16 %v1786
      %v2012 = vunpack.c.l.b16 %v1787
      %v2013 = vunpack.c.l.b16 %v1788
      %v2014 = vunpack.c.l.b16 %v1789
      %v2015 = vunpack.c.l.b16 %v1790
      %v2016 = vunpack.c.l.b16 %v1791
      %v2017 = vunpack.c.l.b16 %v1792
      %v2018 = vunpack.c.l.b16 %v1793
      %v2019 = vunpack.c.l.b16 %v1794
      %v2020 = vunpack.c.l.b16 %v1795
      %v2021 = vunpack.c.l.b16 %v1796
      %v2022 = vunpack.c.l.b16 %v1797
      %v2023 = vunpack.c.l.b16 %v1798
      %v2024 = vunpack.c.l.b16 %v1799
      %v2025 = vunpack.c.l.b16 %v1800
      %v2026 = vunpack.c.l.b16 %v1801
      %v2027 = vunpack.c.l.b16 %v1802
      %v2028 = vunpack.c.l.b16 %v1803
      %v2029 = vunpack.c.l.b16 %v1804
      %v2030 = vpack.c.b16 %v1999, %v1998
      %v2031 = vpack.c.b16 %v2001, %v2000
      %v2032 = vpack.c.b16 %v2003, %v2002
      %v2033 = vpack.c.b16 %v2005, %v2004
      %v2034 = vpack.c.b16 %v2007, %v2006
      %v2035 = vpack.c.b16 %v2009, %v2008
      %v2036 = vpack.c.b16 %v2011, %v2010
      %v2037 = vpack.c.b16 %v2013, %v2012
      %v2038 = vpack.c.b16 %v2015, %v2014
      %v2039 = vpack.c.b16 %v2017, %v2016
      %v2040 = vpack.c.b16 %v2019, %v2018
      %v2041 = vpack.c.b16 %v2021, %v2020
      %v2042 = vpack.c.b16 %v2023, %v2022
      %v2043 = vpack.c.b16 %v2025, %v2024
      %v2044 = vpack.c.b16 %v2027, %v2026
      %v2045 = vpack.c.b16 %v2029, %v2028
      %v2062 = vunpack.c.l.b16 %v1805
      %v2063 = vunpack.c.l.b16 %v1806
      %v2064 = vunpack.c.l.b16 %v1807
      %v2065 = vunpack.c.l.b16 %v1808
      %v2066 = vunpack.c.l.b16 %v1809
      %v2067 = vunpack.c.l.b16 %v1810
      %v2068 = vunpack.c.l.b16 %v1811
      %v2069 = vunpack.c.l.b16 %v1812
      %v2070 = vunpack.c.l.b16 %v1813
      %v2071 = vunpack.c.l.b16 %v1814
      %v2072 = vunpack.c.l.b16 %v1815
      %v2073 = vunpack.c.l.b16 %v1816
      %v2074 = vunpack.c.l.b16 %v1817
      %v2075 = vunpack.c.l.b16 %v1818
      %v2076 = vunpack.c.l.b16 %v1819
      %v2077 = vunpack.c.l.b16 %v1820
      %v2078 = vpack.c.b16 %v2062, %v2062
      %v2079 = vpack.c.b16 %v2063, %v2063
      %v2080 = vpack.c.b16 %v2064, %v2064
      %v2081 = vpack.c.b16 %v2065, %v2065
      %v2082 = vpack.c.b16 %v2066, %v2066
      %v2083 = vpack.c.b16 %v2067, %v2067
      %v2084 = vpack.c.b16 %v2068, %v2068
      %v2085 = vpack.c.b16 %v2069, %v2069
      %v2086 = vpack.c.b16 %v2070, %v2070
      %v2087 = vpack.c.b16 %v2071, %v2071
      %v2088 = vpack.c.b16 %v2072, %v2072
      %v2089 = vpack.c.b16 %v2073, %v2073
      %v2090 = vpack.c.b16 %v2074, %v2074
      %v2091 = vpack.c.b16 %v2075, %v2075
      %v2092 = vpack.c.b16 %v2076, %v2076
      %v2093 = vpack.c.b16 %v2077, %v2077
      %vm2094 = vsmask.f32 7424
      %v2096 = vshrl.u32 %v2030, 16
      %v2098 = vshll.u32 %v2030, 16
      %v2100 = vrot.slane %v2098, 1
      %v2101 = vor.u32 %v2096, %v2100
      %v2103 = vshll.u32 %v2078, 16
      %v2105 = vrot.slane %v2103, 1
      %v2106 = vsel %vm2094, %v2101, %v2105
      %v2108 = vshrl.u32 %v2031, 16
      %v2110 = vshll.u32 %v2031, 16
      %v2112 = vrot.slane %v2110, 1
      %v2113 = vor.u32 %v2108, %v2112
      %v2115 = vshll.u32 %v2079, 16
      %v2117 = vrot.slane %v2115, 1
      %v2118 = vsel %vm2094, %v2113, %v2117
      %v2120 = vshrl.u32 %v2032, 16
      %v2122 = vshll.u32 %v2032, 16
      %v2124 = vrot.slane %v2122, 1
      %v2125 = vor.u32 %v2120, %v2124
      %v2127 = vshll.u32 %v2080, 16
      %v2129 = vrot.slane %v2127, 1
      %v2130 = vsel %vm2094, %v2125, %v2129
      %v2132 = vshrl.u32 %v2033, 16
      %v2134 = vshll.u32 %v2033, 16
      %v2136 = vrot.slane %v2134, 1
      %v2137 = vor.u32 %v2132, %v2136
      %v2139 = vshll.u32 %v2081, 16
      %v2141 = vrot.slane %v2139, 1
      %v2142 = vsel %vm2094, %v2137, %v2141
      %v2144 = vshrl.u32 %v2034, 16
      %v2146 = vshll.u32 %v2034, 16
      %v2148 = vrot.slane %v2146, 1
      %v2149 = vor.u32 %v2144, %v2148
      %v2151 = vshll.u32 %v2082, 16
      %v2153 = vrot.slane %v2151, 1
      %v2154 = vsel %vm2094, %v2149, %v2153
      %v2156 = vshrl.u32 %v2035, 16
      %v2158 = vshll.u32 %v2035, 16
      %v2160 = vrot.slane %v2158, 1
      %v2161 = vor.u32 %v2156, %v2160
      %v2163 = vshll.u32 %v2083, 16
      %v2165 = vrot.slane %v2163, 1
      %v2166 = vsel %vm2094, %v2161, %v2165
      %v2168 = vshrl.u32 %v2036, 16
      %v2170 = vshll.u32 %v2036, 16
      %v2172 = vrot.slane %v2170, 1
      %v2173 = vor.u32 %v2168, %v2172
      %v2175 = vshll.u32 %v2084, 16
      %v2177 = vrot.slane %v2175, 1
      %v2178 = vsel %vm2094, %v2173, %v2177
      %v2180 = vshrl.u32 %v2037, 16
      %v2182 = vshll.u32 %v2037, 16
      %v2184 = vrot.slane %v2182, 1
      %v2185 = vor.u32 %v2180, %v2184
      %v2187 = vshll.u32 %v2085, 16
      %v2189 = vrot.slane %v2187, 1
      %v2190 = vsel %vm2094, %v2185, %v2189
      %v2192 = vshrl.u32 %v2038, 16
      %v2194 = vshll.u32 %v2038, 16
      %v2196 = vrot.slane %v2194, 1
      %v2197 = vor.u32 %v2192, %v2196
      %v2199 = vshll.u32 %v2086, 16
      %v2201 = vrot.slane %v2199, 1
      %v2202 = vsel %vm2094, %v2197, %v2201
      %v2204 = vshrl.u32 %v2039, 16
      %v2206 = vshll.u32 %v2039, 16
      %v2208 = vrot.slane %v2206, 1
      %v2209 = vor.u32 %v2204, %v2208
      %v2211 = vshll.u32 %v2087, 16
      %v2213 = vrot.slane %v2211, 1
      %v2214 = vsel %vm2094, %v2209, %v2213
      %v2216 = vshrl.u32 %v2040, 16
      %v2218 = vshll.u32 %v2040, 16
      %v2220 = vrot.slane %v2218, 1
      %v2221 = vor.u32 %v2216, %v2220
      %v2223 = vshll.u32 %v2088, 16
      %v2225 = vrot.slane %v2223, 1
      %v2226 = vsel %vm2094, %v2221, %v2225
      %v2228 = vshrl.u32 %v2041, 16
      %v2230 = vshll.u32 %v2041, 16
      %v2232 = vrot.slane %v2230, 1
      %v2233 = vor.u32 %v2228, %v2232
      %v2235 = vshll.u32 %v2089, 16
      %v2237 = vrot.slane %v2235, 1
      %v2238 = vsel %vm2094, %v2233, %v2237
      %v2240 = vshrl.u32 %v2042, 16
      %v2242 = vshll.u32 %v2042, 16
      %v2244 = vrot.slane %v2242, 1
      %v2245 = vor.u32 %v2240, %v2244
      %v2247 = vshll.u32 %v2090, 16
      %v2249 = vrot.slane %v2247, 1
      %v2250 = vsel %vm2094, %v2245, %v2249
      %v2252 = vshrl.u32 %v2043, 16
      %v2254 = vshll.u32 %v2043, 16
      %v2256 = vrot.slane %v2254, 1
      %v2257 = vor.u32 %v2252, %v2256
      %v2259 = vshll.u32 %v2091, 16
      %v2261 = vrot.slane %v2259, 1
      %v2262 = vsel %vm2094, %v2257, %v2261
      %v2264 = vshrl.u32 %v2044, 16
      %v2266 = vshll.u32 %v2044, 16
      %v2268 = vrot.slane %v2266, 1
      %v2269 = vor.u32 %v2264, %v2268
      %v2271 = vshll.u32 %v2092, 16
      %v2273 = vrot.slane %v2271, 1
      %v2274 = vsel %vm2094, %v2269, %v2273
      %v2276 = vshrl.u32 %v2045, 16
      %v2278 = vshll.u32 %v2045, 16
      %v2280 = vrot.slane %v2278, 1
      %v2281 = vor.u32 %v2276, %v2280
      %v2283 = vshll.u32 %v2093, 16
      %v2285 = vrot.slane %v2283, 1
      %v2286 = vsel %vm2094, %v2281, %v2285
      %2287 = vrot.lane.b32.xlu0 %v2106, 4
      %v2288 = vpop.permute.xlu0 %2287
      %2289 = vrot.lane.b32.xlu0 %v2118, 4
      %v2290 = vpop.permute.xlu0 %2289
      %2291 = vrot.lane.b32.xlu0 %v2130, 4
      %v2292 = vpop.permute.xlu0 %2291
      %2293 = vrot.lane.b32.xlu0 %v2142, 4
      %v2294 = vpop.permute.xlu0 %2293
      %2295 = vrot.lane.b32.xlu0 %v2154, 4
      %v2296 = vpop.permute.xlu0 %2295
      %2297 = vrot.lane.b32.xlu0 %v2166, 4
      %v2298 = vpop.permute.xlu0 %2297
      %2299 = vrot.lane.b32.xlu0 %v2178, 4
      %v2300 = vpop.permute.xlu0 %2299
      %2301 = vrot.lane.b32.xlu0 %v2190, 4
      %v2302 = vpop.permute.xlu0 %2301
      %2303 = vrot.lane.b32.xlu0 %v2202, 4
      %v2304 = vpop.permute.xlu0 %2303
      %2305 = vrot.lane.b32.xlu0 %v2214, 4
      %v2306 = vpop.permute.xlu0 %2305
      %2307 = vrot.lane.b32.xlu0 %v2226, 4
      %v2308 = vpop.permute.xlu0 %2307
      %2309 = vrot.lane.b32.xlu0 %v2238, 4
      %v2310 = vpop.permute.xlu0 %2309
      %2311 = vrot.lane.b32.xlu0 %v2250, 4
      %v2312 = vpop.permute.xlu0 %2311
      %2313 = vrot.lane.b32.xlu0 %v2262, 4
      %v2314 = vpop.permute.xlu0 %2313
      %2315 = vrot.lane.b32.xlu0 %v2274, 4
      %v2316 = vpop.permute.xlu0 %2315
      %2317 = vrot.lane.b32.xlu0 %v2286, 4
      %v2318 = vpop.permute.xlu0 %2317
      %v2335 = vunpack.c.l.b16 %v1821
      %v2336 = vunpack.c.l.b16 %v1822
      %v2337 = vunpack.c.l.b16 %v1823
      %v2338 = vunpack.c.l.b16 %v1824
      %v2339 = vunpack.c.l.b16 %v1825
      %v2340 = vunpack.c.l.b16 %v1826
      %v2341 = vunpack.c.l.b16 %v1827
      %v2342 = vunpack.c.l.b16 %v1828
      %v2343 = vunpack.c.l.b16 %v1829
      %v2344 = vunpack.c.l.b16 %v1830
      %v2345 = vunpack.c.l.b16 %v1831
      %v2346 = vunpack.c.l.b16 %v1832
      %v2347 = vunpack.c.l.b16 %v1833
      %v2348 = vunpack.c.l.b16 %v1834
      %v2349 = vunpack.c.l.b16 %v1835
      %v2350 = vunpack.c.l.b16 %v1836
      %v2351 = vpack.c.b16 %v1999, %v2335
      %v2352 = vpack.c.b16 %v2001, %v2336
      %v2353 = vpack.c.b16 %v2003, %v2337
      %v2354 = vpack.c.b16 %v2005, %v2338
      %v2355 = vpack.c.b16 %v2007, %v2339
      %v2356 = vpack.c.b16 %v2009, %v2340
      %v2357 = vpack.c.b16 %v2011, %v2341
      %v2358 = vpack.c.b16 %v2013, %v2342
      %v2359 = vpack.c.b16 %v2015, %v2343
      %v2360 = vpack.c.b16 %v2017, %v2344
      %v2361 = vpack.c.b16 %v2019, %v2345
      %v2362 = vpack.c.b16 %v2021, %v2346
      %v2363 = vpack.c.b16 %v2023, %v2347
      %v2364 = vpack.c.b16 %v2025, %v2348
      %v2365 = vpack.c.b16 %v2027, %v2349
      %v2366 = vpack.c.b16 %v2029, %v2350
      %vm2367 = vcmask 1046528
      %v2368 = vrot.slane %v2351, 1
      %v2369 = vrot.slane %v2078, 1
      %v2370 = vsel %vm2367, %v2368, %v2369
      %v2371 = vrot.slane %v2352, 1
      %v2372 = vrot.slane %v2079, 1
      %v2373 = vsel %vm2367, %v2371, %v2372
      %v2374 = vrot.slane %v2353, 1
      %v2375 = vrot.slane %v2080, 1
      %v2376 = vsel %vm2367, %v2374, %v2375
      %v2377 = vrot.slane %v2354, 1
      %v2378 = vrot.slane %v2081, 1
      %v2379 = vsel %vm2367, %v2377, %v2378
      %v2380 = vrot.slane %v2355, 1
      %v2381 = vrot.slane %v2082, 1
      %v2382 = vsel %vm2367, %v2380, %v2381
      %v2383 = vrot.slane %v2356, 1
      %v2384 = vrot.slane %v2083, 1
      %v2385 = vsel %vm2367, %v2383, %v2384
      %v2386 = vrot.slane %v2357, 1
      %v2387 = vrot.slane %v2084, 1
      %v2388 = vsel %vm2367, %v2386, %v2387
      %v2389 = vrot.slane %v2358, 1
      %v2390 = vrot.slane %v2085, 1
      %v2391 = vsel %vm2367, %v2389, %v2390
      %v2392 = vrot.slane %v2359, 1
      %v2393 = vrot.slane %v2086, 1
      %v2394 = vsel %vm2367, %v2392, %v2393
      %v2395 = vrot.slane %v2360, 1
      %v2396 = vrot.slane %v2087, 1
      %v2397 = vsel %vm2367, %v2395, %v2396
      %v2398 = vrot.slane %v2361, 1
      %v2399 = vrot.slane %v2088, 1
      %v2400 = vsel %vm2367, %v2398, %v2399
      %v2401 = vrot.slane %v2362, 1
      %v2402 = vrot.slane %v2089, 1
      %v2403 = vsel %vm2367, %v2401, %v2402
      %v2404 = vrot.slane %v2363, 1
      %v2405 = vrot.slane %v2090, 1
      %v2406 = vsel %vm2367, %v2404, %v2405
      %v2407 = vrot.slane %v2364, 1
      %v2408 = vrot.slane %v2091, 1
      %v2409 = vsel %vm2367, %v2407, %v2408
      %v2410 = vrot.slane %v2365, 1
      %v2411 = vrot.slane %v2092, 1
      %v2412 = vsel %vm2367, %v2410, %v2411
      %v2413 = vrot.slane %v2366, 1
      %v2414 = vrot.slane %v2093, 1
      %v2415 = vsel %vm2367, %v2413, %v2414
      %2416 = vrot.lane.b32.xlu0 %v2370, 8
      %v2417 = vpop.permute.xlu0 %2416
      %2418 = vrot.lane.b32.xlu0 %v2373, 8
      %v2419 = vpop.permute.xlu0 %2418
      %2420 = vrot.lane.b32.xlu0 %v2376, 8
      %v2421 = vpop.permute.xlu0 %2420
      %2422 = vrot.lane.b32.xlu0 %v2379, 8
      %v2423 = vpop.permute.xlu0 %2422
      %2424 = vrot.lane.b32.xlu0 %v2382, 8
      %v2425 = vpop.permute.xlu0 %2424
      %2426 = vrot.lane.b32.xlu0 %v2385, 8
      %v2427 = vpop.permute.xlu0 %2426
      %2428 = vrot.lane.b32.xlu0 %v2388, 8
      %v2429 = vpop.permute.xlu0 %2428
      %2430 = vrot.lane.b32.xlu0 %v2391, 8
      %v2431 = vpop.permute.xlu0 %2430
      %2432 = vrot.lane.b32.xlu0 %v2394, 8
      %v2433 = vpop.permute.xlu0 %2432
      %2434 = vrot.lane.b32.xlu0 %v2397, 8
      %v2435 = vpop.permute.xlu0 %2434
      %2436 = vrot.lane.b32.xlu0 %v2400, 8
      %v2437 = vpop.permute.xlu0 %2436
      %2438 = vrot.lane.b32.xlu0 %v2403, 8
      %v2439 = vpop.permute.xlu0 %2438
      %2440 = vrot.lane.b32.xlu0 %v2406, 8
      %v2441 = vpop.permute.xlu0 %2440
      %2442 = vrot.lane.b32.xlu0 %v2409, 8
      %v2443 = vpop.permute.xlu0 %2442
      %2444 = vrot.lane.b32.xlu0 %v2412, 8
      %v2445 = vpop.permute.xlu0 %2444
      %2446 = vrot.lane.b32.xlu0 %v2415, 8
      %v2447 = vpop.permute.xlu0 %2446
      %v2480 = vunpack.c.l.b16 %v1837
      %v2481 = vunpack.c.l.b16 %v1838
      %v2482 = vunpack.c.l.b16 %v1839
      %v2483 = vunpack.c.l.b16 %v1840
      %v2484 = vunpack.c.l.b16 %v1841
      %v2485 = vunpack.c.l.b16 %v1842
      %v2486 = vunpack.c.l.b16 %v1843
      %v2487 = vunpack.c.l.b16 %v1844
      %v2488 = vunpack.c.l.b16 %v1845
      %v2489 = vunpack.c.l.b16 %v1846
      %v2490 = vunpack.c.l.b16 %v1847
      %v2491 = vunpack.c.l.b16 %v1848
      %v2492 = vunpack.c.l.b16 %v1849
      %v2493 = vunpack.c.l.b16 %v1850
      %v2494 = vunpack.c.l.b16 %v1851
      %v2495 = vunpack.c.l.b16 %v1852
      %v2496 = vunpack.c.l.b16 %v1853
      %v2497 = vunpack.c.l.b16 %v1854
      %v2498 = vunpack.c.l.b16 %v1855
      %v2499 = vunpack.c.l.b16 %v1856
      %v2500 = vunpack.c.l.b16 %v1857
      %v2501 = vunpack.c.l.b16 %v1858
      %v2502 = vunpack.c.l.b16 %v1859
      %v2503 = vunpack.c.l.b16 %v1860
      %v2504 = vunpack.c.l.b16 %v1861
      %v2505 = vunpack.c.l.b16 %v1862
      %v2506 = vunpack.c.l.b16 %v1863
      %v2507 = vunpack.c.l.b16 %v1864
      %v2508 = vunpack.c.l.b16 %v1865
      %v2509 = vunpack.c.l.b16 %v1866
      %v2510 = vunpack.c.l.b16 %v1867
      %v2511 = vunpack.c.l.b16 %v1868
      %v2512 = vpack.c.b16 %v2481, %v2480
      %v2513 = vpack.c.b16 %v2483, %v2482
      %v2514 = vpack.c.b16 %v2485, %v2484
      %v2515 = vpack.c.b16 %v2487, %v2486
      %v2516 = vpack.c.b16 %v2489, %v2488
      %v2517 = vpack.c.b16 %v2491, %v2490
      %v2518 = vpack.c.b16 %v2493, %v2492
      %v2519 = vpack.c.b16 %v2495, %v2494
      %v2520 = vpack.c.b16 %v2497, %v2496
      %v2521 = vpack.c.b16 %v2499, %v2498
      %v2522 = vpack.c.b16 %v2501, %v2500
      %v2523 = vpack.c.b16 %v2503, %v2502
      %v2524 = vpack.c.b16 %v2505, %v2504
      %v2525 = vpack.c.b16 %v2507, %v2506
      %v2526 = vpack.c.b16 %v2509, %v2508
      %v2527 = vpack.c.b16 %v2511, %v2510
      %2528 = vrot.lane.b32.xlu0 %v2512, 12
      %v2529 = vpop.permute.xlu0 %2528
      %2530 = vrot.lane.b32.xlu0 %v2513, 12
      %v2531 = vpop.permute.xlu0 %2530
      %2532 = vrot.lane.b32.xlu0 %v2514, 12
      %v2533 = vpop.permute.xlu0 %2532
      %2534 = vrot.lane.b32.xlu0 %v2515, 12
      %v2535 = vpop.permute.xlu0 %2534
      %2536 = vrot.lane.b32.xlu0 %v2516, 12
      %v2537 = vpop.permute.xlu0 %2536
      %2538 = vrot.lane.b32.xlu0 %v2517, 12
      %v2539 = vpop.permute.xlu0 %2538
      %2540 = vrot.lane.b32.xlu0 %v2518, 12
      %v2541 = vpop.permute.xlu0 %2540
      %2542 = vrot.lane.b32.xlu0 %v2519, 12
      %v2543 = vpop.permute.xlu0 %2542
      %2544 = vrot.lane.b32.xlu0 %v2520, 12
      %v2545 = vpop.permute.xlu0 %2544
      %2546 = vrot.lane.b32.xlu0 %v2521, 12
      %v2547 = vpop.permute.xlu0 %2546
      %2548 = vrot.lane.b32.xlu0 %v2522, 12
      %v2549 = vpop.permute.xlu0 %2548
      %2550 = vrot.lane.b32.xlu0 %v2523, 12
      %v2551 = vpop.permute.xlu0 %2550
      %2552 = vrot.lane.b32.xlu0 %v2524, 12
      %v2553 = vpop.permute.xlu0 %2552
      %2554 = vrot.lane.b32.xlu0 %v2525, 12
      %v2555 = vpop.permute.xlu0 %2554
      %2556 = vrot.lane.b32.xlu0 %v2526, 12
      %v2557 = vpop.permute.xlu0 %2556
      %2558 = vrot.lane.b32.xlu0 %v2527, 12
      %v2559 = vpop.permute.xlu0 %2558
      %v2576 = vunpack.c.l.b16 %v1869
      %v2577 = vunpack.c.l.b16 %v1870
      %v2578 = vunpack.c.l.b16 %v1871
      %v2579 = vunpack.c.l.b16 %v1872
      %v2580 = vunpack.c.l.b16 %v1873
      %v2581 = vunpack.c.l.b16 %v1874
      %v2582 = vunpack.c.l.b16 %v1875
      %v2583 = vunpack.c.l.b16 %v1876
      %v2584 = vunpack.c.l.b16 %v1877
      %v2585 = vunpack.c.l.b16 %v1878
      %v2586 = vunpack.c.l.b16 %v1879
      %v2587 = vunpack.c.l.b16 %v1880
      %v2588 = vunpack.c.l.b16 %v1881
      %v2589 = vunpack.c.l.b16 %v1882
      %v2590 = vunpack.c.l.b16 %v1883
      %v2591 = vunpack.c.l.b16 %v1884
      %v2592 = vpack.c.b16 %v2576, %v2576
      %v2593 = vpack.c.b16 %v2577, %v2577
      %v2594 = vpack.c.b16 %v2578, %v2578
      %v2595 = vpack.c.b16 %v2579, %v2579
      %v2596 = vpack.c.b16 %v2580, %v2580
      %v2597 = vpack.c.b16 %v2581, %v2581
      %v2598 = vpack.c.b16 %v2582, %v2582
      %v2599 = vpack.c.b16 %v2583, %v2583
      %v2600 = vpack.c.b16 %v2584, %v2584
      %v2601 = vpack.c.b16 %v2585, %v2585
      %v2602 = vpack.c.b16 %v2586, %v2586
      %v2603 = vpack.c.b16 %v2587, %v2587
      %v2604 = vpack.c.b16 %v2588, %v2588
      %v2605 = vpack.c.b16 %v2589, %v2589
      %v2606 = vpack.c.b16 %v2590, %v2590
      %v2607 = vpack.c.b16 %v2591, %v2591
      %v2609 = vshrl.u32 %v2512, 16
      %v2611 = vshll.u32 %v2512, 16
      %v2613 = vrot.slane %v2611, 1
      %v2614 = vor.u32 %v2609, %v2613
      %v2616 = vshll.u32 %v2592, 16
      %v2618 = vrot.slane %v2616, 1
      %v2619 = vsel %vm2094, %v2614, %v2618
      %v2621 = vshrl.u32 %v2513, 16
      %v2623 = vshll.u32 %v2513, 16
      %v2625 = vrot.slane %v2623, 1
      %v2626 = vor.u32 %v2621, %v2625
      %v2628 = vshll.u32 %v2593, 16
      %v2630 = vrot.slane %v2628, 1
      %v2631 = vsel %vm2094, %v2626, %v2630
      %v2633 = vshrl.u32 %v2514, 16
      %v2635 = vshll.u32 %v2514, 16
      %v2637 = vrot.slane %v2635, 1
      %v2638 = vor.u32 %v2633, %v2637
      %v2640 = vshll.u32 %v2594, 16
      %v2642 = vrot.slane %v2640, 1
      %v2643 = vsel %vm2094, %v2638, %v2642
      %v2645 = vshrl.u32 %v2515, 16
      %v2647 = vshll.u32 %v2515, 16
      %v2649 = vrot.slane %v2647, 1
      %v2650 = vor.u32 %v2645, %v2649
      %v2652 = vshll.u32 %v2595, 16
      %v2654 = vrot.slane %v2652, 1
      %v2655 = vsel %vm2094, %v2650, %v2654
      %v2657 = vshrl.u32 %v2516, 16
      %v2659 = vshll.u32 %v2516, 16
      %v2661 = vrot.slane %v2659, 1
      %v2662 = vor.u32 %v2657, %v2661
      %v2664 = vshll.u32 %v2596, 16
      %v2666 = vrot.slane %v2664, 1
      %v2667 = vsel %vm2094, %v2662, %v2666
      %v2669 = vshrl.u32 %v2517, 16
      %v2671 = vshll.u32 %v2517, 16
      %v2673 = vrot.slane %v2671, 1
      %v2674 = vor.u32 %v2669, %v2673
      %v2676 = vshll.u32 %v2597, 16
      %v2678 = vrot.slane %v2676, 1
      %v2679 = vsel %vm2094, %v2674, %v2678
      %v2681 = vshrl.u32 %v2518, 16
      %v2683 = vshll.u32 %v2518, 16
      %v2685 = vrot.slane %v2683, 1
      %v2686 = vor.u32 %v2681, %v2685
      %v2688 = vshll.u32 %v2598, 16
      %v2690 = vrot.slane %v2688, 1
      %v2691 = vsel %vm2094, %v2686, %v2690
      %v2693 = vshrl.u32 %v2519, 16
      %v2695 = vshll.u32 %v2519, 16
      %v2697 = vrot.slane %v2695, 1
      %v2698 = vor.u32 %v2693, %v2697
      %v2700 = vshll.u32 %v2599, 16
      %v2702 = vrot.slane %v2700, 1
      %v2703 = vsel %vm2094, %v2698, %v2702
      %v2705 = vshrl.u32 %v2520, 16
      %v2707 = vshll.u32 %v2520, 16
      %v2709 = vrot.slane %v2707, 1
      %v2710 = vor.u32 %v2705, %v2709
      %v2712 = vshll.u32 %v2600, 16
      %v2714 = vrot.slane %v2712, 1
      %v2715 = vsel %vm2094, %v2710, %v2714
      %v2717 = vshrl.u32 %v2521, 16
      %v2719 = vshll.u32 %v2521, 16
      %v2721 = vrot.slane %v2719, 1
      %v2722 = vor.u32 %v2717, %v2721
      %v2724 = vshll.u32 %v2601, 16
      %v2726 = vrot.slane %v2724, 1
      %v2727 = vsel %vm2094, %v2722, %v2726
      %v2729 = vshrl.u32 %v2522, 16
      %v2731 = vshll.u32 %v2522, 16
      %v2733 = vrot.slane %v2731, 1
      %v2734 = vor.u32 %v2729, %v2733
      %v2736 = vshll.u32 %v2602, 16
      %v2738 = vrot.slane %v2736, 1
      %v2739 = vsel %vm2094, %v2734, %v2738
      %v2741 = vshrl.u32 %v2523, 16
      %v2743 = vshll.u32 %v2523, 16
      %v2745 = vrot.slane %v2743, 1
      %v2746 = vor.u32 %v2741, %v2745
      %v2748 = vshll.u32 %v2603, 16
      %v2750 = vrot.slane %v2748, 1
      %v2751 = vsel %vm2094, %v2746, %v2750
      %v2753 = vshrl.u32 %v2524, 16
      %v2755 = vshll.u32 %v2524, 16
      %v2757 = vrot.slane %v2755, 1
      %v2758 = vor.u32 %v2753, %v2757
      %v2760 = vshll.u32 %v2604, 16
      %v2762 = vrot.slane %v2760, 1
      %v2763 = vsel %vm2094, %v2758, %v2762
      %v2765 = vshrl.u32 %v2525, 16
      %v2767 = vshll.u32 %v2525, 16
      %v2769 = vrot.slane %v2767, 1
      %v2770 = vor.u32 %v2765, %v2769
      %v2772 = vshll.u32 %v2605, 16
      %v2774 = vrot.slane %v2772, 1
      %v2775 = vsel %vm2094, %v2770, %v2774
      %v2777 = vshrl.u32 %v2526, 16
      %v2779 = vshll.u32 %v2526, 16
      %v2781 = vrot.slane %v2779, 1
      %v2782 = vor.u32 %v2777, %v2781
      %v2784 = vshll.u32 %v2606, 16
      %v2786 = vrot.slane %v2784, 1
      %v2787 = vsel %vm2094, %v2782, %v2786
      %v2789 = vshrl.u32 %v2527, 16
      %v2791 = vshll.u32 %v2527, 16
      %v2793 = vrot.slane %v2791, 1
      %v2794 = vor.u32 %v2789, %v2793
      %v2796 = vshll.u32 %v2607, 16
      %v2798 = vrot.slane %v2796, 1
      %v2799 = vsel %vm2094, %v2794, %v2798
      %2800 = vrot.lane.b32.xlu0 %v2619, 16
      %v2801 = vpop.permute.xlu0 %2800
      %2802 = vrot.lane.b32.xlu0 %v2631, 16
      %v2803 = vpop.permute.xlu0 %2802
      %2804 = vrot.lane.b32.xlu0 %v2643, 16
      %v2805 = vpop.permute.xlu0 %2804
      %2806 = vrot.lane.b32.xlu0 %v2655, 16
      %v2807 = vpop.permute.xlu0 %2806
      %2808 = vrot.lane.b32.xlu0 %v2667, 16
      %v2809 = vpop.permute.xlu0 %2808
      %2810 = vrot.lane.b32.xlu0 %v2679, 16
      %v2811 = vpop.permute.xlu0 %2810
      %2812 = vrot.lane.b32.xlu0 %v2691, 16
      %v2813 = vpop.permute.xlu0 %2812
      %2814 = vrot.lane.b32.xlu0 %v2703, 16
      %v2815 = vpop.permute.xlu0 %2814
      %2816 = vrot.lane.b32.xlu0 %v2715, 16
      %v2817 = vpop.permute.xlu0 %2816
      %2818 = vrot.lane.b32.xlu0 %v2727, 16
      %v2819 = vpop.permute.xlu0 %2818
      %2820 = vrot.lane.b32.xlu0 %v2739, 16
      %v2821 = vpop.permute.xlu0 %2820
      %2822 = vrot.lane.b32.xlu0 %v2751, 16
      %v2823 = vpop.permute.xlu0 %2822
      %2824 = vrot.lane.b32.xlu0 %v2763, 16
      %v2825 = vpop.permute.xlu0 %2824
      %2826 = vrot.lane.b32.xlu0 %v2775, 16
      %v2827 = vpop.permute.xlu0 %2826
      %2828 = vrot.lane.b32.xlu0 %v2787, 16
      %v2829 = vpop.permute.xlu0 %2828
      %2830 = vrot.lane.b32.xlu0 %v2799, 16
      %v2831 = vpop.permute.xlu0 %2830
      %v2848 = vunpack.c.l.b16 %v1885
      %v2849 = vunpack.c.l.b16 %v1886
      %v2850 = vunpack.c.l.b16 %v1887
      %v2851 = vunpack.c.l.b16 %v1888
      %v2852 = vunpack.c.l.b16 %v1889
      %v2853 = vunpack.c.l.b16 %v1890
      %v2854 = vunpack.c.l.b16 %v1891
      %v2855 = vunpack.c.l.b16 %v1892
      %v2856 = vunpack.c.l.b16 %v1893
      %v2857 = vunpack.c.l.b16 %v1894
      %v2858 = vunpack.c.l.b16 %v1895
      %v2859 = vunpack.c.l.b16 %v1896
      %v2860 = vunpack.c.l.b16 %v1897
      %v2861 = vunpack.c.l.b16 %v1898
      %v2862 = vunpack.c.l.b16 %v1899
      %v2863 = vunpack.c.l.b16 %v1900
      %v2864 = vpack.c.b16 %v2481, %v2848
      %v2865 = vpack.c.b16 %v2483, %v2849
      %v2866 = vpack.c.b16 %v2485, %v2850
      %v2867 = vpack.c.b16 %v2487, %v2851
      %v2868 = vpack.c.b16 %v2489, %v2852
      %v2869 = vpack.c.b16 %v2491, %v2853
      %v2870 = vpack.c.b16 %v2493, %v2854
      %v2871 = vpack.c.b16 %v2495, %v2855
      %v2872 = vpack.c.b16 %v2497, %v2856
      %v2873 = vpack.c.b16 %v2499, %v2857
      %v2874 = vpack.c.b16 %v2501, %v2858
      %v2875 = vpack.c.b16 %v2503, %v2859
      %v2876 = vpack.c.b16 %v2505, %v2860
      %v2877 = vpack.c.b16 %v2507, %v2861
      %v2878 = vpack.c.b16 %v2509, %v2862
      %v2879 = vpack.c.b16 %v2511, %v2863
      %v2880 = vrot.slane %v2864, 1
      %v2881 = vrot.slane %v2592, 1
      %v2882 = vsel %vm2367, %v2880, %v2881
      %v2883 = vrot.slane %v2865, 1
      %v2884 = vrot.slane %v2593, 1
      %v2885 = vsel %vm2367, %v2883, %v2884
      %v2886 = vrot.slane %v2866, 1
      %v2887 = vrot.slane %v2594, 1
      %v2888 = vsel %vm2367, %v2886, %v2887
      %v2889 = vrot.slane %v2867, 1
      %v2890 = vrot.slane %v2595, 1
      %v2891 = vsel %vm2367, %v2889, %v2890
      %v2892 = vrot.slane %v2868, 1
      %v2893 = vrot.slane %v2596, 1
      %v2894 = vsel %vm2367, %v2892, %v2893
      %v2895 = vrot.slane %v2869, 1
      %v2896 = vrot.slane %v2597, 1
      %v2897 = vsel %vm2367, %v2895, %v2896
      %v2898 = vrot.slane %v2870, 1
      %v2899 = vrot.slane %v2598, 1
      %v2900 = vsel %vm2367, %v2898, %v2899
      %v2901 = vrot.slane %v2871, 1
      %v2902 = vrot.slane %v2599, 1
      %v2903 = vsel %vm2367, %v2901, %v2902
      %v2904 = vrot.slane %v2872, 1
      %v2905 = vrot.slane %v2600, 1
      %v2906 = vsel %vm2367, %v2904, %v2905
      %v2907 = vrot.slane %v2873, 1
      %v2908 = vrot.slane %v2601, 1
      %v2909 = vsel %vm2367, %v2907, %v2908
      %v2910 = vrot.slane %v2874, 1
      %v2911 = vrot.slane %v2602, 1
      %v2912 = vsel %vm2367, %v2910, %v2911
      %v2913 = vrot.slane %v2875, 1
      %v2914 = vrot.slane %v2603, 1
      %v2915 = vsel %vm2367, %v2913, %v2914
      %v2916 = vrot.slane %v2876, 1
      %v2917 = vrot.slane %v2604, 1
      %v2918 = vsel %vm2367, %v2916, %v2917
      %v2919 = vrot.slane %v2877, 1
      %v2920 = vrot.slane %v2605, 1
      %v2921 = vsel %vm2367, %v2919, %v2920
      %v2922 = vrot.slane %v2878, 1
      %v2923 = vrot.slane %v2606, 1
      %v2924 = vsel %vm2367, %v2922, %v2923
      %v2925 = vrot.slane %v2879, 1
      %v2926 = vrot.slane %v2607, 1
      %v2927 = vsel %vm2367, %v2925, %v2926
      %2928 = vrot.lane.b32.xlu0 %v2882, 20
      %v2929 = vpop.permute.xlu0 %2928
      %2930 = vrot.lane.b32.xlu0 %v2885, 20
      %v2931 = vpop.permute.xlu0 %2930
      %2932 = vrot.lane.b32.xlu0 %v2888, 20
      %v2933 = vpop.permute.xlu0 %2932
      %2934 = vrot.lane.b32.xlu0 %v2891, 20
      %v2935 = vpop.permute.xlu0 %2934
      %2936 = vrot.lane.b32.xlu0 %v2894, 20
      %v2937 = vpop.permute.xlu0 %2936
      %2938 = vrot.lane.b32.xlu0 %v2897, 20
      %v2939 = vpop.permute.xlu0 %2938
      %2940 = vrot.lane.b32.xlu0 %v2900, 20
      %v2941 = vpop.permute.xlu0 %2940
      %2942 = vrot.lane.b32.xlu0 %v2903, 20
      %v2943 = vpop.permute.xlu0 %2942
      %2944 = vrot.lane.b32.xlu0 %v2906, 20
      %v2945 = vpop.permute.xlu0 %2944
      %2946 = vrot.lane.b32.xlu0 %v2909, 20
      %v2947 = vpop.permute.xlu0 %2946
      %2948 = vrot.lane.b32.xlu0 %v2912, 20
      %v2949 = vpop.permute.xlu0 %2948
      %2950 = vrot.lane.b32.xlu0 %v2915, 20
      %v2951 = vpop.permute.xlu0 %2950
      %2952 = vrot.lane.b32.xlu0 %v2918, 20
      %v2953 = vpop.permute.xlu0 %2952
      %2954 = vrot.lane.b32.xlu0 %v2921, 20
      %v2955 = vpop.permute.xlu0 %2954
      %2956 = vrot.lane.b32.xlu0 %v2924, 20
      %v2957 = vpop.permute.xlu0 %2956
      %2958 = vrot.lane.b32.xlu0 %v2927, 20
      %v2959 = vpop.permute.xlu0 %2958
      %v2992 = vunpack.c.l.b16 %v1902
      %v2993 = vunpack.c.l.b16 %v1903
      %v2994 = vunpack.c.l.b16 %v1904
      %v2995 = vunpack.c.l.b16 %v1905
      %v2996 = vunpack.c.l.b16 %v1906
      %v2997 = vunpack.c.l.b16 %v1907
      %v2998 = vunpack.c.l.b16 %v1908
      %v2999 = vunpack.c.l.b16 %v1909
      %v3000 = vunpack.c.l.b16 %v1910
      %v3001 = vunpack.c.l.b16 %v1911
      %v3002 = vunpack.c.l.b16 %v1912
      %v3003 = vunpack.c.l.b16 %v1913
      %v3004 = vunpack.c.l.b16 %v1914
      %v3005 = vunpack.c.l.b16 %v1915
      %v3006 = vunpack.c.l.b16 %v1916
      %v3007 = vunpack.c.l.b16 %v1917
      %v3008 = vunpack.c.l.b16 %v1918
      %v3009 = vunpack.c.l.b16 %v1919
      %v3010 = vunpack.c.l.b16 %v1920
      %v3011 = vunpack.c.l.b16 %v1921
      %v3012 = vunpack.c.l.b16 %v1922
      %v3013 = vunpack.c.l.b16 %v1923
      %v3014 = vunpack.c.l.b16 %v1924
      %v3015 = vunpack.c.l.b16 %v1925
      %v3016 = vunpack.c.l.b16 %v1926
      %v3017 = vunpack.c.l.b16 %v1927
      %v3018 = vunpack.c.l.b16 %v1928
      %v3019 = vunpack.c.l.b16 %v1929
      %v3020 = vunpack.c.l.b16 %v1930
      %v3021 = vunpack.c.l.b16 %v1931
      %v3022 = vunpack.c.l.b16 %v1932
      %v3023 = vunpack.c.l.b16 %v1933
      %v3024 = vpack.c.b16 %v2993, %v2992
      %v3025 = vpack.c.b16 %v2995, %v2994
      %v3026 = vpack.c.b16 %v2997, %v2996
      %v3027 = vpack.c.b16 %v2999, %v2998
      %v3028 = vpack.c.b16 %v3001, %v3000
      %v3029 = vpack.c.b16 %v3003, %v3002
      %v3030 = vpack.c.b16 %v3005, %v3004
      %v3031 = vpack.c.b16 %v3007, %v3006
      %v3032 = vpack.c.b16 %v3009, %v3008
      %v3033 = vpack.c.b16 %v3011, %v3010
      %v3034 = vpack.c.b16 %v3013, %v3012
      %v3035 = vpack.c.b16 %v3015, %v3014
      %v3036 = vpack.c.b16 %v3017, %v3016
      %v3037 = vpack.c.b16 %v3019, %v3018
      %v3038 = vpack.c.b16 %v3021, %v3020
      %v3039 = vpack.c.b16 %v3023, %v3022
      %3040 = vrot.lane.b32.xlu0 %v3024, 24
      %v3041 = vpop.permute.xlu0 %3040
      %3042 = vrot.lane.b32.xlu0 %v3025, 24
      %v3043 = vpop.permute.xlu0 %3042
      %3044 = vrot.lane.b32.xlu0 %v3026, 24
      %v3045 = vpop.permute.xlu0 %3044
      %3046 = vrot.lane.b32.xlu0 %v3027, 24
      %v3047 = vpop.permute.xlu0 %3046
      %3048 = vrot.lane.b32.xlu0 %v3028, 24
      %v3049 = vpop.permute.xlu0 %3048
      %3050 = vrot.lane.b32.xlu0 %v3029, 24
      %v3051 = vpop.permute.xlu0 %3050
      %3052 = vrot.lane.b32.xlu0 %v3030, 24
      %v3053 = vpop.permute.xlu0 %3052
      %3054 = vrot.lane.b32.xlu0 %v3031, 24
      %v3055 = vpop.permute.xlu0 %3054
      %3056 = vrot.lane.b32.xlu0 %v3032, 24
      %v3057 = vpop.permute.xlu0 %3056
      %3058 = vrot.lane.b32.xlu0 %v3033, 24
      %v3059 = vpop.permute.xlu0 %3058
      %3060 = vrot.lane.b32.xlu0 %v3034, 24
      %v3061 = vpop.permute.xlu0 %3060
      %3062 = vrot.lane.b32.xlu0 %v3035, 24
      %v3063 = vpop.permute.xlu0 %3062
      %3064 = vrot.lane.b32.xlu0 %v3036, 24
      %v3065 = vpop.permute.xlu0 %3064
      %3066 = vrot.lane.b32.xlu0 %v3037, 24
      %v3067 = vpop.permute.xlu0 %3066
      %3068 = vrot.lane.b32.xlu0 %v3038, 24
      %v3069 = vpop.permute.xlu0 %3068
      %3070 = vrot.lane.b32.xlu0 %v3039, 24
      %v3071 = vpop.permute.xlu0 %3070
      %v3088 = vunpack.c.l.b16 %v1934
      %v3089 = vunpack.c.l.b16 %v1935
      %v3090 = vunpack.c.l.b16 %v1936
      %v3091 = vunpack.c.l.b16 %v1937
      %v3092 = vunpack.c.l.b16 %v1938
      %v3093 = vunpack.c.l.b16 %v1939
      %v3094 = vunpack.c.l.b16 %v1940
      %v3095 = vunpack.c.l.b16 %v1941
      %v3096 = vunpack.c.l.b16 %v1942
      %v3097 = vunpack.c.l.b16 %v1943
      %v3098 = vunpack.c.l.b16 %v1944
      %v3099 = vunpack.c.l.b16 %v1945
      %v3100 = vunpack.c.l.b16 %v1946
      %v3101 = vunpack.c.l.b16 %v1947
      %v3102 = vunpack.c.l.b16 %v1948
      %v3103 = vunpack.c.l.b16 %v1949
      %v3104 = vpack.c.b16 %v3088, %v3088
      %v3105 = vpack.c.b16 %v3089, %v3089
      %v3106 = vpack.c.b16 %v3090, %v3090
      %v3107 = vpack.c.b16 %v3091, %v3091
      %v3108 = vpack.c.b16 %v3092, %v3092
      %v3109 = vpack.c.b16 %v3093, %v3093
      %v3110 = vpack.c.b16 %v3094, %v3094
      %v3111 = vpack.c.b16 %v3095, %v3095
      %v3112 = vpack.c.b16 %v3096, %v3096
      %v3113 = vpack.c.b16 %v3097, %v3097
      %v3114 = vpack.c.b16 %v3098, %v3098
      %v3115 = vpack.c.b16 %v3099, %v3099
      %v3116 = vpack.c.b16 %v3100, %v3100
      %v3117 = vpack.c.b16 %v3101, %v3101
      %v3118 = vpack.c.b16 %v3102, %v3102
      %v3119 = vpack.c.b16 %v3103, %v3103
      %v3121 = vshrl.u32 %v3024, 16
      %v3123 = vshll.u32 %v3024, 16
      %v3125 = vrot.slane %v3123, 1
      %v3126 = vor.u32 %v3121, %v3125
      %v3128 = vshll.u32 %v3104, 16
      %v3130 = vrot.slane %v3128, 1
      %v3131 = vsel %vm2094, %v3126, %v3130
      %v3133 = vshrl.u32 %v3025, 16
      %v3135 = vshll.u32 %v3025, 16
      %v3137 = vrot.slane %v3135, 1
      %v3138 = vor.u32 %v3133, %v3137
      %v3140 = vshll.u32 %v3105, 16
      %v3142 = vrot.slane %v3140, 1
      %v3143 = vsel %vm2094, %v3138, %v3142
      %v3145 = vshrl.u32 %v3026, 16
      %v3147 = vshll.u32 %v3026, 16
      %v3149 = vrot.slane %v3147, 1
      %v3150 = vor.u32 %v3145, %v3149
      %v3152 = vshll.u32 %v3106, 16
      %v3154 = vrot.slane %v3152, 1
      %v3155 = vsel %vm2094, %v3150, %v3154
      %v3157 = vshrl.u32 %v3027, 16
      %v3159 = vshll.u32 %v3027, 16
      %v3161 = vrot.slane %v3159, 1
      %v3162 = vor.u32 %v3157, %v3161
      %v3164 = vshll.u32 %v3107, 16
      %v3166 = vrot.slane %v3164, 1
      %v3167 = vsel %vm2094, %v3162, %v3166
      %v3169 = vshrl.u32 %v3028, 16
      %v3171 = vshll.u32 %v3028, 16
      %v3173 = vrot.slane %v3171, 1
      %v3174 = vor.u32 %v3169, %v3173
      %v3176 = vshll.u32 %v3108, 16
      %v3178 = vrot.slane %v3176, 1
      %v3179 = vsel %vm2094, %v3174, %v3178
      %v3181 = vshrl.u32 %v3029, 16
      %v3183 = vshll.u32 %v3029, 16
      %v3185 = vrot.slane %v3183, 1
      %v3186 = vor.u32 %v3181, %v3185
      %v3188 = vshll.u32 %v3109, 16
      %v3190 = vrot.slane %v3188, 1
      %v3191 = vsel %vm2094, %v3186, %v3190
      %v3193 = vshrl.u32 %v3030, 16
      %v3195 = vshll.u32 %v3030, 16
      %v3197 = vrot.slane %v3195, 1
      %v3198 = vor.u32 %v3193, %v3197
      %v3200 = vshll.u32 %v3110, 16
      %v3202 = vrot.slane %v3200, 1
      %v3203 = vsel %vm2094, %v3198, %v3202
      %v3205 = vshrl.u32 %v3031, 16
      %v3207 = vshll.u32 %v3031, 16
      %v3209 = vrot.slane %v3207, 1
      %v3210 = vor.u32 %v3205, %v3209
      %v3212 = vshll.u32 %v3111, 16
      %v3214 = vrot.slane %v3212, 1
      %v3215 = vsel %vm2094, %v3210, %v3214
      %v3217 = vshrl.u32 %v3032, 16
      %v3219 = vshll.u32 %v3032, 16
      %v3221 = vrot.slane %v3219, 1
      %v3222 = vor.u32 %v3217, %v3221
      %v3224 = vshll.u32 %v3112, 16
      %v3226 = vrot.slane %v3224, 1
      %v3227 = vsel %vm2094, %v3222, %v3226
      %v3229 = vshrl.u32 %v3033, 16
      %v3231 = vshll.u32 %v3033, 16
      %v3233 = vrot.slane %v3231, 1
      %v3234 = vor.u32 %v3229, %v3233
      %v3236 = vshll.u32 %v3113, 16
      %v3238 = vrot.slane %v3236, 1
      %v3239 = vsel %vm2094, %v3234, %v3238
      %v3241 = vshrl.u32 %v3034, 16
      %v3243 = vshll.u32 %v3034, 16
      %v3245 = vrot.slane %v3243, 1
      %v3246 = vor.u32 %v3241, %v3245
      %v3248 = vshll.u32 %v3114, 16
      %v3250 = vrot.slane %v3248, 1
      %v3251 = vsel %vm2094, %v3246, %v3250
      %v3253 = vshrl.u32 %v3035, 16
      %v3255 = vshll.u32 %v3035, 16
      %v3257 = vrot.slane %v3255, 1
      %v3258 = vor.u32 %v3253, %v3257
      %v3260 = vshll.u32 %v3115, 16
      %v3262 = vrot.slane %v3260, 1
      %v3263 = vsel %vm2094, %v3258, %v3262
      %v3265 = vshrl.u32 %v3036, 16
      %v3267 = vshll.u32 %v3036, 16
      %v3269 = vrot.slane %v3267, 1
      %v3270 = vor.u32 %v3265, %v3269
      %v3272 = vshll.u32 %v3116, 16
      %v3274 = vrot.slane %v3272, 1
      %v3275 = vsel %vm2094, %v3270, %v3274
      %v3277 = vshrl.u32 %v3037, 16
      %v3279 = vshll.u32 %v3037, 16
      %v3281 = vrot.slane %v3279, 1
      %v3282 = vor.u32 %v3277, %v3281
      %v3284 = vshll.u32 %v3117, 16
      %v3286 = vrot.slane %v3284, 1
      %v3287 = vsel %vm2094, %v3282, %v3286
      %v3289 = vshrl.u32 %v3038, 16
      %v3291 = vshll.u32 %v3038, 16
      %v3293 = vrot.slane %v3291, 1
      %v3294 = vor.u32 %v3289, %v3293
      %v3296 = vshll.u32 %v3118, 16
      %v3298 = vrot.slane %v3296, 1
      %v3299 = vsel %vm2094, %v3294, %v3298
      %v3301 = vshrl.u32 %v3039, 16
      %v3303 = vshll.u32 %v3039, 16
      %v3305 = vrot.slane %v3303, 1
      %v3306 = vor.u32 %v3301, %v3305
      %v3308 = vshll.u32 %v3119, 16
      %v3310 = vrot.slane %v3308, 1
      %v3311 = vsel %vm2094, %v3306, %v3310
      %3312 = vrot.lane.b32.xlu0 %v3131, 28
      %v3313 = vpop.permute.xlu0 %3312
      %3314 = vrot.lane.b32.xlu0 %v3143, 28
      %v3315 = vpop.permute.xlu0 %3314
      %3316 = vrot.lane.b32.xlu0 %v3155, 28
      %v3317 = vpop.permute.xlu0 %3316
      %3318 = vrot.lane.b32.xlu0 %v3167, 28
      %v3319 = vpop.permute.xlu0 %3318
      %3320 = vrot.lane.b32.xlu0 %v3179, 28
      %v3321 = vpop.permute.xlu0 %3320
      %3322 = vrot.lane.b32.xlu0 %v3191, 28
      %v3323 = vpop.permute.xlu0 %3322
      %3324 = vrot.lane.b32.xlu0 %v3203, 28
      %v3325 = vpop.permute.xlu0 %3324
      %3326 = vrot.lane.b32.xlu0 %v3215, 28
      %v3327 = vpop.permute.xlu0 %3326
      %3328 = vrot.lane.b32.xlu0 %v3227, 28
      %v3329 = vpop.permute.xlu0 %3328
      %3330 = vrot.lane.b32.xlu0 %v3239, 28
      %v3331 = vpop.permute.xlu0 %3330
      %3332 = vrot.lane.b32.xlu0 %v3251, 28
      %v3333 = vpop.permute.xlu0 %3332
      %3334 = vrot.lane.b32.xlu0 %v3263, 28
      %v3335 = vpop.permute.xlu0 %3334
      %3336 = vrot.lane.b32.xlu0 %v3275, 28
      %v3337 = vpop.permute.xlu0 %3336
      %3338 = vrot.lane.b32.xlu0 %v3287, 28
      %v3339 = vpop.permute.xlu0 %3338
      %3340 = vrot.lane.b32.xlu0 %v3299, 28
      %v3341 = vpop.permute.xlu0 %3340
      %3342 = vrot.lane.b32.xlu0 %v3311, 28
      %v3343 = vpop.permute.xlu0 %3342
      %v3360 = vunpack.c.l.b16 %v1950
      %v3361 = vunpack.c.l.b16 %v1951
      %v3362 = vunpack.c.l.b16 %v1952
      %v3363 = vunpack.c.l.b16 %v1953
      %v3364 = vunpack.c.l.b16 %v1954
      %v3365 = vunpack.c.l.b16 %v1955
      %v3366 = vunpack.c.l.b16 %v1956
      %v3367 = vunpack.c.l.b16 %v1957
      %v3368 = vunpack.c.l.b16 %v1958
      %v3369 = vunpack.c.l.b16 %v1959
      %v3370 = vunpack.c.l.b16 %v1960
      %v3371 = vunpack.c.l.b16 %v1961
      %v3372 = vunpack.c.l.b16 %v1962
      %v3373 = vunpack.c.l.b16 %v1963
      %v3374 = vunpack.c.l.b16 %v1964
      %v3375 = vunpack.c.l.b16 %v1965
      %v3376 = vpack.c.b16 %v2993, %v3360
      %v3377 = vpack.c.b16 %v2995, %v3361
      %v3378 = vpack.c.b16 %v2997, %v3362
      %v3379 = vpack.c.b16 %v2999, %v3363
      %v3380 = vpack.c.b16 %v3001, %v3364
      %v3381 = vpack.c.b16 %v3003, %v3365
      %v3382 = vpack.c.b16 %v3005, %v3366
      %v3383 = vpack.c.b16 %v3007, %v3367
      %v3384 = vpack.c.b16 %v3009, %v3368
      %v3385 = vpack.c.b16 %v3011, %v3369
      %v3386 = vpack.c.b16 %v3013, %v3370
      %v3387 = vpack.c.b16 %v3015, %v3371
      %v3388 = vpack.c.b16 %v3017, %v3372
      %v3389 = vpack.c.b16 %v3019, %v3373
      %v3390 = vpack.c.b16 %v3021, %v3374
      %v3391 = vpack.c.b16 %v3023, %v3375
      %v3392 = vrot.slane %v3376, 1
      %v3393 = vrot.slane %v3104, 1
      %v3394 = vsel %vm2367, %v3392, %v3393
      %v3395 = vrot.slane %v3377, 1
      %v3396 = vrot.slane %v3105, 1
      %v3397 = vsel %vm2367, %v3395, %v3396
      %v3398 = vrot.slane %v3378, 1
      %v3399 = vrot.slane %v3106, 1
      %v3400 = vsel %vm2367, %v3398, %v3399
      %v3401 = vrot.slane %v3379, 1
      %v3402 = vrot.slane %v3107, 1
      %v3403 = vsel %vm2367, %v3401, %v3402
      %v3404 = vrot.slane %v3380, 1
      %v3405 = vrot.slane %v3108, 1
      %v3406 = vsel %vm2367, %v3404, %v3405
      %v3407 = vrot.slane %v3381, 1
      %v3408 = vrot.slane %v3109, 1
      %v3409 = vsel %vm2367, %v3407, %v3408
      %v3410 = vrot.slane %v3382, 1
      %v3411 = vrot.slane %v3110, 1
      %v3412 = vsel %vm2367, %v3410, %v3411
      %v3413 = vrot.slane %v3383, 1
      %v3414 = vrot.slane %v3111, 1
      %v3415 = vsel %vm2367, %v3413, %v3414
      %v3416 = vrot.slane %v3384, 1
      %v3417 = vrot.slane %v3112, 1
      %v3418 = vsel %vm2367, %v3416, %v3417
      %v3419 = vrot.slane %v3385, 1
      %v3420 = vrot.slane %v3113, 1
      %v3421 = vsel %vm2367, %v3419, %v3420
      %v3422 = vrot.slane %v3386, 1
      %v3423 = vrot.slane %v3114, 1
      %v3424 = vsel %vm2367, %v3422, %v3423
      %v3425 = vrot.slane %v3387, 1
      %v3426 = vrot.slane %v3115, 1
      %v3427 = vsel %vm2367, %v3425, %v3426
      %v3428 = vrot.slane %v3388, 1
      %v3429 = vrot.slane %v3116, 1
      %v3430 = vsel %vm2367, %v3428, %v3429
      %v3431 = vrot.slane %v3389, 1
      %v3432 = vrot.slane %v3117, 1
      %v3433 = vsel %vm2367, %v3431, %v3432
      %v3434 = vrot.slane %v3390, 1
      %v3435 = vrot.slane %v3118, 1
      %v3436 = vsel %vm2367, %v3434, %v3435
      %v3437 = vrot.slane %v3391, 1
      %v3438 = vrot.slane %v3119, 1
      %v3439 = vsel %vm2367, %v3437, %v3438
      %3440 = vrot.lane.b32.xlu0 %v3394, 32
      %v3441 = vpop.permute.xlu0 %3440
      %3442 = vrot.lane.b32.xlu0 %v3397, 32
      %v3443 = vpop.permute.xlu0 %3442
      %3444 = vrot.lane.b32.xlu0 %v3400, 32
      %v3445 = vpop.permute.xlu0 %3444
      %3446 = vrot.lane.b32.xlu0 %v3403, 32
      %v3447 = vpop.permute.xlu0 %3446
      %3448 = vrot.lane.b32.xlu0 %v3406, 32
      %v3449 = vpop.permute.xlu0 %3448
      %3450 = vrot.lane.b32.xlu0 %v3409, 32
      %v3451 = vpop.permute.xlu0 %3450
      %3452 = vrot.lane.b32.xlu0 %v3412, 32
      %v3453 = vpop.permute.xlu0 %3452
      %3454 = vrot.lane.b32.xlu0 %v3415, 32
      %v3455 = vpop.permute.xlu0 %3454
      %3456 = vrot.lane.b32.xlu0 %v3418, 32
      %v3457 = vpop.permute.xlu0 %3456
      %3458 = vrot.lane.b32.xlu0 %v3421, 32
      %v3459 = vpop.permute.xlu0 %3458
      %3460 = vrot.lane.b32.xlu0 %v3424, 32
      %v3461 = vpop.permute.xlu0 %3460
      %3462 = vrot.lane.b32.xlu0 %v3427, 32
      %v3463 = vpop.permute.xlu0 %3462
      %3464 = vrot.lane.b32.xlu0 %v3430, 32
      %v3465 = vpop.permute.xlu0 %3464
      %3466 = vrot.lane.b32.xlu0 %v3433, 32
      %v3467 = vpop.permute.xlu0 %3466
      %3468 = vrot.lane.b32.xlu0 %v3436, 32
      %v3469 = vpop.permute.xlu0 %3468
      %3470 = vrot.lane.b32.xlu0 %v3439, 32
      %v3471 = vpop.permute.xlu0 %3470
      %v3473 = vsel %vm1420, %v2030, %v2288
      %v3475 = vsel %vm1420, %v2031, %v2290
      %v3477 = vsel %vm1420, %v2032, %v2292
      %v3479 = vsel %vm1420, %v2033, %v2294
      %v3481 = vsel %vm1420, %v2034, %v2296
      %v3483 = vsel %vm1420, %v2035, %v2298
      %v3485 = vsel %vm1420, %v2036, %v2300
      %v3487 = vsel %vm1420, %v2037, %v2302
      %v3489 = vsel %vm1420, %v2038, %v2304
      %v3491 = vsel %vm1420, %v2039, %v2306
      %v3493 = vsel %vm1420, %v2040, %v2308
      %v3495 = vsel %vm1420, %v2041, %v2310
      %v3497 = vsel %vm1420, %v2042, %v2312
      %v3499 = vsel %vm1420, %v2043, %v2314
      %v3501 = vsel %vm1420, %v2044, %v2316
      %v3503 = vsel %vm1420, %v2045, %v2318
      %vm3504 = vcmask 64512
      %v3506 = vsel %vm3504, %v3473, %v2417
      %v3508 = vsel %vm3504, %v3475, %v2419
      %v3510 = vsel %vm3504, %v3477, %v2421
      %v3512 = vsel %vm3504, %v3479, %v2423
      %v3514 = vsel %vm3504, %v3481, %v2425
      %v3516 = vsel %vm3504, %v3483, %v2427
      %v3518 = vsel %vm3504, %v3485, %v2429
      %v3520 = vsel %vm3504, %v3487, %v2431
      %v3522 = vsel %vm3504, %v3489, %v2433
      %v3524 = vsel %vm3504, %v3491, %v2435
      %v3526 = vsel %vm3504, %v3493, %v2437
      %v3528 = vsel %vm3504, %v3495, %v2439
      %v3530 = vsel %vm3504, %v3497, %v2441
      %v3532 = vsel %vm3504, %v3499, %v2443
      %v3534 = vsel %vm3504, %v3501, %v2445
      %v3536 = vsel %vm3504, %v3503, %v2447
      %vm3537 = vcmask 97280
      %v3539 = vsel %vm3537, %v3506, %v2529
      %v3541 = vsel %vm3537, %v3508, %v2531
      %v3543 = vsel %vm3537, %v3510, %v2533
      %v3545 = vsel %vm3537, %v3512, %v2535
      %v3547 = vsel %vm3537, %v3514, %v2537
      %v3549 = vsel %vm3537, %v3516, %v2539
      %v3551 = vsel %vm3537, %v3518, %v2541
      %v3553 = vsel %vm3537, %v3520, %v2543
      %v3555 = vsel %vm3537, %v3522, %v2545
      %v3557 = vsel %vm3537, %v3524, %v2547
      %v3559 = vsel %vm3537, %v3526, %v2549
      %v3561 = vsel %vm3537, %v3528, %v2551
      %v3563 = vsel %vm3537, %v3530, %v2553
      %v3565 = vsel %vm3537, %v3532, %v2555
      %v3567 = vsel %vm3537, %v3534, %v2557
      %v3569 = vsel %vm3537, %v3536, %v2559
      %vm3570 = vcmask 130048
      %v3572 = vsel %vm3570, %v3539, %v2801
      %v3574 = vsel %vm3570, %v3541, %v2803
      %v3576 = vsel %vm3570, %v3543, %v2805
      %v3578 = vsel %vm3570, %v3545, %v2807
      %v3580 = vsel %vm3570, %v3547, %v2809
      %v3582 = vsel %vm3570, %v3549, %v2811
      %v3584 = vsel %vm3570, %v3551, %v2813
      %v3586 = vsel %vm3570, %v3553, %v2815
      %v3588 = vsel %vm3570, %v3555, %v2817
      %v3590 = vsel %vm3570, %v3557, %v2819
      %v3592 = vsel %vm3570, %v3559, %v2821
      %v3594 = vsel %vm3570, %v3561, %v2823
      %v3596 = vsel %vm3570, %v3563, %v2825
      %v3598 = vsel %vm3570, %v3565, %v2827
      %v3600 = vsel %vm3570, %v3567, %v2829
      %v3602 = vsel %vm3570, %v3569, %v2831
      %vm3603 = vcmask 162816
      %v3605 = vsel %vm3603, %v3572, %v2929
      %v3607 = vsel %vm3603, %v3574, %v2931
      %v3609 = vsel %vm3603, %v3576, %v2933
      %v3611 = vsel %vm3603, %v3578, %v2935
      %v3613 = vsel %vm3603, %v3580, %v2937
      %v3615 = vsel %vm3603, %v3582, %v2939
      %v3617 = vsel %vm3603, %v3584, %v2941
      %v3619 = vsel %vm3603, %v3586, %v2943
      %v3621 = vsel %vm3603, %v3588, %v2945
      %v3623 = vsel %vm3603, %v3590, %v2947
      %v3625 = vsel %vm3603, %v3592, %v2949
      %v3627 = vsel %vm3603, %v3594, %v2951
      %v3629 = vsel %vm3603, %v3596, %v2953
      %v3631 = vsel %vm3603, %v3598, %v2955
      %v3633 = vsel %vm3603, %v3600, %v2957
      %v3635 = vsel %vm3603, %v3602, %v2959
      %vm3636 = vcmask 195584
      %v3638 = vsel %vm3636, %v3605, %v3041
      %v3640 = vsel %vm3636, %v3607, %v3043
      %v3642 = vsel %vm3636, %v3609, %v3045
      %v3644 = vsel %vm3636, %v3611, %v3047
      %v3646 = vsel %vm3636, %v3613, %v3049
      %v3648 = vsel %vm3636, %v3615, %v3051
      %v3650 = vsel %vm3636, %v3617, %v3053
      %v3652 = vsel %vm3636, %v3619, %v3055
      %v3654 = vsel %vm3636, %v3621, %v3057
      %v3656 = vsel %vm3636, %v3623, %v3059
      %v3658 = vsel %vm3636, %v3625, %v3061
      %v3660 = vsel %vm3636, %v3627, %v3063
      %v3662 = vsel %vm3636, %v3629, %v3065
      %v3664 = vsel %vm3636, %v3631, %v3067
      %v3666 = vsel %vm3636, %v3633, %v3069
      %v3668 = vsel %vm3636, %v3635, %v3071
      %vm3669 = vcmask 228352
      %v3671 = vsel %vm3669, %v3638, %v3313
      %v3673 = vsel %vm3669, %v3640, %v3315
      %v3675 = vsel %vm3669, %v3642, %v3317
      %v3677 = vsel %vm3669, %v3644, %v3319
      %v3679 = vsel %vm3669, %v3646, %v3321
      %v3681 = vsel %vm3669, %v3648, %v3323
      %v3683 = vsel %vm3669, %v3650, %v3325
      %v3685 = vsel %vm3669, %v3652, %v3327
      %v3687 = vsel %vm3669, %v3654, %v3329
      %v3689 = vsel %vm3669, %v3656, %v3331
      %v3691 = vsel %vm3669, %v3658, %v3333
      %v3693 = vsel %vm3669, %v3660, %v3335
      %v3695 = vsel %vm3669, %v3662, %v3337
      %v3697 = vsel %vm3669, %v3664, %v3339
      %v3699 = vsel %vm3669, %v3666, %v3341
      %v3701 = vsel %vm3669, %v3668, %v3343
      %vm3702 = vcmask 261120
      %v3704 = vsel %vm3702, %v3671, %v3441
      %v3706 = vsel %vm3702, %v3673, %v3443
      %v3708 = vsel %vm3702, %v3675, %v3445
      %v3710 = vsel %vm3702, %v3677, %v3447
      %v3712 = vsel %vm3702, %v3679, %v3449
      %v3714 = vsel %vm3702, %v3681, %v3451
      %v3716 = vsel %vm3702, %v3683, %v3453
      %v3718 = vsel %vm3702, %v3685, %v3455
      %v3720 = vsel %vm3702, %v3687, %v3457
      %v3722 = vsel %vm3702, %v3689, %v3459
      %v3724 = vsel %vm3702, %v3691, %v3461
      %v3726 = vsel %vm3702, %v3693, %v3463
      %v3728 = vsel %vm3702, %v3695, %v3465
      %v3730 = vsel %vm3702, %v3697, %v3467
      %v3732 = vsel %vm3702, %v3699, %v3469
      %v3734 = vsel %vm3702, %v3701, %v3471
      %v3735 = vld [vmem:[#allocation3] sm:$0xf]
      %v3736 = vld [vmem:[#allocation3 + $0x8] sm:$0xf]
      %v3737 = vld [vmem:[#allocation3 + $0x10] sm:$0xf]
      %v3738 = vld [vmem:[#allocation3 + $0x18] sm:$0xf]
      %v3739 = vld [vmem:[#allocation3 + $0x20] sm:$0xf]
      %v3740 = vld [vmem:[#allocation3 + $0x28] sm:$0xf]
      %v3741 = vld [vmem:[#allocation3 + $0x30] sm:$0xf]
      %v3742 = vld [vmem:[#allocation3 + $0x38] sm:$0xf]
      %v3743 = vld [vmem:[#allocation3 + $0x4] sm:$0x1]
      %v3744 = vld [vmem:[#allocation3 + $0xc] sm:$0x1]
      %v3745 = vld [vmem:[#allocation3 + $0x14] sm:$0x1]
      %v3746 = vld [vmem:[#allocation3 + $0x1c] sm:$0x1]
      %v3747 = vld [vmem:[#allocation3 + $0x24] sm:$0x1]
      %v3748 = vld [vmem:[#allocation3 + $0x2c] sm:$0x1]
      %v3749 = vld [vmem:[#allocation3 + $0x34] sm:$0x1]
      %v3750 = vld [vmem:[#allocation3 + $0x3c] sm:$0x1]
      %v3751 = vld [vmem:[#allocation3] sm:$0xe]
      %v3752 = vld [vmem:[#allocation3 + $0x8] sm:$0xe]
      %v3753 = vld [vmem:[#allocation3 + $0x10] sm:$0xe]
      %v3754 = vld [vmem:[#allocation3 + $0x18] sm:$0xe]
      %v3755 = vld [vmem:[#allocation3 + $0x20] sm:$0xe]
      %v3756 = vld [vmem:[#allocation3 + $0x28] sm:$0xe]
      %v3757 = vld [vmem:[#allocation3 + $0x30] sm:$0xe]
      %v3758 = vld [vmem:[#allocation3 + $0x38] sm:$0xe]
      %v3759 = vld [vmem:[%s1616] sm:$0xf]
      %v3760 = vld [vmem:[%s1616 + $0x8] sm:$0xf]
      %v3761 = vld [vmem:[%s1616 + $0x10] sm:$0xf]
      %v3762 = vld [vmem:[%s1616 + $0x18] sm:$0xf]
      %v3763 = vld [vmem:[%s1616 + $0x20] sm:$0xf]
      %v3764 = vld [vmem:[%s1616 + $0x28] sm:$0xf]
      %v3765 = vld [vmem:[%s1616 + $0x30] sm:$0xf]
      %v3766 = vld [vmem:[%s1616 + $0x38] sm:$0xf]
      %v3767 = vld [vmem:[%s1616 + $0x4] sm:$0x1]
      %v3768 = vld [vmem:[%s1616 + $0xc] sm:$0x1]
      %v3769 = vld [vmem:[%s1616 + $0x14] sm:$0x1]
      %v3770 = vld [vmem:[%s1616 + $0x1c] sm:$0x1]
      %v3771 = vld [vmem:[%s1616 + $0x24] sm:$0x1]
      %v3772 = vld [vmem:[%s1616 + $0x2c] sm:$0x1]
      %v3773 = vld [vmem:[%s1616 + $0x34] sm:$0x1]
      %v3774 = vld [vmem:[%s1616 + $0x3c] sm:$0x1]
      %v3775 = vld [vmem:[%s1616] sm:$0xe]
      %v3776 = vld [vmem:[%s1616 + $0x8] sm:$0xe]
      %v3777 = vld [vmem:[%s1616 + $0x10] sm:$0xe]
      %v3778 = vld [vmem:[%s1616 + $0x18] sm:$0xe]
      %v3779 = vld [vmem:[%s1616 + $0x20] sm:$0xe]
      %v3780 = vld [vmem:[%s1616 + $0x28] sm:$0xe]
      %v3781 = vld [vmem:[%s1616 + $0x30] sm:$0xe]
      %v3782 = vld [vmem:[%s1616 + $0x38] sm:$0xe]
      %s3783 = scalar_lea.vmem [#allocation3], 16
      %v3784 = vld [vmem:[%s3783] sm:$0xf]
      %v3785 = vld [vmem:[%s3783 + $0x8] sm:$0xf]
      %v3786 = vld [vmem:[%s3783 + $0x10] sm:$0xf]
      %v3787 = vld [vmem:[%s3783 + $0x18] sm:$0xf]
      %v3788 = vld [vmem:[%s3783 + $0x20] sm:$0xf]
      %v3789 = vld [vmem:[%s3783 + $0x28] sm:$0xf]
      %v3790 = vld [vmem:[%s3783 + $0x30] sm:$0xf]
      %v3791 = vld [vmem:[%s3783 + $0x38] sm:$0xf]
      %v3792 = vld [vmem:[%s3783 + $0x4] sm:$0x1]
      %v3793 = vld [vmem:[%s3783 + $0xc] sm:$0x1]
      %v3794 = vld [vmem:[%s3783 + $0x14] sm:$0x1]
      %v3795 = vld [vmem:[%s3783 + $0x1c] sm:$0x1]
      %v3796 = vld [vmem:[%s3783 + $0x24] sm:$0x1]
      %v3797 = vld [vmem:[%s3783 + $0x2c] sm:$0x1]
      %v3798 = vld [vmem:[%s3783 + $0x34] sm:$0x1]
      %v3799 = vld [vmem:[%s3783 + $0x3c] sm:$0x1]
      %v3800 = vld [vmem:[%s3783] sm:$0xe]
      %v3801 = vld [vmem:[%s3783 + $0x8] sm:$0xe]
      %v3802 = vld [vmem:[%s3783 + $0x10] sm:$0xe]
      %v3803 = vld [vmem:[%s3783 + $0x18] sm:$0xe]
      %v3804 = vld [vmem:[%s3783 + $0x20] sm:$0xe]
      %v3805 = vld [vmem:[%s3783 + $0x28] sm:$0xe]
      %v3806 = vld [vmem:[%s3783 + $0x30] sm:$0xe]
      %v3807 = vld [vmem:[%s3783 + $0x38] sm:$0xe]
      %v3824 = vunpack.c.l.b16 %v3735
      %v3825 = vunpack.c.l.b16 %v3743
      %v3826 = vunpack.c.l.b16 %v3736
      %v3827 = vunpack.c.l.b16 %v3744
      %v3828 = vunpack.c.l.b16 %v3737
      %v3829 = vunpack.c.l.b16 %v3745
      %v3830 = vunpack.c.l.b16 %v3738
      %v3831 = vunpack.c.l.b16 %v3746
      %v3832 = vunpack.c.l.b16 %v3739
      %v3833 = vunpack.c.l.b16 %v3747
      %v3834 = vunpack.c.l.b16 %v3740
      %v3835 = vunpack.c.l.b16 %v3748
      %v3836 = vunpack.c.l.b16 %v3741
      %v3837 = vunpack.c.l.b16 %v3749
      %v3838 = vunpack.c.l.b16 %v3742
      %v3839 = vunpack.c.l.b16 %v3750
      %v3840 = vpack.c.b16 %v3825, %v3824
      %v3841 = vpack.c.b16 %v3827, %v3826
      %v3842 = vpack.c.b16 %v3829, %v3828
      %v3843 = vpack.c.b16 %v3831, %v3830
      %v3844 = vpack.c.b16 %v3833, %v3832
      %v3845 = vpack.c.b16 %v3835, %v3834
      %v3846 = vpack.c.b16 %v3837, %v3836
      %v3847 = vpack.c.b16 %v3839, %v3838
      %v3849 = vshrl.u32 %v3840, 16
      %v3851 = vshll.u32 %v3840, 16
      %v3853 = vrot.slane %v3851, 1
      %v3854 = vor.u32 %v3849, %v3853
      %v3856 = vshrl.u32 %v3841, 16
      %v3858 = vshll.u32 %v3841, 16
      %v3860 = vrot.slane %v3858, 1
      %v3861 = vor.u32 %v3856, %v3860
      %v3863 = vshrl.u32 %v3842, 16
      %v3865 = vshll.u32 %v3842, 16
      %v3867 = vrot.slane %v3865, 1
      %v3868 = vor.u32 %v3863, %v3867
      %v3870 = vshrl.u32 %v3843, 16
      %v3872 = vshll.u32 %v3843, 16
      %v3874 = vrot.slane %v3872, 1
      %v3875 = vor.u32 %v3870, %v3874
      %v3877 = vshrl.u32 %v3844, 16
      %v3879 = vshll.u32 %v3844, 16
      %v3881 = vrot.slane %v3879, 1
      %v3882 = vor.u32 %v3877, %v3881
      %v3884 = vshrl.u32 %v3845, 16
      %v3886 = vshll.u32 %v3845, 16
      %v3888 = vrot.slane %v3886, 1
      %v3889 = vor.u32 %v3884, %v3888
      %v3891 = vshrl.u32 %v3846, 16
      %v3893 = vshll.u32 %v3846, 16
      %v3895 = vrot.slane %v3893, 1
      %v3896 = vor.u32 %v3891, %v3895
      %v3898 = vshrl.u32 %v3847, 16
      %v3900 = vshll.u32 %v3847, 16
      %v3902 = vrot.slane %v3900, 1
      %v3903 = vor.u32 %v3898, %v3902
      %3904 = vrot.lane.b32.xlu0 %v3854, 4
      %v3905 = vpop.permute.xlu0 %3904
      %3906 = vrot.lane.b32.xlu0 %v3861, 4
      %v3907 = vpop.permute.xlu0 %3906
      %3908 = vrot.lane.b32.xlu0 %v3868, 4
      %v3909 = vpop.permute.xlu0 %3908
      %3910 = vrot.lane.b32.xlu0 %v3875, 4
      %v3911 = vpop.permute.xlu0 %3910
      %3912 = vrot.lane.b32.xlu0 %v3882, 4
      %v3913 = vpop.permute.xlu0 %3912
      %3914 = vrot.lane.b32.xlu0 %v3889, 4
      %v3915 = vpop.permute.xlu0 %3914
      %3916 = vrot.lane.b32.xlu0 %v3896, 4
      %v3917 = vpop.permute.xlu0 %3916
      %3918 = vrot.lane.b32.xlu0 %v3903, 4
      %v3919 = vpop.permute.xlu0 %3918
      %v3928 = vunpack.c.l.b16 %v3751
      %v3929 = vunpack.c.l.b16 %v3752
      %v3930 = vunpack.c.l.b16 %v3753
      %v3931 = vunpack.c.l.b16 %v3754
      %v3932 = vunpack.c.l.b16 %v3755
      %v3933 = vunpack.c.l.b16 %v3756
      %v3934 = vunpack.c.l.b16 %v3757
      %v3935 = vunpack.c.l.b16 %v3758
      %v3936 = vpack.c.b16 %v3825, %v3928
      %v3937 = vpack.c.b16 %v3827, %v3929
      %v3938 = vpack.c.b16 %v3829, %v3930
      %v3939 = vpack.c.b16 %v3831, %v3931
      %v3940 = vpack.c.b16 %v3833, %v3932
      %v3941 = vpack.c.b16 %v3835, %v3933
      %v3942 = vpack.c.b16 %v3837, %v3934
      %v3943 = vpack.c.b16 %v3839, %v3935
      %v3944 = vrot.slane %v3936, 1
      %v3945 = vrot.slane %v3937, 1
      %v3946 = vrot.slane %v3938, 1
      %v3947 = vrot.slane %v3939, 1
      %v3948 = vrot.slane %v3940, 1
      %v3949 = vrot.slane %v3941, 1
      %v3950 = vrot.slane %v3942, 1
      %v3951 = vrot.slane %v3943, 1
      %3952 = vrot.lane.b32.xlu0 %v3944, 8
      %v3953 = vpop.permute.xlu0 %3952
      %3954 = vrot.lane.b32.xlu0 %v3945, 8
      %v3955 = vpop.permute.xlu0 %3954
      %3956 = vrot.lane.b32.xlu0 %v3946, 8
      %v3957 = vpop.permute.xlu0 %3956
      %3958 = vrot.lane.b32.xlu0 %v3947, 8
      %v3959 = vpop.permute.xlu0 %3958
      %3960 = vrot.lane.b32.xlu0 %v3948, 8
      %v3961 = vpop.permute.xlu0 %3960
      %3962 = vrot.lane.b32.xlu0 %v3949, 8
      %v3963 = vpop.permute.xlu0 %3962
      %3964 = vrot.lane.b32.xlu0 %v3950, 8
      %v3965 = vpop.permute.xlu0 %3964
      %3966 = vrot.lane.b32.xlu0 %v3951, 8
      %v3967 = vpop.permute.xlu0 %3966
      %v3976 = vunpack.c.l.b16 %v3759
      %v3977 = vunpack.c.l.b16 %v3760
      %v3978 = vunpack.c.l.b16 %v3761
      %v3979 = vunpack.c.l.b16 %v3762
      %v3980 = vunpack.c.l.b16 %v3763
      %v3981 = vunpack.c.l.b16 %v3764
      %v3982 = vunpack.c.l.b16 %v3765
      %v3983 = vunpack.c.l.b16 %v3766
      %v3984 = vpack.c.b16 %v3976, %v3976
      %v3985 = vpack.c.b16 %v3977, %v3977
      %v3986 = vpack.c.b16 %v3978, %v3978
      %v3987 = vpack.c.b16 %v3979, %v3979
      %v3988 = vpack.c.b16 %v3980, %v3980
      %v3989 = vpack.c.b16 %v3981, %v3981
      %v3990 = vpack.c.b16 %v3982, %v3982
      %v3991 = vpack.c.b16 %v3983, %v3983
      %3992 = vrot.lane.b32.xlu0 %v3984, 12
      %v3993 = vpop.permute.xlu0 %3992
      %3994 = vrot.lane.b32.xlu0 %v3985, 12
      %v3995 = vpop.permute.xlu0 %3994
      %3996 = vrot.lane.b32.xlu0 %v3986, 12
      %v3997 = vpop.permute.xlu0 %3996
      %3998 = vrot.lane.b32.xlu0 %v3987, 12
      %v3999 = vpop.permute.xlu0 %3998
      %4000 = vrot.lane.b32.xlu0 %v3988, 12
      %v4001 = vpop.permute.xlu0 %4000
      %4002 = vrot.lane.b32.xlu0 %v3989, 12
      %v4003 = vpop.permute.xlu0 %4002
      %4004 = vrot.lane.b32.xlu0 %v3990, 12
      %v4005 = vpop.permute.xlu0 %4004
      %4006 = vrot.lane.b32.xlu0 %v3991, 12
      %v4007 = vpop.permute.xlu0 %4006
      %v4016 = vunpack.c.l.b16 %v3767
      %v4017 = vunpack.c.l.b16 %v3768
      %v4018 = vunpack.c.l.b16 %v3769
      %v4019 = vunpack.c.l.b16 %v3770
      %v4020 = vunpack.c.l.b16 %v3771
      %v4021 = vunpack.c.l.b16 %v3772
      %v4022 = vunpack.c.l.b16 %v3773
      %v4023 = vunpack.c.l.b16 %v3774
      %v4024 = vpack.c.b16 %v4016, %v3976
      %v4025 = vpack.c.b16 %v4017, %v3977
      %v4026 = vpack.c.b16 %v4018, %v3978
      %v4027 = vpack.c.b16 %v4019, %v3979
      %v4028 = vpack.c.b16 %v4020, %v3980
      %v4029 = vpack.c.b16 %v4021, %v3981
      %v4030 = vpack.c.b16 %v4022, %v3982
      %v4031 = vpack.c.b16 %v4023, %v3983
      %v4033 = vshrl.u32 %v4024, 16
      %v4035 = vshll.u32 %v4024, 16
      %v4037 = vrot.slane %v4035, 1
      %v4038 = vor.u32 %v4033, %v4037
      %v4040 = vshrl.u32 %v4025, 16
      %v4042 = vshll.u32 %v4025, 16
      %v4044 = vrot.slane %v4042, 1
      %v4045 = vor.u32 %v4040, %v4044
      %v4047 = vshrl.u32 %v4026, 16
      %v4049 = vshll.u32 %v4026, 16
      %v4051 = vrot.slane %v4049, 1
      %v4052 = vor.u32 %v4047, %v4051
      %v4054 = vshrl.u32 %v4027, 16
      %v4056 = vshll.u32 %v4027, 16
      %v4058 = vrot.slane %v4056, 1
      %v4059 = vor.u32 %v4054, %v4058
      %v4061 = vshrl.u32 %v4028, 16
      %v4063 = vshll.u32 %v4028, 16
      %v4065 = vrot.slane %v4063, 1
      %v4066 = vor.u32 %v4061, %v4065
      %v4068 = vshrl.u32 %v4029, 16
      %v4070 = vshll.u32 %v4029, 16
      %v4072 = vrot.slane %v4070, 1
      %v4073 = vor.u32 %v4068, %v4072
      %v4075 = vshrl.u32 %v4030, 16
      %v4077 = vshll.u32 %v4030, 16
      %v4079 = vrot.slane %v4077, 1
      %v4080 = vor.u32 %v4075, %v4079
      %v4082 = vshrl.u32 %v4031, 16
      %v4084 = vshll.u32 %v4031, 16
      %v4086 = vrot.slane %v4084, 1
      %v4087 = vor.u32 %v4082, %v4086
      %4088 = vrot.lane.b32.xlu0 %v4038, 16
      %v4089 = vpop.permute.xlu0 %4088
      %4090 = vrot.lane.b32.xlu0 %v4045, 16
      %v4091 = vpop.permute.xlu0 %4090
      %4092 = vrot.lane.b32.xlu0 %v4052, 16
      %v4093 = vpop.permute.xlu0 %4092
      %4094 = vrot.lane.b32.xlu0 %v4059, 16
      %v4095 = vpop.permute.xlu0 %4094
      %4096 = vrot.lane.b32.xlu0 %v4066, 16
      %v4097 = vpop.permute.xlu0 %4096
      %4098 = vrot.lane.b32.xlu0 %v4073, 16
      %v4099 = vpop.permute.xlu0 %4098
      %4100 = vrot.lane.b32.xlu0 %v4080, 16
      %v4101 = vpop.permute.xlu0 %4100
      %4102 = vrot.lane.b32.xlu0 %v4087, 16
      %v4103 = vpop.permute.xlu0 %4102
      %v4112 = vunpack.c.l.b16 %v3775
      %v4113 = vunpack.c.l.b16 %v3776
      %v4114 = vunpack.c.l.b16 %v3777
      %v4115 = vunpack.c.l.b16 %v3778
      %v4116 = vunpack.c.l.b16 %v3779
      %v4117 = vunpack.c.l.b16 %v3780
      %v4118 = vunpack.c.l.b16 %v3781
      %v4119 = vunpack.c.l.b16 %v3782
      %v4120 = vpack.c.b16 %v4016, %v4112
      %v4121 = vpack.c.b16 %v4017, %v4113
      %v4122 = vpack.c.b16 %v4018, %v4114
      %v4123 = vpack.c.b16 %v4019, %v4115
      %v4124 = vpack.c.b16 %v4020, %v4116
      %v4125 = vpack.c.b16 %v4021, %v4117
      %v4126 = vpack.c.b16 %v4022, %v4118
      %v4127 = vpack.c.b16 %v4023, %v4119
      %v4128 = vrot.slane %v4120, 1
      %v4129 = vrot.slane %v4121, 1
      %v4130 = vrot.slane %v4122, 1
      %v4131 = vrot.slane %v4123, 1
      %v4132 = vrot.slane %v4124, 1
      %v4133 = vrot.slane %v4125, 1
      %v4134 = vrot.slane %v4126, 1
      %v4135 = vrot.slane %v4127, 1
      %4136 = vrot.lane.b32.xlu0 %v4128, 20
      %v4137 = vpop.permute.xlu0 %4136
      %4138 = vrot.lane.b32.xlu0 %v4129, 20
      %v4139 = vpop.permute.xlu0 %4138
      %4140 = vrot.lane.b32.xlu0 %v4130, 20
      %v4141 = vpop.permute.xlu0 %4140
      %4142 = vrot.lane.b32.xlu0 %v4131, 20
      %v4143 = vpop.permute.xlu0 %4142
      %4144 = vrot.lane.b32.xlu0 %v4132, 20
      %v4145 = vpop.permute.xlu0 %4144
      %4146 = vrot.lane.b32.xlu0 %v4133, 20
      %v4147 = vpop.permute.xlu0 %4146
      %4148 = vrot.lane.b32.xlu0 %v4134, 20
      %v4149 = vpop.permute.xlu0 %4148
      %4150 = vrot.lane.b32.xlu0 %v4135, 20
      %v4151 = vpop.permute.xlu0 %4150
      %v4160 = vunpack.c.l.b16 %v3784
      %v4161 = vunpack.c.l.b16 %v3785
      %v4162 = vunpack.c.l.b16 %v3786
      %v4163 = vunpack.c.l.b16 %v3787
      %v4164 = vunpack.c.l.b16 %v3788
      %v4165 = vunpack.c.l.b16 %v3789
      %v4166 = vunpack.c.l.b16 %v3790
      %v4167 = vunpack.c.l.b16 %v3791
      %v4168 = vpack.c.b16 %v4160, %v4160
      %v4169 = vpack.c.b16 %v4161, %v4161
      %v4170 = vpack.c.b16 %v4162, %v4162
      %v4171 = vpack.c.b16 %v4163, %v4163
      %v4172 = vpack.c.b16 %v4164, %v4164
      %v4173 = vpack.c.b16 %v4165, %v4165
      %v4174 = vpack.c.b16 %v4166, %v4166
      %v4175 = vpack.c.b16 %v4167, %v4167
      %4176 = vrot.lane.b32.xlu0 %v4168, 24
      %v4177 = vpop.permute.xlu0 %4176
      %4178 = vrot.lane.b32.xlu0 %v4169, 24
      %v4179 = vpop.permute.xlu0 %4178
      %4180 = vrot.lane.b32.xlu0 %v4170, 24
      %v4181 = vpop.permute.xlu0 %4180
      %4182 = vrot.lane.b32.xlu0 %v4171, 24
      %v4183 = vpop.permute.xlu0 %4182
      %4184 = vrot.lane.b32.xlu0 %v4172, 24
      %v4185 = vpop.permute.xlu0 %4184
      %4186 = vrot.lane.b32.xlu0 %v4173, 24
      %v4187 = vpop.permute.xlu0 %4186
      %4188 = vrot.lane.b32.xlu0 %v4174, 24
      %v4189 = vpop.permute.xlu0 %4188
      %4190 = vrot.lane.b32.xlu0 %v4175, 24
      %v4191 = vpop.permute.xlu0 %4190
      %v4200 = vunpack.c.l.b16 %v3792
      %v4201 = vunpack.c.l.b16 %v3793
      %v4202 = vunpack.c.l.b16 %v3794
      %v4203 = vunpack.c.l.b16 %v3795
      %v4204 = vunpack.c.l.b16 %v3796
      %v4205 = vunpack.c.l.b16 %v3797
      %v4206 = vunpack.c.l.b16 %v3798
      %v4207 = vunpack.c.l.b16 %v3799
      %v4208 = vpack.c.b16 %v4200, %v4160
      %v4209 = vpack.c.b16 %v4201, %v4161
      %v4210 = vpack.c.b16 %v4202, %v4162
      %v4211 = vpack.c.b16 %v4203, %v4163
      %v4212 = vpack.c.b16 %v4204, %v4164
      %v4213 = vpack.c.b16 %v4205, %v4165
      %v4214 = vpack.c.b16 %v4206, %v4166
      %v4215 = vpack.c.b16 %v4207, %v4167
      %v4217 = vshrl.u32 %v4208, 16
      %v4219 = vshll.u32 %v4208, 16
      %v4221 = vrot.slane %v4219, 1
      %v4222 = vor.u32 %v4217, %v4221
      %v4224 = vshrl.u32 %v4209, 16
      %v4226 = vshll.u32 %v4209, 16
      %v4228 = vrot.slane %v4226, 1
      %v4229 = vor.u32 %v4224, %v4228
      %v4231 = vshrl.u32 %v4210, 16
      %v4233 = vshll.u32 %v4210, 16
      %v4235 = vrot.slane %v4233, 1
      %v4236 = vor.u32 %v4231, %v4235
      %v4238 = vshrl.u32 %v4211, 16
      %v4240 = vshll.u32 %v4211, 16
      %v4242 = vrot.slane %v4240, 1
      %v4243 = vor.u32 %v4238, %v4242
      %v4245 = vshrl.u32 %v4212, 16
      %v4247 = vshll.u32 %v4212, 16
      %v4249 = vrot.slane %v4247, 1
      %v4250 = vor.u32 %v4245, %v4249
      %v4252 = vshrl.u32 %v4213, 16
      %v4254 = vshll.u32 %v4213, 16
      %v4256 = vrot.slane %v4254, 1
      %v4257 = vor.u32 %v4252, %v4256
      %v4259 = vshrl.u32 %v4214, 16
      %v4261 = vshll.u32 %v4214, 16
      %v4263 = vrot.slane %v4261, 1
      %v4264 = vor.u32 %v4259, %v4263
      %v4266 = vshrl.u32 %v4215, 16
      %v4268 = vshll.u32 %v4215, 16
      %v4270 = vrot.slane %v4268, 1
      %v4271 = vor.u32 %v4266, %v4270
      %4272 = vrot.lane.b32.xlu0 %v4222, 28
      %v4273 = vpop.permute.xlu0 %4272
      %4274 = vrot.lane.b32.xlu0 %v4229, 28
      %v4275 = vpop.permute.xlu0 %4274
      %4276 = vrot.lane.b32.xlu0 %v4236, 28
      %v4277 = vpop.permute.xlu0 %4276
      %4278 = vrot.lane.b32.xlu0 %v4243, 28
      %v4279 = vpop.permute.xlu0 %4278
      %4280 = vrot.lane.b32.xlu0 %v4250, 28
      %v4281 = vpop.permute.xlu0 %4280
      %4282 = vrot.lane.b32.xlu0 %v4257, 28
      %v4283 = vpop.permute.xlu0 %4282
      %4284 = vrot.lane.b32.xlu0 %v4264, 28
      %v4285 = vpop.permute.xlu0 %4284
      %4286 = vrot.lane.b32.xlu0 %v4271, 28
      %v4287 = vpop.permute.xlu0 %4286
      %v4296 = vunpack.c.l.b16 %v3800
      %v4297 = vunpack.c.l.b16 %v3801
      %v4298 = vunpack.c.l.b16 %v3802
      %v4299 = vunpack.c.l.b16 %v3803
      %v4300 = vunpack.c.l.b16 %v3804
      %v4301 = vunpack.c.l.b16 %v3805
      %v4302 = vunpack.c.l.b16 %v3806
      %v4303 = vunpack.c.l.b16 %v3807
      %v4304 = vpack.c.b16 %v4200, %v4296
      %v4305 = vpack.c.b16 %v4201, %v4297
      %v4306 = vpack.c.b16 %v4202, %v4298
      %v4307 = vpack.c.b16 %v4203, %v4299
      %v4308 = vpack.c.b16 %v4204, %v4300
      %v4309 = vpack.c.b16 %v4205, %v4301
      %v4310 = vpack.c.b16 %v4206, %v4302
      %v4311 = vpack.c.b16 %v4207, %v4303
      %v4312 = vrot.slane %v4304, 1
      %v4313 = vrot.slane %v4305, 1
      %v4314 = vrot.slane %v4306, 1
      %v4315 = vrot.slane %v4307, 1
      %v4316 = vrot.slane %v4308, 1
      %v4317 = vrot.slane %v4309, 1
      %v4318 = vrot.slane %v4310, 1
      %v4319 = vrot.slane %v4311, 1
      %4320 = vrot.lane.b32.xlu0 %v4312, 32
      %v4321 = vpop.permute.xlu0 %4320
      %4322 = vrot.lane.b32.xlu0 %v4313, 32
      %v4323 = vpop.permute.xlu0 %4322
      %4324 = vrot.lane.b32.xlu0 %v4314, 32
      %v4325 = vpop.permute.xlu0 %4324
      %4326 = vrot.lane.b32.xlu0 %v4315, 32
      %v4327 = vpop.permute.xlu0 %4326
      %4328 = vrot.lane.b32.xlu0 %v4316, 32
      %v4329 = vpop.permute.xlu0 %4328
      %4330 = vrot.lane.b32.xlu0 %v4317, 32
      %v4331 = vpop.permute.xlu0 %4330
      %4332 = vrot.lane.b32.xlu0 %v4318, 32
      %v4333 = vpop.permute.xlu0 %4332
      %4334 = vrot.lane.b32.xlu0 %v4319, 32
      %v4335 = vpop.permute.xlu0 %4334
      %v4338 = vsel %vm1420, %v3735, %v3905
      %v4341 = vsel %vm1420, %v3736, %v3907
      %v4344 = vsel %vm1420, %v3737, %v3909
      %v4347 = vsel %vm1420, %v3738, %v3911
      %v4350 = vsel %vm1420, %v3739, %v3913
      %v4353 = vsel %vm1420, %v3740, %v3915
      %v4356 = vsel %vm1420, %v3741, %v3917
      %v4359 = vsel %vm1420, %v3742, %v3919
      %v4361 = vsel %vm3504, %v4338, %v3953
      %v4363 = vsel %vm3504, %v4341, %v3955
      %v4365 = vsel %vm3504, %v4344, %v3957
      %v4367 = vsel %vm3504, %v4347, %v3959
      %v4369 = vsel %vm3504, %v4350, %v3961
      %v4371 = vsel %vm3504, %v4353, %v3963
      %v4373 = vsel %vm3504, %v4356, %v3965
      %v4375 = vsel %vm3504, %v4359, %v3967
      %v4377 = vsel %vm3537, %v4361, %v3993
      %v4379 = vsel %vm3537, %v4363, %v3995
      %v4381 = vsel %vm3537, %v4365, %v3997
      %v4383 = vsel %vm3537, %v4367, %v3999
      %v4385 = vsel %vm3537, %v4369, %v4001
      %v4387 = vsel %vm3537, %v4371, %v4003
      %v4389 = vsel %vm3537, %v4373, %v4005
      %v4391 = vsel %vm3537, %v4375, %v4007
      %v4393 = vsel %vm3570, %v4377, %v4089
      %v4395 = vsel %vm3570, %v4379, %v4091
      %v4397 = vsel %vm3570, %v4381, %v4093
      %v4399 = vsel %vm3570, %v4383, %v4095
      %v4401 = vsel %vm3570, %v4385, %v4097
      %v4403 = vsel %vm3570, %v4387, %v4099
      %v4405 = vsel %vm3570, %v4389, %v4101
      %v4407 = vsel %vm3570, %v4391, %v4103
      %v4409 = vsel %vm3603, %v4393, %v4137
      %v4411 = vsel %vm3603, %v4395, %v4139
      %v4413 = vsel %vm3603, %v4397, %v4141
      %v4415 = vsel %vm3603, %v4399, %v4143
      %v4417 = vsel %vm3603, %v4401, %v4145
      %v4419 = vsel %vm3603, %v4403, %v4147
      %v4421 = vsel %vm3603, %v4405, %v4149
      %v4423 = vsel %vm3603, %v4407, %v4151
      %v4425 = vsel %vm3636, %v4409, %v4177
      %v4427 = vsel %vm3636, %v4411, %v4179
      %v4429 = vsel %vm3636, %v4413, %v4181
      %v4431 = vsel %vm3636, %v4415, %v4183
      %v4433 = vsel %vm3636, %v4417, %v4185
      %v4435 = vsel %vm3636, %v4419, %v4187
      %v4437 = vsel %vm3636, %v4421, %v4189
      %v4439 = vsel %vm3636, %v4423, %v4191
      %v4441 = vsel %vm3669, %v4425, %v4273
      %v4443 = vsel %vm3669, %v4427, %v4275
      %v4445 = vsel %vm3669, %v4429, %v4277
      %v4447 = vsel %vm3669, %v4431, %v4279
      %v4449 = vsel %vm3669, %v4433, %v4281
      %v4451 = vsel %vm3669, %v4435, %v4283
      %v4453 = vsel %vm3669, %v4437, %v4285
      %v4455 = vsel %vm3669, %v4439, %v4287
      %v4457 = vsel %vm3702, %v4441, %v4321
      %v4459 = vsel %vm3702, %v4443, %v4323
      %v4461 = vsel %vm3702, %v4445, %v4325
      %v4463 = vsel %vm3702, %v4447, %v4327
      %v4465 = vsel %vm3702, %v4449, %v4329
      %v4467 = vsel %vm3702, %v4451, %v4331
      %v4469 = vsel %vm3702, %v4453, %v4333
      %v4471 = vsel %vm3702, %v4455, %v4335
      %v4472 = vld [vmem:[#allocation4] sm:$0xf]
      %v4473 = vld [vmem:[#allocation4 + $0x8] sm:$0xf]
      %v4474 = vld [vmem:[#allocation4 + $0x10] sm:$0xf]
      %v4475 = vld [vmem:[#allocation4 + $0x18] sm:$0xf]
      %v4476 = vld [vmem:[#allocation4 + $0x20] sm:$0xf]
      %v4477 = vld [vmem:[#allocation4 + $0x28] sm:$0xf]
      %v4478 = vld [vmem:[#allocation4 + $0x30] sm:$0xf]
      %v4479 = vld [vmem:[#allocation4 + $0x38] sm:$0xf]
      %v4480 = vld [vmem:[#allocation4 + $0x4] sm:$0x1]
      %v4481 = vld [vmem:[#allocation4 + $0xc] sm:$0x1]
      %v4482 = vld [vmem:[#allocation4 + $0x14] sm:$0x1]
      %v4483 = vld [vmem:[#allocation4 + $0x1c] sm:$0x1]
      %v4484 = vld [vmem:[#allocation4 + $0x24] sm:$0x1]
      %v4485 = vld [vmem:[#allocation4 + $0x2c] sm:$0x1]
      %v4486 = vld [vmem:[#allocation4 + $0x34] sm:$0x1]
      %v4487 = vld [vmem:[#allocation4 + $0x3c] sm:$0x1]
      %v4488 = vld [vmem:[#allocation4] sm:$0xe]
      %v4489 = vld [vmem:[#allocation4 + $0x8] sm:$0xe]
      %v4490 = vld [vmem:[#allocation4 + $0x10] sm:$0xe]
      %v4491 = vld [vmem:[#allocation4 + $0x18] sm:$0xe]
      %v4492 = vld [vmem:[#allocation4 + $0x20] sm:$0xe]
      %v4493 = vld [vmem:[#allocation4 + $0x28] sm:$0xe]
      %v4494 = vld [vmem:[#allocation4 + $0x30] sm:$0xe]
      %v4495 = vld [vmem:[#allocation4 + $0x38] sm:$0xe]
      %v4496 = vld [vmem:[%s1243] sm:$0xf]
      %v4497 = vld [vmem:[%s1243 + $0x8] sm:$0xf]
      %v4498 = vld [vmem:[%s1243 + $0x10] sm:$0xf]
      %v4499 = vld [vmem:[%s1243 + $0x18] sm:$0xf]
      %v4500 = vld [vmem:[%s1243 + $0x20] sm:$0xf]
      %v4501 = vld [vmem:[%s1243 + $0x28] sm:$0xf]
      %v4502 = vld [vmem:[%s1243 + $0x30] sm:$0xf]
      %v4503 = vld [vmem:[%s1243 + $0x38] sm:$0xf]
      %v4504 = vld [vmem:[%s1243 + $0x4] sm:$0x1]
      %v4505 = vld [vmem:[%s1243 + $0xc] sm:$0x1]
      %v4506 = vld [vmem:[%s1243 + $0x14] sm:$0x1]
      %v4507 = vld [vmem:[%s1243 + $0x1c] sm:$0x1]
      %v4508 = vld [vmem:[%s1243 + $0x24] sm:$0x1]
      %v4509 = vld [vmem:[%s1243 + $0x2c] sm:$0x1]
      %v4510 = vld [vmem:[%s1243 + $0x34] sm:$0x1]
      %v4511 = vld [vmem:[%s1243 + $0x3c] sm:$0x1]
      %v4512 = vld [vmem:[%s1243] sm:$0xe]
      %v4513 = vld [vmem:[%s1243 + $0x8] sm:$0xe]
      %v4514 = vld [vmem:[%s1243 + $0x10] sm:$0xe]
      %v4515 = vld [vmem:[%s1243 + $0x18] sm:$0xe]
      %v4516 = vld [vmem:[%s1243 + $0x20] sm:$0xe]
      %v4517 = vld [vmem:[%s1243 + $0x28] sm:$0xe]
      %v4518 = vld [vmem:[%s1243 + $0x30] sm:$0xe]
      %v4519 = vld [vmem:[%s1243 + $0x38] sm:$0xe]
      %s4520 = scalar_lea.vmem [#allocation4], 16
      %v4521 = vld [vmem:[%s4520] sm:$0xf]
      %v4522 = vld [vmem:[%s4520 + $0x8] sm:$0xf]
      %v4523 = vld [vmem:[%s4520 + $0x10] sm:$0xf]
      %v4524 = vld [vmem:[%s4520 + $0x18] sm:$0xf]
      %v4525 = vld [vmem:[%s4520 + $0x20] sm:$0xf]
      %v4526 = vld [vmem:[%s4520 + $0x28] sm:$0xf]
      %v4527 = vld [vmem:[%s4520 + $0x30] sm:$0xf]
      %v4528 = vld [vmem:[%s4520 + $0x38] sm:$0xf]
      %v4529 = vld [vmem:[%s4520 + $0x4] sm:$0x1]
      %v4530 = vld [vmem:[%s4520 + $0xc] sm:$0x1]
      %v4531 = vld [vmem:[%s4520 + $0x14] sm:$0x1]
      %v4532 = vld [vmem:[%s4520 + $0x1c] sm:$0x1]
      %v4533 = vld [vmem:[%s4520 + $0x24] sm:$0x1]
      %v4534 = vld [vmem:[%s4520 + $0x2c] sm:$0x1]
      %v4535 = vld [vmem:[%s4520 + $0x34] sm:$0x1]
      %v4536 = vld [vmem:[%s4520 + $0x3c] sm:$0x1]
      %v4537 = vld [vmem:[%s4520] sm:$0xe]
      %v4538 = vld [vmem:[%s4520 + $0x8] sm:$0xe]
      %v4539 = vld [vmem:[%s4520 + $0x10] sm:$0xe]
      %v4540 = vld [vmem:[%s4520 + $0x18] sm:$0xe]
      %v4541 = vld [vmem:[%s4520 + $0x20] sm:$0xe]
      %v4542 = vld [vmem:[%s4520 + $0x28] sm:$0xe]
      %v4543 = vld [vmem:[%s4520 + $0x30] sm:$0xe]
      %v4544 = vld [vmem:[%s4520 + $0x38] sm:$0xe]
      %v4561 = vunpack.c.l.b16 %v4472
      %v4562 = vunpack.c.l.b16 %v4480
      %v4563 = vunpack.c.l.b16 %v4473
      %v4564 = vunpack.c.l.b16 %v4481
      %v4565 = vunpack.c.l.b16 %v4474
      %v4566 = vunpack.c.l.b16 %v4482
      %v4567 = vunpack.c.l.b16 %v4475
      %v4568 = vunpack.c.l.b16 %v4483
      %v4569 = vunpack.c.l.b16 %v4476
      %v4570 = vunpack.c.l.b16 %v4484
      %v4571 = vunpack.c.l.b16 %v4477
      %v4572 = vunpack.c.l.b16 %v4485
      %v4573 = vunpack.c.l.b16 %v4478
      %v4574 = vunpack.c.l.b16 %v4486
      %v4575 = vunpack.c.l.b16 %v4479
      %v4576 = vunpack.c.l.b16 %v4487
      %v4577 = vpack.c.b16 %v4562, %v4561
      %v4578 = vpack.c.b16 %v4564, %v4563
      %v4579 = vpack.c.b16 %v4566, %v4565
      %v4580 = vpack.c.b16 %v4568, %v4567
      %v4581 = vpack.c.b16 %v4570, %v4569
      %v4582 = vpack.c.b16 %v4572, %v4571
      %v4583 = vpack.c.b16 %v4574, %v4573
      %v4584 = vpack.c.b16 %v4576, %v4575
      %v4586 = vshrl.u32 %v4577, 16
      %v4588 = vshll.u32 %v4577, 16
      %v4590 = vrot.slane %v4588, 1
      %v4591 = vor.u32 %v4586, %v4590
      %v4593 = vshrl.u32 %v4578, 16
      %v4595 = vshll.u32 %v4578, 16
      %v4597 = vrot.slane %v4595, 1
      %v4598 = vor.u32 %v4593, %v4597
      %v4600 = vshrl.u32 %v4579, 16
      %v4602 = vshll.u32 %v4579, 16
      %v4604 = vrot.slane %v4602, 1
      %v4605 = vor.u32 %v4600, %v4604
      %v4607 = vshrl.u32 %v4580, 16
      %v4609 = vshll.u32 %v4580, 16
      %v4611 = vrot.slane %v4609, 1
      %v4612 = vor.u32 %v4607, %v4611
      %v4614 = vshrl.u32 %v4581, 16
      %v4616 = vshll.u32 %v4581, 16
      %v4618 = vrot.slane %v4616, 1
      %v4619 = vor.u32 %v4614, %v4618
      %v4621 = vshrl.u32 %v4582, 16
      %v4623 = vshll.u32 %v4582, 16
      %v4625 = vrot.slane %v4623, 1
      %v4626 = vor.u32 %v4621, %v4625
      %v4628 = vshrl.u32 %v4583, 16
      %v4630 = vshll.u32 %v4583, 16
      %v4632 = vrot.slane %v4630, 1
      %v4633 = vor.u32 %v4628, %v4632
      %v4635 = vshrl.u32 %v4584, 16
      %v4637 = vshll.u32 %v4584, 16
      %v4639 = vrot.slane %v4637, 1
      %v4640 = vor.u32 %v4635, %v4639
      %4641 = vrot.lane.b32.xlu0 %v4591, 2
      %v4642 = vpop.permute.xlu0 %4641
      %4643 = vrot.lane.b32.xlu0 %v4598, 2
      %v4644 = vpop.permute.xlu0 %4643
      %4645 = vrot.lane.b32.xlu0 %v4605, 2
      %v4646 = vpop.permute.xlu0 %4645
      %4647 = vrot.lane.b32.xlu0 %v4612, 2
      %v4648 = vpop.permute.xlu0 %4647
      %4649 = vrot.lane.b32.xlu0 %v4619, 2
      %v4650 = vpop.permute.xlu0 %4649
      %4651 = vrot.lane.b32.xlu0 %v4626, 2
      %v4652 = vpop.permute.xlu0 %4651
      %4653 = vrot.lane.b32.xlu0 %v4633, 2
      %v4654 = vpop.permute.xlu0 %4653
      %4655 = vrot.lane.b32.xlu0 %v4640, 2
      %v4656 = vpop.permute.xlu0 %4655
      %v4665 = vunpack.c.l.b16 %v4488
      %v4666 = vunpack.c.l.b16 %v4489
      %v4667 = vunpack.c.l.b16 %v4490
      %v4668 = vunpack.c.l.b16 %v4491
      %v4669 = vunpack.c.l.b16 %v4492
      %v4670 = vunpack.c.l.b16 %v4493
      %v4671 = vunpack.c.l.b16 %v4494
      %v4672 = vunpack.c.l.b16 %v4495
      %v4673 = vpack.c.b16 %v4562, %v4665
      %v4674 = vpack.c.b16 %v4564, %v4666
      %v4675 = vpack.c.b16 %v4566, %v4667
      %v4676 = vpack.c.b16 %v4568, %v4668
      %v4677 = vpack.c.b16 %v4570, %v4669
      %v4678 = vpack.c.b16 %v4572, %v4670
      %v4679 = vpack.c.b16 %v4574, %v4671
      %v4680 = vpack.c.b16 %v4576, %v4672
      %v4681 = vrot.slane %v4673, 1
      %v4682 = vrot.slane %v4674, 1
      %v4683 = vrot.slane %v4675, 1
      %v4684 = vrot.slane %v4676, 1
      %v4685 = vrot.slane %v4677, 1
      %v4686 = vrot.slane %v4678, 1
      %v4687 = vrot.slane %v4679, 1
      %v4688 = vrot.slane %v4680, 1
      %4689 = vrot.lane.b32.xlu0 %v4681, 4
      %v4690 = vpop.permute.xlu0 %4689
      %4691 = vrot.lane.b32.xlu0 %v4682, 4
      %v4692 = vpop.permute.xlu0 %4691
      %4693 = vrot.lane.b32.xlu0 %v4683, 4
      %v4694 = vpop.permute.xlu0 %4693
      %4695 = vrot.lane.b32.xlu0 %v4684, 4
      %v4696 = vpop.permute.xlu0 %4695
      %4697 = vrot.lane.b32.xlu0 %v4685, 4
      %v4698 = vpop.permute.xlu0 %4697
      %4699 = vrot.lane.b32.xlu0 %v4686, 4
      %v4700 = vpop.permute.xlu0 %4699
      %4701 = vrot.lane.b32.xlu0 %v4687, 4
      %v4702 = vpop.permute.xlu0 %4701
      %4703 = vrot.lane.b32.xlu0 %v4688, 4
      %v4704 = vpop.permute.xlu0 %4703
      %v4713 = vunpack.c.l.b16 %v4496
      %v4714 = vunpack.c.l.b16 %v4497
      %v4715 = vunpack.c.l.b16 %v4498
      %v4716 = vunpack.c.l.b16 %v4499
      %v4717 = vunpack.c.l.b16 %v4500
      %v4718 = vunpack.c.l.b16 %v4501
      %v4719 = vunpack.c.l.b16 %v4502
      %v4720 = vunpack.c.l.b16 %v4503
      %v4721 = vpack.c.b16 %v4713, %v4713
      %v4722 = vpack.c.b16 %v4714, %v4714
      %v4723 = vpack.c.b16 %v4715, %v4715
      %v4724 = vpack.c.b16 %v4716, %v4716
      %v4725 = vpack.c.b16 %v4717, %v4717
      %v4726 = vpack.c.b16 %v4718, %v4718
      %v4727 = vpack.c.b16 %v4719, %v4719
      %v4728 = vpack.c.b16 %v4720, %v4720
      %4729 = vrot.lane.b32.xlu0 %v4721, 6
      %v4730 = vpop.permute.xlu0 %4729
      %4731 = vrot.lane.b32.xlu0 %v4722, 6
      %v4732 = vpop.permute.xlu0 %4731
      %4733 = vrot.lane.b32.xlu0 %v4723, 6
      %v4734 = vpop.permute.xlu0 %4733
      %4735 = vrot.lane.b32.xlu0 %v4724, 6
      %v4736 = vpop.permute.xlu0 %4735
      %4737 = vrot.lane.b32.xlu0 %v4725, 6
      %v4738 = vpop.permute.xlu0 %4737
      %4739 = vrot.lane.b32.xlu0 %v4726, 6
      %v4740 = vpop.permute.xlu0 %4739
      %4741 = vrot.lane.b32.xlu0 %v4727, 6
      %v4742 = vpop.permute.xlu0 %4741
      %4743 = vrot.lane.b32.xlu0 %v4728, 6
      %v4744 = vpop.permute.xlu0 %4743
      %v4753 = vunpack.c.l.b16 %v4504
      %v4754 = vunpack.c.l.b16 %v4505
      %v4755 = vunpack.c.l.b16 %v4506
      %v4756 = vunpack.c.l.b16 %v4507
      %v4757 = vunpack.c.l.b16 %v4508
      %v4758 = vunpack.c.l.b16 %v4509
      %v4759 = vunpack.c.l.b16 %v4510
      %v4760 = vunpack.c.l.b16 %v4511
      %v4761 = vpack.c.b16 %v4753, %v4713
      %v4762 = vpack.c.b16 %v4754, %v4714
      %v4763 = vpack.c.b16 %v4755, %v4715
      %v4764 = vpack.c.b16 %v4756, %v4716
      %v4765 = vpack.c.b16 %v4757, %v4717
      %v4766 = vpack.c.b16 %v4758, %v4718
      %v4767 = vpack.c.b16 %v4759, %v4719
      %v4768 = vpack.c.b16 %v4760, %v4720
      %v4770 = vshrl.u32 %v4761, 16
      %v4772 = vshll.u32 %v4761, 16
      %v4774 = vrot.slane %v4772, 1
      %v4775 = vor.u32 %v4770, %v4774
      %v4777 = vshrl.u32 %v4762, 16
      %v4779 = vshll.u32 %v4762, 16
      %v4781 = vrot.slane %v4779, 1
      %v4782 = vor.u32 %v4777, %v4781
      %v4784 = vshrl.u32 %v4763, 16
      %v4786 = vshll.u32 %v4763, 16
      %v4788 = vrot.slane %v4786, 1
      %v4789 = vor.u32 %v4784, %v4788
      %v4791 = vshrl.u32 %v4764, 16
      %v4793 = vshll.u32 %v4764, 16
      %v4795 = vrot.slane %v4793, 1
      %v4796 = vor.u32 %v4791, %v4795
      %v4798 = vshrl.u32 %v4765, 16
      %v4800 = vshll.u32 %v4765, 16
      %v4802 = vrot.slane %v4800, 1
      %v4803 = vor.u32 %v4798, %v4802
      %v4805 = vshrl.u32 %v4766, 16
      %v4807 = vshll.u32 %v4766, 16
      %v4809 = vrot.slane %v4807, 1
      %v4810 = vor.u32 %v4805, %v4809
      %v4812 = vshrl.u32 %v4767, 16
      %v4814 = vshll.u32 %v4767, 16
      %v4816 = vrot.slane %v4814, 1
      %v4817 = vor.u32 %v4812, %v4816
      %v4819 = vshrl.u32 %v4768, 16
      %v4821 = vshll.u32 %v4768, 16
      %v4823 = vrot.slane %v4821, 1
      %v4824 = vor.u32 %v4819, %v4823
      %4825 = vrot.lane.b32.xlu0 %v4775, 8
      %v4826 = vpop.permute.xlu0 %4825
      %4827 = vrot.lane.b32.xlu0 %v4782, 8
      %v4828 = vpop.permute.xlu0 %4827
      %4829 = vrot.lane.b32.xlu0 %v4789, 8
      %v4830 = vpop.permute.xlu0 %4829
      %4831 = vrot.lane.b32.xlu0 %v4796, 8
      %v4832 = vpop.permute.xlu0 %4831
      %4833 = vrot.lane.b32.xlu0 %v4803, 8
      %v4834 = vpop.permute.xlu0 %4833
      %4835 = vrot.lane.b32.xlu0 %v4810, 8
      %v4836 = vpop.permute.xlu0 %4835
      %4837 = vrot.lane.b32.xlu0 %v4817, 8
      %v4838 = vpop.permute.xlu0 %4837
      %4839 = vrot.lane.b32.xlu0 %v4824, 8
      %v4840 = vpop.permute.xlu0 %4839
      %v4849 = vunpack.c.l.b16 %v4512
      %v4850 = vunpack.c.l.b16 %v4513
      %v4851 = vunpack.c.l.b16 %v4514
      %v4852 = vunpack.c.l.b16 %v4515
      %v4853 = vunpack.c.l.b16 %v4516
      %v4854 = vunpack.c.l.b16 %v4517
      %v4855 = vunpack.c.l.b16 %v4518
      %v4856 = vunpack.c.l.b16 %v4519
      %v4857 = vpack.c.b16 %v4753, %v4849
      %v4858 = vpack.c.b16 %v4754, %v4850
      %v4859 = vpack.c.b16 %v4755, %v4851
      %v4860 = vpack.c.b16 %v4756, %v4852
      %v4861 = vpack.c.b16 %v4757, %v4853
      %v4862 = vpack.c.b16 %v4758, %v4854
      %v4863 = vpack.c.b16 %v4759, %v4855
      %v4864 = vpack.c.b16 %v4760, %v4856
      %v4865 = vrot.slane %v4857, 1
      %v4866 = vrot.slane %v4858, 1
      %v4867 = vrot.slane %v4859, 1
      %v4868 = vrot.slane %v4860, 1
      %v4869 = vrot.slane %v4861, 1
      %v4870 = vrot.slane %v4862, 1
      %v4871 = vrot.slane %v4863, 1
      %v4872 = vrot.slane %v4864, 1
      %4873 = vrot.lane.b32.xlu0 %v4865, 10
      %v4874 = vpop.permute.xlu0 %4873
      %4875 = vrot.lane.b32.xlu0 %v4866, 10
      %v4876 = vpop.permute.xlu0 %4875
      %4877 = vrot.lane.b32.xlu0 %v4867, 10
      %v4878 = vpop.permute.xlu0 %4877
      %4879 = vrot.lane.b32.xlu0 %v4868, 10
      %v4880 = vpop.permute.xlu0 %4879
      %4881 = vrot.lane.b32.xlu0 %v4869, 10
      %v4882 = vpop.permute.xlu0 %4881
      %4883 = vrot.lane.b32.xlu0 %v4870, 10
      %v4884 = vpop.permute.xlu0 %4883
      %4885 = vrot.lane.b32.xlu0 %v4871, 10
      %v4886 = vpop.permute.xlu0 %4885
      %4887 = vrot.lane.b32.xlu0 %v4872, 10
      %v4888 = vpop.permute.xlu0 %4887
      %v4897 = vunpack.c.l.b16 %v4521
      %v4898 = vunpack.c.l.b16 %v4522
      %v4899 = vunpack.c.l.b16 %v4523
      %v4900 = vunpack.c.l.b16 %v4524
      %v4901 = vunpack.c.l.b16 %v4525
      %v4902 = vunpack.c.l.b16 %v4526
      %v4903 = vunpack.c.l.b16 %v4527
      %v4904 = vunpack.c.l.b16 %v4528
      %v4905 = vpack.c.b16 %v4897, %v4897
      %v4906 = vpack.c.b16 %v4898, %v4898
      %v4907 = vpack.c.b16 %v4899, %v4899
      %v4908 = vpack.c.b16 %v4900, %v4900
      %v4909 = vpack.c.b16 %v4901, %v4901
      %v4910 = vpack.c.b16 %v4902, %v4902
      %v4911 = vpack.c.b16 %v4903, %v4903
      %v4912 = vpack.c.b16 %v4904, %v4904
      %4913 = vrot.lane.b32.xlu0 %v4905, 12
      %v4914 = vpop.permute.xlu0 %4913
      %4915 = vrot.lane.b32.xlu0 %v4906, 12
      %v4916 = vpop.permute.xlu0 %4915
      %4917 = vrot.lane.b32.xlu0 %v4907, 12
      %v4918 = vpop.permute.xlu0 %4917
      %4919 = vrot.lane.b32.xlu0 %v4908, 12
      %v4920 = vpop.permute.xlu0 %4919
      %4921 = vrot.lane.b32.xlu0 %v4909, 12
      %v4922 = vpop.permute.xlu0 %4921
      %4923 = vrot.lane.b32.xlu0 %v4910, 12
      %v4924 = vpop.permute.xlu0 %4923
      %4925 = vrot.lane.b32.xlu0 %v4911, 12
      %v4926 = vpop.permute.xlu0 %4925
      %4927 = vrot.lane.b32.xlu0 %v4912, 12
      %v4928 = vpop.permute.xlu0 %4927
      %v4937 = vunpack.c.l.b16 %v4529
      %v4938 = vunpack.c.l.b16 %v4530
      %v4939 = vunpack.c.l.b16 %v4531
      %v4940 = vunpack.c.l.b16 %v4532
      %v4941 = vunpack.c.l.b16 %v4533
      %v4942 = vunpack.c.l.b16 %v4534
      %v4943 = vunpack.c.l.b16 %v4535
      %v4944 = vunpack.c.l.b16 %v4536
      %v4945 = vpack.c.b16 %v4937, %v4897
      %v4946 = vpack.c.b16 %v4938, %v4898
      %v4947 = vpack.c.b16 %v4939, %v4899
      %v4948 = vpack.c.b16 %v4940, %v4900
      %v4949 = vpack.c.b16 %v4941, %v4901
      %v4950 = vpack.c.b16 %v4942, %v4902
      %v4951 = vpack.c.b16 %v4943, %v4903
      %v4952 = vpack.c.b16 %v4944, %v4904
      %v4954 = vshrl.u32 %v4945, 16
      %v4956 = vshll.u32 %v4945, 16
      %v4958 = vrot.slane %v4956, 1
      %v4959 = vor.u32 %v4954, %v4958
      %v4961 = vshrl.u32 %v4946, 16
      %v4963 = vshll.u32 %v4946, 16
      %v4965 = vrot.slane %v4963, 1
      %v4966 = vor.u32 %v4961, %v4965
      %v4968 = vshrl.u32 %v4947, 16
      %v4970 = vshll.u32 %v4947, 16
      %v4972 = vrot.slane %v4970, 1
      %v4973 = vor.u32 %v4968, %v4972
      %v4975 = vshrl.u32 %v4948, 16
      %v4977 = vshll.u32 %v4948, 16
      %v4979 = vrot.slane %v4977, 1
      %v4980 = vor.u32 %v4975, %v4979
      %v4982 = vshrl.u32 %v4949, 16
      %v4984 = vshll.u32 %v4949, 16
      %v4986 = vrot.slane %v4984, 1
      %v4987 = vor.u32 %v4982, %v4986
      %v4989 = vshrl.u32 %v4950, 16
      %v4991 = vshll.u32 %v4950, 16
      %v4993 = vrot.slane %v4991, 1
      %v4994 = vor.u32 %v4989, %v4993
      %v4996 = vshrl.u32 %v4951, 16
      %v4998 = vshll.u32 %v4951, 16
      %v5000 = vrot.slane %v4998, 1
      %v5001 = vor.u32 %v4996, %v5000
      %v5003 = vshrl.u32 %v4952, 16
      %v5005 = vshll.u32 %v4952, 16
      %v5007 = vrot.slane %v5005, 1
      %v5008 = vor.u32 %v5003, %v5007
      %5009 = vrot.lane.b32.xlu0 %v4959, 14
      %v5010 = vpop.permute.xlu0 %5009
      %5011 = vrot.lane.b32.xlu0 %v4966, 14
      %v5012 = vpop.permute.xlu0 %5011
      %5013 = vrot.lane.b32.xlu0 %v4973, 14
      %v5014 = vpop.permute.xlu0 %5013
      %5015 = vrot.lane.b32.xlu0 %v4980, 14
      %v5016 = vpop.permute.xlu0 %5015
      %5017 = vrot.lane.b32.xlu0 %v4987, 14
      %v5018 = vpop.permute.xlu0 %5017
      %5019 = vrot.lane.b32.xlu0 %v4994, 14
      %v5020 = vpop.permute.xlu0 %5019
      %5021 = vrot.lane.b32.xlu0 %v5001, 14
      %v5022 = vpop.permute.xlu0 %5021
      %5023 = vrot.lane.b32.xlu0 %v5008, 14
      %v5024 = vpop.permute.xlu0 %5023
      %v5033 = vunpack.c.l.b16 %v4537
      %v5034 = vunpack.c.l.b16 %v4538
      %v5035 = vunpack.c.l.b16 %v4539
      %v5036 = vunpack.c.l.b16 %v4540
      %v5037 = vunpack.c.l.b16 %v4541
      %v5038 = vunpack.c.l.b16 %v4542
      %v5039 = vunpack.c.l.b16 %v4543
      %v5040 = vunpack.c.l.b16 %v4544
      %v5041 = vpack.c.b16 %v4937, %v5033
      %v5042 = vpack.c.b16 %v4938, %v5034
      %v5043 = vpack.c.b16 %v4939, %v5035
      %v5044 = vpack.c.b16 %v4940, %v5036
      %v5045 = vpack.c.b16 %v4941, %v5037
      %v5046 = vpack.c.b16 %v4942, %v5038
      %v5047 = vpack.c.b16 %v4943, %v5039
      %v5048 = vpack.c.b16 %v4944, %v5040
      %v5049 = vrot.slane %v5041, 1
      %v5050 = vrot.slane %v5042, 1
      %v5051 = vrot.slane %v5043, 1
      %v5052 = vrot.slane %v5044, 1
      %v5053 = vrot.slane %v5045, 1
      %v5054 = vrot.slane %v5046, 1
      %v5055 = vrot.slane %v5047, 1
      %v5056 = vrot.slane %v5048, 1
      %5057 = vrot.lane.b32.xlu0 %v5049, 16
      %v5058 = vpop.permute.xlu0 %5057
      %5059 = vrot.lane.b32.xlu0 %v5050, 16
      %v5060 = vpop.permute.xlu0 %5059
      %5061 = vrot.lane.b32.xlu0 %v5051, 16
      %v5062 = vpop.permute.xlu0 %5061
      %5063 = vrot.lane.b32.xlu0 %v5052, 16
      %v5064 = vpop.permute.xlu0 %5063
      %5065 = vrot.lane.b32.xlu0 %v5053, 16
      %v5066 = vpop.permute.xlu0 %5065
      %5067 = vrot.lane.b32.xlu0 %v5054, 16
      %v5068 = vpop.permute.xlu0 %5067
      %5069 = vrot.lane.b32.xlu0 %v5055, 16
      %v5070 = vpop.permute.xlu0 %5069
      %5071 = vrot.lane.b32.xlu0 %v5056, 16
      %v5072 = vpop.permute.xlu0 %5071
      %v5075 = vsel %vm1678, %v4472, %v4642
      %v5078 = vsel %vm1678, %v4473, %v4644
      %v5081 = vsel %vm1678, %v4474, %v4646
      %v5084 = vsel %vm1678, %v4475, %v4648
      %v5087 = vsel %vm1678, %v4476, %v4650
      %v5090 = vsel %vm1678, %v4477, %v4652
      %v5093 = vsel %vm1678, %v4478, %v4654
      %v5096 = vsel %vm1678, %v4479, %v4656
      %v5098 = vsel %vm1420, %v5075, %v4690
      %v5100 = vsel %vm1420, %v5078, %v4692
      %v5102 = vsel %vm1420, %v5081, %v4694
      %v5104 = vsel %vm1420, %v5084, %v4696
      %v5106 = vsel %vm1420, %v5087, %v4698
      %v5108 = vsel %vm1420, %v5090, %v4700
      %v5110 = vsel %vm1420, %v5093, %v4702
      %v5112 = vsel %vm1420, %v5096, %v4704
      %vm5113 = vcmask 48128
      %v5115 = vsel %vm5113, %v5098, %v4730
      %v5117 = vsel %vm5113, %v5100, %v4732
      %v5119 = vsel %vm5113, %v5102, %v4734
      %v5121 = vsel %vm5113, %v5104, %v4736
      %v5123 = vsel %vm5113, %v5106, %v4738
      %v5125 = vsel %vm5113, %v5108, %v4740
      %v5127 = vsel %vm5113, %v5110, %v4742
      %v5129 = vsel %vm5113, %v5112, %v4744
      %v5131 = vsel %vm3504, %v5115, %v4826
      %v5133 = vsel %vm3504, %v5117, %v4828
      %v5135 = vsel %vm3504, %v5119, %v4830
      %v5137 = vsel %vm3504, %v5121, %v4832
      %v5139 = vsel %vm3504, %v5123, %v4834
      %v5141 = vsel %vm3504, %v5125, %v4836
      %v5143 = vsel %vm3504, %v5127, %v4838
      %v5145 = vsel %vm3504, %v5129, %v4840
      %vm5146 = vcmask 80896
      %v5148 = vsel %vm5146, %v5131, %v4874
      %v5150 = vsel %vm5146, %v5133, %v4876
      %v5152 = vsel %vm5146, %v5135, %v4878
      %v5154 = vsel %vm5146, %v5137, %v4880
      %v5156 = vsel %vm5146, %v5139, %v4882
      %v5158 = vsel %vm5146, %v5141, %v4884
      %v5160 = vsel %vm5146, %v5143, %v4886
      %v5162 = vsel %vm5146, %v5145, %v4888
      %v5164 = vsel %vm3537, %v5148, %v4914
      %v5166 = vsel %vm3537, %v5150, %v4916
      %v5168 = vsel %vm3537, %v5152, %v4918
      %v5170 = vsel %vm3537, %v5154, %v4920
      %v5172 = vsel %vm3537, %v5156, %v4922
      %v5174 = vsel %vm3537, %v5158, %v4924
      %v5176 = vsel %vm3537, %v5160, %v4926
      %v5178 = vsel %vm3537, %v5162, %v4928
      %vm5179 = vcmask 113664
      %v5181 = vsel %vm5179, %v5164, %v5010
      %v5183 = vsel %vm5179, %v5166, %v5012
      %v5185 = vsel %vm5179, %v5168, %v5014
      %v5187 = vsel %vm5179, %v5170, %v5016
      %v5189 = vsel %vm5179, %v5172, %v5018
      %v5191 = vsel %vm5179, %v5174, %v5020
      %v5193 = vsel %vm5179, %v5176, %v5022
      %v5195 = vsel %vm5179, %v5178, %v5024
      %v5197 = vsel %vm3570, %v5181, %v5058
      %v5199 = vsel %vm3570, %v5183, %v5060
      %v5201 = vsel %vm3570, %v5185, %v5062
      %v5203 = vsel %vm3570, %v5187, %v5064
      %v5205 = vsel %vm3570, %v5189, %v5066
      %v5207 = vsel %vm3570, %v5191, %v5068
      %v5209 = vsel %vm3570, %v5193, %v5070
      %v5211 = vsel %vm3570, %v5195, %v5072
      %v5212 = vld [vmem:[#allocation5] sm:$0x3]
      %v5213 = vld [vmem:[#allocation5 + $0x4] sm:$0x3]
      %v5214 = vld [vmem:[#allocation5 + $0x8] sm:$0x3]
      %v5215 = vld [vmem:[#allocation5 + $0xc] sm:$0x3]
      %v5216 = vld [vmem:[#allocation5] sm:$0x7]
      %v5217 = vld [vmem:[#allocation5 + $0x4] sm:$0x7]
      %v5218 = vld [vmem:[#allocation5 + $0x8] sm:$0x7]
      %v5219 = vld [vmem:[#allocation5 + $0xc] sm:$0x7]
      %v5220 = vld [vmem:[#allocation5] sm:$0x6]
      %v5221 = vld [vmem:[#allocation5 + $0x4] sm:$0x6]
      %v5222 = vld [vmem:[#allocation5 + $0x8] sm:$0x6]
      %v5223 = vld [vmem:[#allocation5 + $0xc] sm:$0x6]
      %v5224 = vld [vmem:[%s1760] sm:$0x3]
      %v5225 = vld [vmem:[%s1760 + $0x4] sm:$0x3]
      %v5226 = vld [vmem:[%s1760 + $0x8] sm:$0x3]
      %v5227 = vld [vmem:[%s1760 + $0xc] sm:$0x3]
      %v5228 = vld [vmem:[%s1760] sm:$0x7]
      %v5229 = vld [vmem:[%s1760 + $0x4] sm:$0x7]
      %v5230 = vld [vmem:[%s1760 + $0x8] sm:$0x7]
      %v5231 = vld [vmem:[%s1760 + $0xc] sm:$0x7]
      %v5232 = vld [vmem:[%s1760] sm:$0x6]
      %v5233 = vld [vmem:[%s1760 + $0x4] sm:$0x6]
      %v5234 = vld [vmem:[%s1760 + $0x8] sm:$0x6]
      %v5235 = vld [vmem:[%s1760 + $0xc] sm:$0x6]
      %s5236 = scalar_lea.vmem [#allocation5], 8
      %v5237 = vld [vmem:[%s5236] sm:$0x3]
      %v5238 = vld [vmem:[%s5236 + $0x4] sm:$0x3]
      %v5239 = vld [vmem:[%s5236 + $0x8] sm:$0x3]
      %v5240 = vld [vmem:[%s5236 + $0xc] sm:$0x3]
      %v5241 = vld [vmem:[%s5236] sm:$0x7]
      %v5242 = vld [vmem:[%s5236 + $0x4] sm:$0x7]
      %v5243 = vld [vmem:[%s5236 + $0x8] sm:$0x7]
      %v5244 = vld [vmem:[%s5236 + $0xc] sm:$0x7]
      %v5245 = vld [vmem:[%s5236] sm:$0x6]
      %v5246 = vld [vmem:[%s5236 + $0x4] sm:$0x6]
      %v5247 = vld [vmem:[%s5236 + $0x8] sm:$0x6]
      %v5248 = vld [vmem:[%s5236 + $0xc] sm:$0x6]
      %v5253 = vunpack.c.l.b16 %v5216
      %v5254 = vunpack.c.l.b16 %v5217
      %v5255 = vunpack.c.l.b16 %v5218
      %v5256 = vunpack.c.l.b16 %v5219
      %v5257 = vpack.c.b16 %v5253, %v5253
      %v5258 = vpack.c.b16 %v5254, %v5254
      %v5259 = vpack.c.b16 %v5255, %v5255
      %v5260 = vpack.c.b16 %v5256, %v5256
      %v5262 = vshrl.u32 %v5257, 16
      %v5264 = vshll.u32 %v5257, 16
      %v5266 = vrot.slane %v5264, 1
      %v5267 = vor.u32 %v5262, %v5266
      %v5269 = vshrl.u32 %v5258, 16
      %v5271 = vshll.u32 %v5258, 16
      %v5273 = vrot.slane %v5271, 1
      %v5274 = vor.u32 %v5269, %v5273
      %v5276 = vshrl.u32 %v5259, 16
      %v5278 = vshll.u32 %v5259, 16
      %v5280 = vrot.slane %v5278, 1
      %v5281 = vor.u32 %v5276, %v5280
      %v5283 = vshrl.u32 %v5260, 16
      %v5285 = vshll.u32 %v5260, 16
      %v5287 = vrot.slane %v5285, 1
      %v5288 = vor.u32 %v5283, %v5287
      %5289 = vrot.lane.b32.xlu0 %v5267, 2
      %v5290 = vpop.permute.xlu0 %5289
      %5291 = vrot.lane.b32.xlu0 %v5274, 2
      %v5292 = vpop.permute.xlu0 %5291
      %5293 = vrot.lane.b32.xlu0 %v5281, 2
      %v5294 = vpop.permute.xlu0 %5293
      %5295 = vrot.lane.b32.xlu0 %v5288, 2
      %v5296 = vpop.permute.xlu0 %5295
      %v5301 = vunpack.c.l.b16 %v5220
      %v5302 = vunpack.c.l.b16 %v5221
      %v5303 = vunpack.c.l.b16 %v5222
      %v5304 = vunpack.c.l.b16 %v5223
      %v5305 = vpack.c.b16 %v5301, %v5301
      %v5306 = vpack.c.b16 %v5302, %v5302
      %v5307 = vpack.c.b16 %v5303, %v5303
      %v5308 = vpack.c.b16 %v5304, %v5304
      %v5309 = vrot.slane %v5305, 1
      %v5310 = vrot.slane %v5306, 1
      %v5311 = vrot.slane %v5307, 1
      %v5312 = vrot.slane %v5308, 1
      %5313 = vrot.lane.b32.xlu0 %v5309, 4
      %v5314 = vpop.permute.xlu0 %5313
      %5315 = vrot.lane.b32.xlu0 %v5310, 4
      %v5316 = vpop.permute.xlu0 %5315
      %5317 = vrot.lane.b32.xlu0 %v5311, 4
      %v5318 = vpop.permute.xlu0 %5317
      %5319 = vrot.lane.b32.xlu0 %v5312, 4
      %v5320 = vpop.permute.xlu0 %5319
      %v5325 = vunpack.c.l.b16 %v5224
      %v5326 = vunpack.c.l.b16 %v5225
      %v5327 = vunpack.c.l.b16 %v5226
      %v5328 = vunpack.c.l.b16 %v5227
      %v5329 = vpack.c.b16 %v5325, %v5325
      %v5330 = vpack.c.b16 %v5326, %v5326
      %v5331 = vpack.c.b16 %v5327, %v5327
      %v5332 = vpack.c.b16 %v5328, %v5328
      %5333 = vrot.lane.b32.xlu0 %v5329, 6
      %v5334 = vpop.permute.xlu0 %5333
      %5335 = vrot.lane.b32.xlu0 %v5330, 6
      %v5336 = vpop.permute.xlu0 %5335
      %5337 = vrot.lane.b32.xlu0 %v5331, 6
      %v5338 = vpop.permute.xlu0 %5337
      %5339 = vrot.lane.b32.xlu0 %v5332, 6
      %v5340 = vpop.permute.xlu0 %5339
      %v5345 = vunpack.c.l.b16 %v5228
      %v5346 = vunpack.c.l.b16 %v5229
      %v5347 = vunpack.c.l.b16 %v5230
      %v5348 = vunpack.c.l.b16 %v5231
      %v5349 = vpack.c.b16 %v5345, %v5345
      %v5350 = vpack.c.b16 %v5346, %v5346
      %v5351 = vpack.c.b16 %v5347, %v5347
      %v5352 = vpack.c.b16 %v5348, %v5348
      %v5354 = vshrl.u32 %v5349, 16
      %v5356 = vshll.u32 %v5349, 16
      %v5358 = vrot.slane %v5356, 1
      %v5359 = vor.u32 %v5354, %v5358
      %v5361 = vshrl.u32 %v5350, 16
      %v5363 = vshll.u32 %v5350, 16
      %v5365 = vrot.slane %v5363, 1
      %v5366 = vor.u32 %v5361, %v5365
      %v5368 = vshrl.u32 %v5351, 16
      %v5370 = vshll.u32 %v5351, 16
      %v5372 = vrot.slane %v5370, 1
      %v5373 = vor.u32 %v5368, %v5372
      %v5375 = vshrl.u32 %v5352, 16
      %v5377 = vshll.u32 %v5352, 16
      %v5379 = vrot.slane %v5377, 1
      %v5380 = vor.u32 %v5375, %v5379
      %5381 = vrot.lane.b32.xlu0 %v5359, 8
      %v5382 = vpop.permute.xlu0 %5381
      %5383 = vrot.lane.b32.xlu0 %v5366, 8
      %v5384 = vpop.permute.xlu0 %5383
      %5385 = vrot.lane.b32.xlu0 %v5373, 8
      %v5386 = vpop.permute.xlu0 %5385
      %5387 = vrot.lane.b32.xlu0 %v5380, 8
      %v5388 = vpop.permute.xlu0 %5387
      %v5393 = vunpack.c.l.b16 %v5232
      %v5394 = vunpack.c.l.b16 %v5233
      %v5395 = vunpack.c.l.b16 %v5234
      %v5396 = vunpack.c.l.b16 %v5235
      %v5397 = vpack.c.b16 %v5393, %v5393
      %v5398 = vpack.c.b16 %v5394, %v5394
      %v5399 = vpack.c.b16 %v5395, %v5395
      %v5400 = vpack.c.b16 %v5396, %v5396
      %v5401 = vrot.slane %v5397, 1
      %v5402 = vrot.slane %v5398, 1
      %v5403 = vrot.slane %v5399, 1
      %v5404 = vrot.slane %v5400, 1
      %5405 = vrot.lane.b32.xlu0 %v5401, 10
      %v5406 = vpop.permute.xlu0 %5405
      %5407 = vrot.lane.b32.xlu0 %v5402, 10
      %v5408 = vpop.permute.xlu0 %5407
      %5409 = vrot.lane.b32.xlu0 %v5403, 10
      %v5410 = vpop.permute.xlu0 %5409
      %5411 = vrot.lane.b32.xlu0 %v5404, 10
      %v5412 = vpop.permute.xlu0 %5411
      %v5417 = vunpack.c.l.b16 %v5237
      %v5418 = vunpack.c.l.b16 %v5238
      %v5419 = vunpack.c.l.b16 %v5239
      %v5420 = vunpack.c.l.b16 %v5240
      %v5421 = vpack.c.b16 %v5417, %v5417
      %v5422 = vpack.c.b16 %v5418, %v5418
      %v5423 = vpack.c.b16 %v5419, %v5419
      %v5424 = vpack.c.b16 %v5420, %v5420
      %5425 = vrot.lane.b32.xlu0 %v5421, 12
      %v5426 = vpop.permute.xlu0 %5425
      %5427 = vrot.lane.b32.xlu0 %v5422, 12
      %v5428 = vpop.permute.xlu0 %5427
      %5429 = vrot.lane.b32.xlu0 %v5423, 12
      %v5430 = vpop.permute.xlu0 %5429
      %5431 = vrot.lane.b32.xlu0 %v5424, 12
      %v5432 = vpop.permute.xlu0 %5431
      %v5437 = vunpack.c.l.b16 %v5241
      %v5438 = vunpack.c.l.b16 %v5242
      %v5439 = vunpack.c.l.b16 %v5243
      %v5440 = vunpack.c.l.b16 %v5244
      %v5441 = vpack.c.b16 %v5437, %v5437
      %v5442 = vpack.c.b16 %v5438, %v5438
      %v5443 = vpack.c.b16 %v5439, %v5439
      %v5444 = vpack.c.b16 %v5440, %v5440
      %v5446 = vshrl.u32 %v5441, 16
      %v5448 = vshll.u32 %v5441, 16
      %v5450 = vrot.slane %v5448, 1
      %v5451 = vor.u32 %v5446, %v5450
      %v5453 = vshrl.u32 %v5442, 16
      %v5455 = vshll.u32 %v5442, 16
      %v5457 = vrot.slane %v5455, 1
      %v5458 = vor.u32 %v5453, %v5457
      %v5460 = vshrl.u32 %v5443, 16
      %v5462 = vshll.u32 %v5443, 16
      %v5464 = vrot.slane %v5462, 1
      %v5465 = vor.u32 %v5460, %v5464
      %v5467 = vshrl.u32 %v5444, 16
      %v5469 = vshll.u32 %v5444, 16
      %v5471 = vrot.slane %v5469, 1
      %v5472 = vor.u32 %v5467, %v5471
      %5473 = vrot.lane.b32.xlu0 %v5451, 14
      %v5474 = vpop.permute.xlu0 %5473
      %5475 = vrot.lane.b32.xlu0 %v5458, 14
      %v5476 = vpop.permute.xlu0 %5475
      %5477 = vrot.lane.b32.xlu0 %v5465, 14
      %v5478 = vpop.permute.xlu0 %5477
      %5479 = vrot.lane.b32.xlu0 %v5472, 14
      %v5480 = vpop.permute.xlu0 %5479
      %v5485 = vunpack.c.l.b16 %v5245
      %v5486 = vunpack.c.l.b16 %v5246
      %v5487 = vunpack.c.l.b16 %v5247
      %v5488 = vunpack.c.l.b16 %v5248
      %v5489 = vpack.c.b16 %v5485, %v5485
      %v5490 = vpack.c.b16 %v5486, %v5486
      %v5491 = vpack.c.b16 %v5487, %v5487
      %v5492 = vpack.c.b16 %v5488, %v5488
      %v5493 = vrot.slane %v5489, 1
      %v5494 = vrot.slane %v5490, 1
      %v5495 = vrot.slane %v5491, 1
      %v5496 = vrot.slane %v5492, 1
      %5497 = vrot.lane.b32.xlu0 %v5493, 16
      %v5498 = vpop.permute.xlu0 %5497
      %5499 = vrot.lane.b32.xlu0 %v5494, 16
      %v5500 = vpop.permute.xlu0 %5499
      %5501 = vrot.lane.b32.xlu0 %v5495, 16
      %v5502 = vpop.permute.xlu0 %5501
      %5503 = vrot.lane.b32.xlu0 %v5496, 16
      %v5504 = vpop.permute.xlu0 %5503
      %v5507 = vsel %vm1678, %v5212, %v5290
      %v5510 = vsel %vm1678, %v5213, %v5292
      %v5513 = vsel %vm1678, %v5214, %v5294
      %v5516 = vsel %vm1678, %v5215, %v5296
      %v5518 = vsel %vm1420, %v5507, %v5314
      %v5520 = vsel %vm1420, %v5510, %v5316
      %v5522 = vsel %vm1420, %v5513, %v5318
      %v5524 = vsel %vm1420, %v5516, %v5320
      %v5526 = vsel %vm5113, %v5518, %v5334
      %v5528 = vsel %vm5113, %v5520, %v5336
      %v5530 = vsel %vm5113, %v5522, %v5338
      %v5532 = vsel %vm5113, %v5524, %v5340
      %v5534 = vsel %vm3504, %v5526, %v5382
      %v5536 = vsel %vm3504, %v5528, %v5384
      %v5538 = vsel %vm3504, %v5530, %v5386
      %v5540 = vsel %vm3504, %v5532, %v5388
      %v5542 = vsel %vm5146, %v5534, %v5406
      %v5544 = vsel %vm5146, %v5536, %v5408
      %v5546 = vsel %vm5146, %v5538, %v5410
      %v5548 = vsel %vm5146, %v5540, %v5412
      %v5550 = vsel %vm3537, %v5542, %v5426
      %v5552 = vsel %vm3537, %v5544, %v5428
      %v5554 = vsel %vm3537, %v5546, %v5430
      %v5556 = vsel %vm3537, %v5548, %v5432
      %v5558 = vsel %vm5179, %v5550, %v5474
      %v5560 = vsel %vm5179, %v5552, %v5476
      %v5562 = vsel %vm5179, %v5554, %v5478
      %v5564 = vsel %vm5179, %v5556, %v5480
      %v5566 = vsel %vm3570, %v5558, %v5498
      %v5568 = vsel %vm3570, %v5560, %v5500
      %v5570 = vsel %vm3570, %v5562, %v5502
      %v5572 = vsel %vm3570, %v5564, %v5504
      %v5573 = vld [vmem:[#allocation6] sm:$0x3]
      %v5574 = vld [vmem:[#allocation6 + $0x4] sm:$0x3]
      %v5575 = vld [vmem:[#allocation6 + $0x8] sm:$0x3]
      %v5576 = vld [vmem:[#allocation6 + $0xc] sm:$0x3]
      %v5577 = vld [vmem:[#allocation6] sm:$0x7]
      %v5578 = vld [vmem:[#allocation6 + $0x4] sm:$0x7]
      %v5579 = vld [vmem:[#allocation6 + $0x8] sm:$0x7]
      %v5580 = vld [vmem:[#allocation6 + $0xc] sm:$0x7]
      %v5581 = vld [vmem:[#allocation6] sm:$0x6]
      %v5582 = vld [vmem:[#allocation6 + $0x4] sm:$0x6]
      %v5583 = vld [vmem:[#allocation6 + $0x8] sm:$0x6]
      %v5584 = vld [vmem:[#allocation6 + $0xc] sm:$0x6]
      %v5585 = vld [vmem:[%s1355] sm:$0x3]
      %v5586 = vld [vmem:[%s1355 + $0x4] sm:$0x3]
      %v5587 = vld [vmem:[%s1355 + $0x8] sm:$0x3]
      %v5588 = vld [vmem:[%s1355 + $0xc] sm:$0x3]
      %v5589 = vld [vmem:[%s1355] sm:$0x7]
      %v5590 = vld [vmem:[%s1355 + $0x4] sm:$0x7]
      %v5591 = vld [vmem:[%s1355 + $0x8] sm:$0x7]
      %v5592 = vld [vmem:[%s1355 + $0xc] sm:$0x7]
      %v5593 = vld [vmem:[%s1355] sm:$0x6]
      %v5594 = vld [vmem:[%s1355 + $0x4] sm:$0x6]
      %v5595 = vld [vmem:[%s1355 + $0x8] sm:$0x6]
      %v5596 = vld [vmem:[%s1355 + $0xc] sm:$0x6]
      %s5597 = scalar_lea.vmem [#allocation6], 8
      %v5598 = vld [vmem:[%s5597] sm:$0x3]
      %v5599 = vld [vmem:[%s5597 + $0x4] sm:$0x3]
      %v5600 = vld [vmem:[%s5597 + $0x8] sm:$0x3]
      %v5601 = vld [vmem:[%s5597 + $0xc] sm:$0x3]
      %v5602 = vld [vmem:[%s5597] sm:$0x7]
      %v5603 = vld [vmem:[%s5597 + $0x4] sm:$0x7]
      %v5604 = vld [vmem:[%s5597 + $0x8] sm:$0x7]
      %v5605 = vld [vmem:[%s5597 + $0xc] sm:$0x7]
      %v5606 = vld [vmem:[%s5597] sm:$0x6]
      %v5607 = vld [vmem:[%s5597 + $0x4] sm:$0x6]
      %v5608 = vld [vmem:[%s5597 + $0x8] sm:$0x6]
      %v5609 = vld [vmem:[%s5597 + $0xc] sm:$0x6]
      %v5614 = vunpack.c.l.b16 %v5577
      %v5615 = vunpack.c.l.b16 %v5578
      %v5616 = vunpack.c.l.b16 %v5579
      %v5617 = vunpack.c.l.b16 %v5580
      %v5618 = vpack.c.b16 %v5614, %v5614
      %v5619 = vpack.c.b16 %v5615, %v5615
      %v5620 = vpack.c.b16 %v5616, %v5616
      %v5621 = vpack.c.b16 %v5617, %v5617
      %v5623 = vshrl.u32 %v5618, 16
      %v5625 = vshll.u32 %v5618, 16
      %v5627 = vrot.slane %v5625, 1
      %v5628 = vor.u32 %v5623, %v5627
      %v5630 = vshrl.u32 %v5619, 16
      %v5632 = vshll.u32 %v5619, 16
      %v5634 = vrot.slane %v5632, 1
      %v5635 = vor.u32 %v5630, %v5634
      %v5637 = vshrl.u32 %v5620, 16
      %v5639 = vshll.u32 %v5620, 16
      %v5641 = vrot.slane %v5639, 1
      %v5642 = vor.u32 %v5637, %v5641
      %v5644 = vshrl.u32 %v5621, 16
      %v5646 = vshll.u32 %v5621, 16
      %v5648 = vrot.slane %v5646, 1
      %v5649 = vor.u32 %v5644, %v5648
      %5650 = vrot.lane.b32.xlu0 %v5628, 2
      %v5651 = vpop.permute.xlu0 %5650
      %5652 = vrot.lane.b32.xlu0 %v5635, 2
      %v5653 = vpop.permute.xlu0 %5652
      %5654 = vrot.lane.b32.xlu0 %v5642, 2
      %v5655 = vpop.permute.xlu0 %5654
      %5656 = vrot.lane.b32.xlu0 %v5649, 2
      %v5657 = vpop.permute.xlu0 %5656
      %v5662 = vunpack.c.l.b16 %v5581
      %v5663 = vunpack.c.l.b16 %v5582
      %v5664 = vunpack.c.l.b16 %v5583
      %v5665 = vunpack.c.l.b16 %v5584
      %v5666 = vpack.c.b16 %v5662, %v5662
      %v5667 = vpack.c.b16 %v5663, %v5663
      %v5668 = vpack.c.b16 %v5664, %v5664
      %v5669 = vpack.c.b16 %v5665, %v5665
      %v5670 = vrot.slane %v5666, 1
      %v5671 = vrot.slane %v5667, 1
      %v5672 = vrot.slane %v5668, 1
      %v5673 = vrot.slane %v5669, 1
      %5674 = vrot.lane.b32.xlu0 %v5670, 4
      %v5675 = vpop.permute.xlu0 %5674
      %5676 = vrot.lane.b32.xlu0 %v5671, 4
      %v5677 = vpop.permute.xlu0 %5676
      %5678 = vrot.lane.b32.xlu0 %v5672, 4
      %v5679 = vpop.permute.xlu0 %5678
      %5680 = vrot.lane.b32.xlu0 %v5673, 4
      %v5681 = vpop.permute.xlu0 %5680
      %v5686 = vunpack.c.l.b16 %v5585
      %v5687 = vunpack.c.l.b16 %v5586
      %v5688 = vunpack.c.l.b16 %v5587
      %v5689 = vunpack.c.l.b16 %v5588
      %v5690 = vpack.c.b16 %v5686, %v5686
      %v5691 = vpack.c.b16 %v5687, %v5687
      %v5692 = vpack.c.b16 %v5688, %v5688
      %v5693 = vpack.c.b16 %v5689, %v5689
      %5694 = vrot.lane.b32.xlu0 %v5690, 6
      %v5695 = vpop.permute.xlu0 %5694
      %5696 = vrot.lane.b32.xlu0 %v5691, 6
      %v5697 = vpop.permute.xlu0 %5696
      %5698 = vrot.lane.b32.xlu0 %v5692, 6
      %v5699 = vpop.permute.xlu0 %5698
      %5700 = vrot.lane.b32.xlu0 %v5693, 6
      %v5701 = vpop.permute.xlu0 %5700
      %v5706 = vunpack.c.l.b16 %v5589
      %v5707 = vunpack.c.l.b16 %v5590
      %v5708 = vunpack.c.l.b16 %v5591
      %v5709 = vunpack.c.l.b16 %v5592
      %v5710 = vpack.c.b16 %v5706, %v5706
      %v5711 = vpack.c.b16 %v5707, %v5707
      %v5712 = vpack.c.b16 %v5708, %v5708
      %v5713 = vpack.c.b16 %v5709, %v5709
      %v5715 = vshrl.u32 %v5710, 16
      %v5717 = vshll.u32 %v5710, 16
      %v5719 = vrot.slane %v5717, 1
      %v5720 = vor.u32 %v5715, %v5719
      %v5722 = vshrl.u32 %v5711, 16
      %v5724 = vshll.u32 %v5711, 16
      %v5726 = vrot.slane %v5724, 1
      %v5727 = vor.u32 %v5722, %v5726
      %v5729 = vshrl.u32 %v5712, 16
      %v5731 = vshll.u32 %v5712, 16
      %v5733 = vrot.slane %v5731, 1
      %v5734 = vor.u32 %v5729, %v5733
      %v5736 = vshrl.u32 %v5713, 16
      %v5738 = vshll.u32 %v5713, 16
      %v5740 = vrot.slane %v5738, 1
      %v5741 = vor.u32 %v5736, %v5740
      %5742 = vrot.lane.b32.xlu0 %v5720, 8
      %v5743 = vpop.permute.xlu0 %5742
      %5744 = vrot.lane.b32.xlu0 %v5727, 8
      %v5745 = vpop.permute.xlu0 %5744
      %5746 = vrot.lane.b32.xlu0 %v5734, 8
      %v5747 = vpop.permute.xlu0 %5746
      %5748 = vrot.lane.b32.xlu0 %v5741, 8
      %v5749 = vpop.permute.xlu0 %5748
      %v5754 = vunpack.c.l.b16 %v5593
      %v5755 = vunpack.c.l.b16 %v5594
      %v5756 = vunpack.c.l.b16 %v5595
      %v5757 = vunpack.c.l.b16 %v5596
      %v5758 = vpack.c.b16 %v5754, %v5754
      %v5759 = vpack.c.b16 %v5755, %v5755
      %v5760 = vpack.c.b16 %v5756, %v5756
      %v5761 = vpack.c.b16 %v5757, %v5757
      %v5762 = vrot.slane %v5758, 1
      %v5763 = vrot.slane %v5759, 1
      %v5764 = vrot.slane %v5760, 1
      %v5765 = vrot.slane %v5761, 1
      %5766 = vrot.lane.b32.xlu0 %v5762, 10
      %v5767 = vpop.permute.xlu0 %5766
      %5768 = vrot.lane.b32.xlu0 %v5763, 10
      %v5769 = vpop.permute.xlu0 %5768
      %5770 = vrot.lane.b32.xlu0 %v5764, 10
      %v5771 = vpop.permute.xlu0 %5770
      %5772 = vrot.lane.b32.xlu0 %v5765, 10
      %v5773 = vpop.permute.xlu0 %5772
      %v5778 = vunpack.c.l.b16 %v5598
      %v5779 = vunpack.c.l.b16 %v5599
      %v5780 = vunpack.c.l.b16 %v5600
      %v5781 = vunpack.c.l.b16 %v5601
      %v5782 = vpack.c.b16 %v5778, %v5778
      %v5783 = vpack.c.b16 %v5779, %v5779
      %v5784 = vpack.c.b16 %v5780, %v5780
      %v5785 = vpack.c.b16 %v5781, %v5781
      %5786 = vrot.lane.b32.xlu0 %v5782, 12
      %v5787 = vpop.permute.xlu0 %5786
      %5788 = vrot.lane.b32.xlu0 %v5783, 12
      %v5789 = vpop.permute.xlu0 %5788
      %5790 = vrot.lane.b32.xlu0 %v5784, 12
      %v5791 = vpop.permute.xlu0 %5790
      %5792 = vrot.lane.b32.xlu0 %v5785, 12
      %v5793 = vpop.permute.xlu0 %5792
      %v5798 = vunpack.c.l.b16 %v5602
      %v5799 = vunpack.c.l.b16 %v5603
      %v5800 = vunpack.c.l.b16 %v5604
      %v5801 = vunpack.c.l.b16 %v5605
      %v5802 = vpack.c.b16 %v5798, %v5798
      %v5803 = vpack.c.b16 %v5799, %v5799
      %v5804 = vpack.c.b16 %v5800, %v5800
      %v5805 = vpack.c.b16 %v5801, %v5801
      %v5807 = vshrl.u32 %v5802, 16
      %v5809 = vshll.u32 %v5802, 16
      %v5811 = vrot.slane %v5809, 1
      %v5812 = vor.u32 %v5807, %v5811
      %v5814 = vshrl.u32 %v5803, 16
      %v5816 = vshll.u32 %v5803, 16
      %v5818 = vrot.slane %v5816, 1
      %v5819 = vor.u32 %v5814, %v5818
      %v5821 = vshrl.u32 %v5804, 16
      %v5823 = vshll.u32 %v5804, 16
      %v5825 = vrot.slane %v5823, 1
      %v5826 = vor.u32 %v5821, %v5825
      %v5828 = vshrl.u32 %v5805, 16
      %v5830 = vshll.u32 %v5805, 16
      %v5832 = vrot.slane %v5830, 1
      %v5833 = vor.u32 %v5828, %v5832
      %5834 = vrot.lane.b32.xlu0 %v5812, 14
      %v5835 = vpop.permute.xlu0 %5834
      %5836 = vrot.lane.b32.xlu0 %v5819, 14
      %v5837 = vpop.permute.xlu0 %5836
      %5838 = vrot.lane.b32.xlu0 %v5826, 14
      %v5839 = vpop.permute.xlu0 %5838
      %5840 = vrot.lane.b32.xlu0 %v5833, 14
      %v5841 = vpop.permute.xlu0 %5840
      %v5846 = vunpack.c.l.b16 %v5606
      %v5847 = vunpack.c.l.b16 %v5607
      %v5848 = vunpack.c.l.b16 %v5608
      %v5849 = vunpack.c.l.b16 %v5609
      %v5850 = vpack.c.b16 %v5846, %v5846
      %v5851 = vpack.c.b16 %v5847, %v5847
      %v5852 = vpack.c.b16 %v5848, %v5848
      %v5853 = vpack.c.b16 %v5849, %v5849
      %v5854 = vrot.slane %v5850, 1
      %v5855 = vrot.slane %v5851, 1
      %v5856 = vrot.slane %v5852, 1
      %v5857 = vrot.slane %v5853, 1
      %5858 = vrot.lane.b32.xlu0 %v5854, 16
      %v5859 = vpop.permute.xlu0 %5858
      %5860 = vrot.lane.b32.xlu0 %v5855, 16
      %v5861 = vpop.permute.xlu0 %5860
      %5862 = vrot.lane.b32.xlu0 %v5856, 16
      %v5863 = vpop.permute.xlu0 %5862
      %5864 = vrot.lane.b32.xlu0 %v5857, 16
      %v5865 = vpop.permute.xlu0 %5864
      %v5868 = vsel %vm1678, %v5573, %v5651
      %v5871 = vsel %vm1678, %v5574, %v5653
      %v5874 = vsel %vm1678, %v5575, %v5655
      %v5877 = vsel %vm1678, %v5576, %v5657
      %v5879 = vsel %vm1420, %v5868, %v5675
      %v5881 = vsel %vm1420, %v5871, %v5677
      %v5883 = vsel %vm1420, %v5874, %v5679
      %v5885 = vsel %vm1420, %v5877, %v5681
      %v5887 = vsel %vm5113, %v5879, %v5695
      %v5889 = vsel %vm5113, %v5881, %v5697
      %v5891 = vsel %vm5113, %v5883, %v5699
      %v5893 = vsel %vm5113, %v5885, %v5701
      %v5895 = vsel %vm3504, %v5887, %v5743
      %v5897 = vsel %vm3504, %v5889, %v5745
      %v5899 = vsel %vm3504, %v5891, %v5747
      %v5901 = vsel %vm3504, %v5893, %v5749
      %v5903 = vsel %vm5146, %v5895, %v5767
      %v5905 = vsel %vm5146, %v5897, %v5769
      %v5907 = vsel %vm5146, %v5899, %v5771
      %v5909 = vsel %vm5146, %v5901, %v5773
      %v5911 = vsel %vm3537, %v5903, %v5787
      %v5913 = vsel %vm3537, %v5905, %v5789
      %v5915 = vsel %vm3537, %v5907, %v5791
      %v5917 = vsel %vm3537, %v5909, %v5793
      %v5919 = vsel %vm5179, %v5911, %v5835
      %v5921 = vsel %vm5179, %v5913, %v5837
      %v5923 = vsel %vm5179, %v5915, %v5839
      %v5925 = vsel %vm5179, %v5917, %v5841
      %v5927 = vsel %vm3570, %v5919, %v5859
      %v5929 = vsel %vm3570, %v5921, %v5861
      %v5931 = vsel %vm3570, %v5923, %v5863
      %v5933 = vsel %vm3570, %v5925, %v5865
      %v5934 = vld [vmem:[%s3] sm:$0x3]
      %v5935 = vld [vmem:[%s4] sm:$0x1]
      %v5936 = vld [vmem:[%s5] sm:$0x7]
      %v5945 = vunpack.c.l.b16 %v5197
      %v5946 = vunpack.c.l.b16 %v5199
      %v5947 = vunpack.c.l.b16 %v5201
      %v5948 = vunpack.c.l.b16 %v5203
      %v5949 = vunpack.c.l.b16 %v5205
      %v5950 = vunpack.c.l.b16 %v5207
      %v5951 = vunpack.c.l.b16 %v5209
      %v5952 = vunpack.c.l.b16 %v5211
      %v5953 = vpack.c.b16 %v5946, %v5945
      %v5954 = vpack.c.b16 %v5948, %v5947
      %v5955 = vpack.c.b16 %v5950, %v5949
      %v5956 = vpack.c.b16 %v5952, %v5951
      %vm5957 = vcmask 146432
      %v5959 = vsel %vm5957, %v5936, 0
      %v5962 = vsel %vm5957, %v5953, 0
      %v5965 = vsel %vm5957, %v5954, 0
      %v5968 = vsel %vm5957, %v5955, 0
      %v5971 = vsel %vm5957, %v5956, 0
      %5973 = vmatprep.subr.bf16.mxu0 0
      %5974 = vmatpush1.bf16.xpose.msra.mxu0 %v5962
      %5975 = vmatprep.subr.bf16.mxu0 0
      %5976 = vmatpush1.bf16.xpose.msra.mxu0 %v5965
      %5977 = vmatprep.subr.bf16.mxu0 0
      %5978 = vmatpush1.bf16.xpose.msra.mxu0 %v5968
      %5979 = vmatprep.subr.bf16.mxu0 0
      %5980 = vmatpush1.bf16.xpose.msra.mxu0 %v5971
      %5981 = vmatprep.subr.bf16.mxu0 0
      %5982 = vmatpush1.bf16.xpose.msra.mxu0 0
      %5983 = vmatprep.subr.bf16.mxu0 0
      %5984 = vmatpush1.bf16.xpose.msra.mxu0 0
      %5985 = vmatprep.subr.bf16.mxu0 0
      %5986 = vmatpush1.bf16.xpose.msra.mxu0 0
      %5987 = vmatprep.subr.bf16.mxu0 0
      %5988 = vmatpush1.bf16.xpose.msra.mxu0 0
      %5989 = vmatprep.subr.bf16.mxu0 0
      %5990 = vmatpush1.bf16.xpose.msra.mxu0 0
      %5991 = vmatprep.subr.bf16.mxu0 0
      %5992 = vmatpush1.bf16.xpose.msra.mxu0 0
      %5993 = vmatprep.subr.bf16.mxu0 0
      %5994 = vmatpush1.bf16.xpose.msra.mxu0 0
      %5995 = vmatprep.subr.bf16.mxu0 0
      %5996 = vmatpush1.bf16.xpose.msra.mxu0 0
      %5997 = vmatprep.subr.bf16.mxu0 0
      %5998 = vmatpush1.bf16.xpose.msra.mxu0 0
      %5999 = vmatprep.subr.bf16.mxu0 0
      %6000 = vmatpush1.bf16.xpose.msra.mxu0 0
      %6001 = vmatprep.subr.bf16.mxu0 0
      %6002 = vmatpush1.bf16.xpose.msra.mxu0 0
      %6003 = vmatprep.subr.bf16.mxu0 0
      %6004 = vmatpush1.bf16.xpose.msra.mxu0 0
      %6005 = vmatprep.mubr.bf16.mxu0 0
      %6006 = vmatmul.mubr.bf16.gmra.mrb[0].mxu0 %v5959
      %v6007 = vpop.f32.mrb[0].mxu0
      %v6008 = vadd.f32 0.0, %v6007
      %v6009 = vpop.f32.mrb[0].mxu0
      %v6010 = vpop.f32.mrb[0].mxu0
      %v6011 = vpop.f32.mrb[0].mxu0
      %6012 = vdwg.mxu0
      %v6013 = vld [vmem:[%s6] sm:$0x1]
      %v6014 = vld [vmem:[%s7] sm:$0x3]
      %v6019 = vcombine.low %v5927, %v5929
      %v6020 = vcombine.low %v5931, %v5933
      %v6022 = vunpack.c.l.s4 1983009808
      %v6023 = vunpack.c.0.s8 %v6022
      %v6024 = vlaneseq
      %v6025 = vshrl.u32 %v6024, 7
      %v6026 = vsub.s32 %v6023, %v6025
      %v6027 = vrot.slane %v6019, %v6026
      %v6029 = vunpack.c.l.s4 1983009808
      %v6030 = vunpack.c.0.s8 %v6029
      %v6031 = vlaneseq
      %v6032 = vshrl.u32 %v6031, 7
      %v6033 = vsub.s32 %v6030, %v6032
      %v6034 = vrot.slane %v6020, %v6033
      %v6035 = vcombine.low %v6027, %v6034
      %v6037 = vsel %vm5957, %v6014, 0
      %v6040 = vsel %vm5957, %v6035, 0
      %6042 = vmatprep.subr.bf16.mxu0 0
      %6043 = vmatpush1.bf16.xpose.msra.mxu0 %v6040
      %6044 = vmatprep.subr.bf16.mxu0 0
      %6045 = vmatpush1.bf16.xpose.msra.mxu0 0
      %6046 = vmatprep.subr.bf16.mxu0 0
      %6047 = vmatpush1.bf16.xpose.msra.mxu0 0
      %6048 = vmatprep.subr.bf16.mxu0 0
      %6049 = vmatpush1.bf16.xpose.msra.mxu0 0
      %6050 = vmatprep.subr.bf16.mxu0 0
      %6051 = vmatpush1.bf16.xpose.msra.mxu0 0
      %6052 = vmatprep.subr.bf16.mxu0 0
      %6053 = vmatpush1.bf16.xpose.msra.mxu0 0
      %6054 = vmatprep.subr.bf16.mxu0 0
      %6055 = vmatpush1.bf16.xpose.msra.mxu0 0
      %6056 = vmatprep.subr.bf16.mxu0 0
      %6057 = vmatpush1.bf16.xpose.msra.mxu0 0
      %6058 = vmatprep.subr.bf16.mxu0 0
      %6059 = vmatpush1.bf16.xpose.msra.mxu0 0
      %6060 = vmatprep.subr.bf16.mxu0 0
      %6061 = vmatpush1.bf16.xpose.msra.mxu0 0
      %6062 = vmatprep.subr.bf16.mxu0 0
      %6063 = vmatpush1.bf16.xpose.msra.mxu0 0
      %6064 = vmatprep.subr.bf16.mxu0 0
      %6065 = vmatpush1.bf16.xpose.msra.mxu0 0
      %6066 = vmatprep.subr.bf16.mxu0 0
      %6067 = vmatpush1.bf16.xpose.msra.mxu0 0
      %6068 = vmatprep.subr.bf16.mxu0 0
      %6069 = vmatpush1.bf16.xpose.msra.mxu0 0
      %6070 = vmatprep.subr.bf16.mxu0 0
      %6071 = vmatpush1.bf16.xpose.msra.mxu0 0
      %6072 = vmatprep.subr.bf16.mxu0 0
      %6073 = vmatpush1.bf16.xpose.msra.mxu0 0
      %6074 = vmatprep.mubr.bf16.mxu0 0
      %6075 = vmatmul.mubr.bf16.gmra.mrb[0].mxu0 %v6037
      %v6076 = vpop.f32.mrb[0].mxu0
      %v6077 = vadd.f32 0.0, %v6076
      %v6078 = vpop.f32.mrb[0].mxu0
      %v6079 = vpop.f32.mrb[0].mxu0
      %v6080 = vpop.f32.mrb[0].mxu0
      %6081 = vdwg.mxu0
      %v6082 = vld [vmem:[%s8] sm:$0xff]
      %v6083 = vld [vmem:[%s8 + $0x8] sm:$0xff]
      %v6084 = vld [vmem:[%s8 + $0x10] sm:$0xff]
      %v6085 = vld [vmem:[%s8 + $0x18] sm:$0xff]
      %v6086 = vld [vmem:[%s8 + $0x20] sm:$0xff]
      %v6087 = vld [vmem:[%s8 + $0x28] sm:$0xff]
      %v6088 = vld [vmem:[%s8 + $0x30] sm:$0xff]
      %v6089 = vld [vmem:[%s8 + $0x38] sm:$0xff]
      %v6090 = vld [vmem:[%s8 + $0x40] sm:$0xff]
      %v6091 = vld [vmem:[%s8 + $0x48] sm:$0xff]
      %v6092 = vld [vmem:[%s8 + $0x50] sm:$0xff]
      %v6093 = vld [vmem:[%s8 + $0x58] sm:$0xff]
      %v6094 = vld [vmem:[%s8 + $0x60] sm:$0xff]
      %v6095 = vld [vmem:[%s8 + $0x68] sm:$0xff]
      %v6096 = vld [vmem:[%s8 + $0x70] sm:$0xff]
      %v6097 = vld [vmem:[%s8 + $0x78] sm:$0xff]
      %vm6098 = vcmask 523264
      %v6100 = vsel %vm6098, %v6008, 0
      %6102 = vmatprep.subr.mxu0 %v6083
      %6103 = vmatpush1.msra.mxu0 %v6082
      %6104 = vmatprep.subr.mxu0 %v6085
      %6105 = vmatpush1.msra.mxu0 %v6084
      %6106 = vmatprep.subr.mxu0 %v6087
      %6107 = vmatpush1.msra.mxu0 %v6086
      %6108 = vmatprep.subr.mxu0 %v6089
      %6109 = vmatpush1.msra.mxu0 %v6088
      %6110 = vmatprep.subr.mxu0 %v6091
      %6111 = vmatpush1.msra.mxu0 %v6090
      %6112 = vmatprep.subr.mxu0 %v6093
      %6113 = vmatpush1.msra.mxu0 %v6092
      %6114 = vmatprep.subr.mxu0 %v6095
      %6115 = vmatpush1.msra.mxu0 %v6094
      %6116 = vmatprep.subr.mxu0 %v6097
      %6117 = vmatpush1.msra.mxu0 %v6096
      %6118 = vmatprep.subr.mxu0 0.0
      %6119 = vmatpush1.msra.mxu0 0.0
      %6120 = vmatprep.subr.mxu0 0.0
      %6121 = vmatpush1.msra.mxu0 0.0
      %6122 = vmatprep.subr.mxu0 0.0
      %6123 = vmatpush1.msra.mxu0 0.0
      %6124 = vmatprep.subr.mxu0 0.0
      %6125 = vmatpush1.msra.mxu0 0.0
      %6126 = vmatprep.subr.mxu0 0.0
      %6127 = vmatpush1.msra.mxu0 0.0
      %6128 = vmatprep.subr.mxu0 0.0
      %6129 = vmatpush1.msra.mxu0 0.0
      %6130 = vmatprep.subr.mxu0 0.0
      %6131 = vmatpush1.msra.mxu0 0.0
      %6132 = vmatprep.subr.mxu0 0.0
      %6133 = vmatpush1.msra.mxu0 0.0
      %6134 = vmatprep.subr.mxu0 0.0
      %6135 = vmatpush1.msra.mxu0 0.0
      %6136 = vmatprep.subr.mxu0 0.0
      %6137 = vmatpush1.msra.mxu0 0.0
      %6138 = vmatprep.subr.mxu0 0.0
      %6139 = vmatpush1.msra.mxu0 0.0
      %6140 = vmatprep.subr.mxu0 0.0
      %6141 = vmatpush1.msra.mxu0 0.0
      %6142 = vmatprep.subr.mxu0 0.0
      %6143 = vmatpush1.msra.mxu0 0.0
      %6144 = vmatprep.subr.mxu0 0.0
      %6145 = vmatpush1.msra.mxu0 0.0
      %6146 = vmatprep.subr.mxu0 0.0
      %6147 = vmatpush1.msra.mxu0 0.0
      %6148 = vmatprep.subr.mxu0 0.0
      %6149 = vmatpush1.msra.mxu0 0.0
      %6150 = vmatprep.subr.mxu0 0.0
      %6151 = vmatpush1.msra.mxu0 0.0
      %6152 = vmatprep.subr.mxu0 0.0
      %6153 = vmatpush1.msra.mxu0 0.0
      %6154 = vmatprep.subr.mxu0 0.0
      %6155 = vmatpush1.msra.mxu0 0.0
      %6156 = vmatprep.subr.mxu0 0.0
      %6157 = vmatpush1.msra.mxu0 0.0
      %6158 = vmatprep.subr.mxu0 0.0
      %6159 = vmatpush1.msra.mxu0 0.0
      %6160 = vmatprep.subr.mxu0 0.0
      %6161 = vmatpush1.msra.mxu0 0.0
      %6162 = vmatprep.subr.mxu0 0.0
      %6163 = vmatpush1.msra.mxu0 0.0
      %6164 = vmatprep.subr.mxu0 0.0
      %6165 = vmatpush1.msra.mxu0 0.0
      %6166 = vmatprep.mubr.f32.mxu0 0.0
      %6167 = vmatmul.mubr.f32.gmra.mrb[0].mxu0 %v6100
      %v6168 = vpop.f32.mrb[0].mxu0
      %v6169 = vadd.f32 0.0, %v6168
      %v6170 = vpop.f32.mrb[0].mxu0
      %v6171 = vadd.f32 0.0, %v6170
      %6172 = vdwg.mxu0
      %v6173 = vld [vmem:[%s9] sm:$0xff]
      %v6174 = vld [vmem:[%s9 + $0x8] sm:$0xff]
      %v6176 = vsel %vm3570, %v6077, 0
      %6178 = vmatprep.subr.mxu0 0.0
      %6179 = vmatpush1.msra.mxu0 %v6173
      %6180 = vmatprep.subr.mxu0 0.0
      %6181 = vmatpush1.msra.mxu0 %v6174
      %6182 = vmatprep.subr.mxu0 0.0
      %6183 = vmatpush1.msra.mxu0 0.0
      %6184 = vmatprep.subr.mxu0 0.0
      %6185 = vmatpush1.msra.mxu0 0.0
      %6186 = vmatprep.subr.mxu0 0.0
      %6187 = vmatpush1.msra.mxu0 0.0
      %6188 = vmatprep.subr.mxu0 0.0
      %6189 = vmatpush1.msra.mxu0 0.0
      %6190 = vmatprep.subr.mxu0 0.0
      %6191 = vmatpush1.msra.mxu0 0.0
      %6192 = vmatprep.subr.mxu0 0.0
      %6193 = vmatpush1.msra.mxu0 0.0
      %6194 = vmatprep.subr.mxu0 0.0
      %6195 = vmatpush1.msra.mxu0 0.0
      %6196 = vmatprep.subr.mxu0 0.0
      %6197 = vmatpush1.msra.mxu0 0.0
      %6198 = vmatprep.subr.mxu0 0.0
      %6199 = vmatpush1.msra.mxu0 0.0
      %6200 = vmatprep.subr.mxu0 0.0
      %6201 = vmatpush1.msra.mxu0 0.0
      %6202 = vmatprep.subr.mxu0 0.0
      %6203 = vmatpush1.msra.mxu0 0.0
      %6204 = vmatprep.subr.mxu0 0.0
      %6205 = vmatpush1.msra.mxu0 0.0
      %6206 = vmatprep.subr.mxu0 0.0
      %6207 = vmatpush1.msra.mxu0 0.0
      %6208 = vmatprep.subr.mxu0 0.0
      %6209 = vmatpush1.msra.mxu0 0.0
      %6210 = vmatprep.subr.mxu0 0.0
      %6211 = vmatpush1.msra.mxu0 0.0
      %6212 = vmatprep.subr.mxu0 0.0
      %6213 = vmatpush1.msra.mxu0 0.0
      %6214 = vmatprep.subr.mxu0 0.0
      %6215 = vmatpush1.msra.mxu0 0.0
      %6216 = vmatprep.subr.mxu0 0.0
      %6217 = vmatpush1.msra.mxu0 0.0
      %6218 = vmatprep.subr.mxu0 0.0
      %6219 = vmatpush1.msra.mxu0 0.0
      %6220 = vmatprep.subr.mxu0 0.0
      %6221 = vmatpush1.msra.mxu0 0.0
      %6222 = vmatprep.subr.mxu0 0.0
      %6223 = vmatpush1.msra.mxu0 0.0
      %6224 = vmatprep.subr.mxu0 0.0
      %6225 = vmatpush1.msra.mxu0 0.0
      %6226 = vmatprep.subr.mxu0 0.0
      %6227 = vmatpush1.msra.mxu0 0.0
      %6228 = vmatprep.subr.mxu0 0.0
      %6229 = vmatpush1.msra.mxu0 0.0
      %6230 = vmatprep.subr.mxu0 0.0
      %6231 = vmatpush1.msra.mxu0 0.0
      %6232 = vmatprep.subr.mxu0 0.0
      %6233 = vmatpush1.msra.mxu0 0.0
      %6234 = vmatprep.subr.mxu0 0.0
      %6235 = vmatpush1.msra.mxu0 0.0
      %6236 = vmatprep.subr.mxu0 0.0
      %6237 = vmatpush1.msra.mxu0 0.0
      %6238 = vmatprep.subr.mxu0 0.0
      %6239 = vmatpush1.msra.mxu0 0.0
      %6240 = vmatprep.subr.mxu0 0.0
      %6241 = vmatpush1.msra.mxu0 0.0
      %6242 = vmatprep.mubr.f32.mxu0 0.0
      %6243 = vmatmul.mubr.f32.gmra.mrb[0].mxu0 %v6176
      %v6244 = vpop.f32.mrb[0].mxu0
      %v6245 = vadd.f32 0.0, %v6244
      %v6246 = vpop.f32.mrb[0].mxu0
      %6247 = vdwg.mxu0
      %vm6248 = vcmask 293888
      %v6250 = vsel %vm6248, %v5934, 0
      %v6252 = vsel %vm6248, %v3704, 0
      %v6254 = vsel %vm6248, %v3706, 0
      %v6256 = vsel %vm6248, %v3708, 0
      %v6258 = vsel %vm6248, %v3710, 0
      %v6260 = vsel %vm6248, %v3712, 0
      %v6262 = vsel %vm6248, %v3714, 0
      %v6264 = vsel %vm6248, %v3716, 0
      %v6266 = vsel %vm6248, %v3718, 0
      %v6268 = vsel %vm6248, %v3720, 0
      %v6270 = vsel %vm6248, %v3722, 0
      %v6272 = vsel %vm6248, %v3724, 0
      %v6274 = vsel %vm6248, %v3726, 0
      %v6276 = vsel %vm6248, %v3728, 0
      %v6278 = vsel %vm6248, %v3730, 0
      %v6280 = vsel %vm6248, %v3732, 0
      %v6282 = vsel %vm6248, %v3734, 0
      %6284 = vmatprep.subr.bf16.mxu0 0
      %6285 = vmatpush1.bf16.xpose.msra.mxu0 %v6252
      %6286 = vmatprep.subr.bf16.mxu0 0
      %6287 = vmatpush1.bf16.xpose.msra.mxu0 %v6254
      %6288 = vmatprep.subr.bf16.mxu0 0
      %6289 = vmatpush1.bf16.xpose.msra.mxu0 %v6256
      %6290 = vmatprep.subr.bf16.mxu0 0
      %6291 = vmatpush1.bf16.xpose.msra.mxu0 %v6258
      %6292 = vmatprep.subr.bf16.mxu0 0
      %6293 = vmatpush1.bf16.xpose.msra.mxu0 %v6260
      %6294 = vmatprep.subr.bf16.mxu0 0
      %6295 = vmatpush1.bf16.xpose.msra.mxu0 %v6262
      %6296 = vmatprep.subr.bf16.mxu0 0
      %6297 = vmatpush1.bf16.xpose.msra.mxu0 %v6264
      %6298 = vmatprep.subr.bf16.mxu0 0
      %6299 = vmatpush1.bf16.xpose.msra.mxu0 %v6266
      %6300 = vmatprep.subr.bf16.mxu0 0
      %6301 = vmatpush1.bf16.xpose.msra.mxu0 %v6268
      %6302 = vmatprep.subr.bf16.mxu0 0
      %6303 = vmatpush1.bf16.xpose.msra.mxu0 %v6270
      %6304 = vmatprep.subr.bf16.mxu0 0
      %6305 = vmatpush1.bf16.xpose.msra.mxu0 %v6272
      %6306 = vmatprep.subr.bf16.mxu0 0
      %6307 = vmatpush1.bf16.xpose.msra.mxu0 %v6274
      %6308 = vmatprep.subr.bf16.mxu0 0
      %6309 = vmatpush1.bf16.xpose.msra.mxu0 %v6276
      %6310 = vmatprep.subr.bf16.mxu0 0
      %6311 = vmatpush1.bf16.xpose.msra.mxu0 %v6278
      %6312 = vmatprep.subr.bf16.mxu0 0
      %6313 = vmatpush1.bf16.xpose.msra.mxu0 %v6280
      %6314 = vmatprep.subr.bf16.mxu0 0
      %6315 = vmatpush1.bf16.xpose.msra.mxu0 %v6282
      %6316 = vmatprep.mubr.bf16.mxu0 0
      %6317 = vmatmul.mubr.bf16.gmra.mrb[0].mxu0 %v6250
      %v6318 = vpop.f32.mrb[0].mxu0
      %v6319 = vadd.f32 %v6169, %v6318
      %v6320 = vpop.f32.mrb[0].mxu0
      %v6321 = vadd.f32 %v6171, %v6320
      %v6322 = vpop.f32.mrb[0].mxu0
      %v6323 = vpop.f32.mrb[0].mxu0
      %6324 = vdwg.mxu0
      %v6327 = vcombine.low %v6319, %v6321
      %6329 = vst [vmem:[%s466] sm:$0xff] %v6327
      %v6338 = vunpack.c.l.b16 %v4457
      %v6339 = vunpack.c.l.b16 %v4459
      %v6340 = vunpack.c.l.b16 %v4461
      %v6341 = vunpack.c.l.b16 %v4463
      %v6342 = vunpack.c.l.b16 %v4465
      %v6343 = vunpack.c.l.b16 %v4467
      %v6344 = vunpack.c.l.b16 %v4469
      %v6345 = vunpack.c.l.b16 %v4471
      %v6346 = vpack.c.b16 %v6339, %v6338
      %v6347 = vpack.c.b16 %v6341, %v6340
      %v6348 = vpack.c.b16 %v6343, %v6342
      %v6349 = vpack.c.b16 %v6345, %v6344
      %v6350 = vrot.slane %v6008, 4
      %v6353 = vsel %vm6248, %v5935, 0
      %v6356 = vsel %vm6248, %v6346, 0
      %v6359 = vsel %vm6248, %v6347, 0
      %v6362 = vsel %vm6248, %v6348, 0
      %v6365 = vsel %vm6248, %v6349, 0
      %6367 = vmatprep.subr.bf16.mxu0 0
      %6368 = vmatpush1.bf16.xpose.msra.mxu0 %v6356
      %6369 = vmatprep.subr.bf16.mxu0 0
      %6370 = vmatpush1.bf16.xpose.msra.mxu0 %v6359
      %6371 = vmatprep.subr.bf16.mxu0 0
      %6372 = vmatpush1.bf16.xpose.msra.mxu0 %v6362
      %6373 = vmatprep.subr.bf16.mxu0 0
      %6374 = vmatpush1.bf16.xpose.msra.mxu0 %v6365
      %6375 = vmatprep.subr.bf16.mxu0 0
      %6376 = vmatpush1.bf16.xpose.msra.mxu0 0
      %6377 = vmatprep.subr.bf16.mxu0 0
      %6378 = vmatpush1.bf16.xpose.msra.mxu0 0
      %6379 = vmatprep.subr.bf16.mxu0 0
      %6380 = vmatpush1.bf16.xpose.msra.mxu0 0
      %6381 = vmatprep.subr.bf16.mxu0 0
      %6382 = vmatpush1.bf16.xpose.msra.mxu0 0
      %6383 = vmatprep.subr.bf16.mxu0 0
      %6384 = vmatpush1.bf16.xpose.msra.mxu0 0
      %6385 = vmatprep.subr.bf16.mxu0 0
      %6386 = vmatpush1.bf16.xpose.msra.mxu0 0
      %6387 = vmatprep.subr.bf16.mxu0 0
      %6388 = vmatpush1.bf16.xpose.msra.mxu0 0
      %6389 = vmatprep.subr.bf16.mxu0 0
      %6390 = vmatpush1.bf16.xpose.msra.mxu0 0
      %6391 = vmatprep.subr.bf16.mxu0 0
      %6392 = vmatpush1.bf16.xpose.msra.mxu0 0
      %6393 = vmatprep.subr.bf16.mxu0 0
      %6394 = vmatpush1.bf16.xpose.msra.mxu0 0
      %6395 = vmatprep.subr.bf16.mxu0 0
      %6396 = vmatpush1.bf16.xpose.msra.mxu0 0
      %6397 = vmatprep.subr.bf16.mxu0 0
      %6398 = vmatpush1.bf16.xpose.msra.mxu0 0
      %6399 = vmatprep.mubr.bf16.mxu0 0
      %6400 = vmatmul.mubr.bf16.gmra.mrb[0].mxu0 %v6353
      %v6401 = vpop.f32.mrb[0].mxu0
      %v6402 = vadd.f32 %v6350, %v6401
      %v6403 = vpop.f32.mrb[0].mxu0
      %v6404 = vpop.f32.mrb[0].mxu0
      %v6405 = vpop.f32.mrb[0].mxu0
      %6406 = vdwg.mxu0
      %v6407 = vadd.f32 %v6402, %v6245
      %vm6408 = vcmask 517120
      %6409 = vst.msk [vmem:[%s470] sm:$0x3] %vm6408, %v6407
      %v6414 = vcombine.low %v5566, %v5568
      %v6415 = vcombine.low %v5570, %v5572
      %v6417 = vunpack.c.l.s4 1983009808
      %v6418 = vunpack.c.0.s8 %v6417
      %v6419 = vlaneseq
      %v6420 = vshrl.u32 %v6419, 7
      %v6421 = vsub.s32 %v6418, %v6420
      %v6422 = vrot.slane %v6414, %v6421
      %v6424 = vunpack.c.l.s4 1983009808
      %v6425 = vunpack.c.0.s8 %v6424
      %v6426 = vlaneseq
      %v6427 = vshrl.u32 %v6426, 7
      %v6428 = vsub.s32 %v6425, %v6427
      %v6429 = vrot.slane %v6415, %v6428
      %v6430 = vcombine.low %v6422, %v6429
      %v6431 = vrot.slane %v6077, 2
      %v6434 = vsel %vm5957, %v6013, 0
      %v6437 = vsel %vm5957, %v6430, 0
      %6439 = vmatprep.subr.bf16.mxu0 0
      %6440 = vmatpush1.bf16.xpose.msra.mxu0 %v6437
      %6441 = vmatprep.subr.bf16.mxu0 0
      %6442 = vmatpush1.bf16.xpose.msra.mxu0 0
      %6443 = vmatprep.subr.bf16.mxu0 0
      %6444 = vmatpush1.bf16.xpose.msra.mxu0 0
      %6445 = vmatprep.subr.bf16.mxu0 0
      %6446 = vmatpush1.bf16.xpose.msra.mxu0 0
      %6447 = vmatprep.subr.bf16.mxu0 0
      %6448 = vmatpush1.bf16.xpose.msra.mxu0 0
      %6449 = vmatprep.subr.bf16.mxu0 0
      %6450 = vmatpush1.bf16.xpose.msra.mxu0 0
      %6451 = vmatprep.subr.bf16.mxu0 0
      %6452 = vmatpush1.bf16.xpose.msra.mxu0 0
      %6453 = vmatprep.subr.bf16.mxu0 0
      %6454 = vmatpush1.bf16.xpose.msra.mxu0 0
      %6455 = vmatprep.subr.bf16.mxu0 0
      %6456 = vmatpush1.bf16.xpose.msra.mxu0 0
      %6457 = vmatprep.subr.bf16.mxu0 0
      %6458 = vmatpush1.bf16.xpose.msra.mxu0 0
      %6459 = vmatprep.subr.bf16.mxu0 0
      %6460 = vmatpush1.bf16.xpose.msra.mxu0 0
      %6461 = vmatprep.subr.bf16.mxu0 0
      %6462 = vmatpush1.bf16.xpose.msra.mxu0 0
      %6463 = vmatprep.subr.bf16.mxu0 0
      %6464 = vmatpush1.bf16.xpose.msra.mxu0 0
      %6465 = vmatprep.subr.bf16.mxu0 0
      %6466 = vmatpush1.bf16.xpose.msra.mxu0 0
      %6467 = vmatprep.subr.bf16.mxu0 0
      %6468 = vmatpush1.bf16.xpose.msra.mxu0 0
      %6469 = vmatprep.subr.bf16.mxu0 0
      %6470 = vmatpush1.bf16.xpose.msra.mxu0 0
      %6471 = vmatprep.mubr.bf16.mxu0 0
      %6472 = vmatmul.mubr.bf16.gmra.mrb[0].mxu0 %v6434
      %v6473 = vpop.f32.mrb[0].mxu0
      %v6474 = vadd.f32 %v6431, %v6473
      %v6475 = vpop.f32.mrb[0].mxu0
      %v6476 = vpop.f32.mrb[0].mxu0
      %v6477 = vpop.f32.mrb[0].mxu0
      %6478 = vdwg.mxu0
      %vm6479 = vcmask 123904
      %6480 = vst.msk [vmem:[%s474] sm:$0x3] %vm6479, %v6474
      %p6481 = scmp.lt.s32.totalorder %s24, 1
      %s6482 = scalar_select %p6481, %s24, 1
      %s6483 = smul.addr %s6482, 2
      %s6484 = smul.addr %s6483, 4
      %s6485 = scalar_lea.vmem %s10, %s6484
      %p6486 = scmp.lt.s32.totalorder %s24, 1
      %s6487 = scalar_select %p6486, %s24, 1
      %s6488 = smul.addr %s6487, 2
      %s6489 = scalar_lea.vmem %s11, %s6488
      %p6490 = scmp.lt.s32.totalorder %s24, 1
      %s6491 = scalar_select %p6490, %s24, 1
      %s6492 = smul.addr %s6491, 2
      %s6493 = scalar_lea.vmem %s12, %s6492
      // Predicated region
      $region61: #{multi_octave_forward.1} parent=59 // pred_check
        %p6494 = pneg %p267
      $region62: #{multi_octave_forward.1} parent=59 // pred_check_branch
        %6496 = sbr.rel (%p6494) target = $region64
      $region63: #{multi_octave_forward.1} parent=59 // pred_region
        _
      $region64: #{multi_octave_forward.1} parent=59 // pred_fallthru
        _
      // Predicated region
      $region65: #{multi_octave_forward.1} parent=59 // pred_check
        %p6497 = pneg %p293
      $region66: #{multi_octave_forward.1} parent=59 // pred_check_branch
        %6499 = sbr.rel (%p6497) target = $region68
      $region67: #{multi_octave_forward.1} parent=59 // pred_region
        _
      $region68: #{multi_octave_forward.1} parent=59 // pred_fallthru
        _
      // Predicated region
      $region69: #{multi_octave_forward.1} parent=59 // pred_check
        %p6500 = pneg %p319
      $region70: #{multi_octave_forward.1} parent=59 // pred_check_branch
        %6502 = sbr.rel (%p6500) target = $region72
      $region71: #{multi_octave_forward.1} parent=59 // pred_region
        _
      $region72: #{multi_octave_forward.1} parent=59 // pred_fallthru
        _
    $region60: #{multi_octave_forward.1} parent=5 // pred_fallthru
      _
    %p6503 = scmp.le.s32.totalorder 2, %s19
    // Predicated region
    $region73: #{multi_octave_forward.1} parent=5 // pred_check
      %p6504 = pneg %p6503
    $region74: #{multi_octave_forward.1} parent=5 // pred_check_branch
      %6506 = sbr.rel (%p6504) target = $region76
    $region75: #{multi_octave_forward.1} parent=5 // pred_region
      %s6507 = ssub.s32 %s19, 2
      // Predicated region
      $region77: #{multi_octave_forward.1} parent=75 // pred_check
        %p6508 = pneg %p273
      $region78: #{multi_octave_forward.1} parent=75 // pred_check_branch
        %6510 = sbr.rel (%p6508) target = $region80
      $region79: #{multi_octave_forward.1} parent=75 // pred_region
        %p6511 = scmp.lt.s32.totalorder %s25, 1
        %s6512 = scalar_select %p6511, %s25, 1
        %s6513 = smul.addr %s6512, 2
        %s6514 = smul.addr %s6513, 4
        %s6515 = scalar_lea.vmem %s10, %s6514
      $region80: #{multi_octave_forward.1} parent=75 // pred_fallthru
        _
      // Predicated region
      $region81: #{multi_octave_forward.1} parent=75 // pred_check
        %p6516 = pneg %p299
      $region82: #{multi_octave_forward.1} parent=75 // pred_check_branch
        %6518 = sbr.rel (%p6516) target = $region84
      $region83: #{multi_octave_forward.1} parent=75 // pred_region
        %p6519 = scmp.lt.s32.totalorder %s25, 1
        %s6520 = scalar_select %p6519, %s25, 1
        %s6521 = smul.addr %s6520, 2
        %s6522 = scalar_lea.vmem %s11, %s6521
      $region84: #{multi_octave_forward.1} parent=75 // pred_fallthru
        _
      // Predicated region
      $region85: #{multi_octave_forward.1} parent=75 // pred_check
        %p6523 = pneg %p325
      $region86: #{multi_octave_forward.1} parent=75 // pred_check_branch
        %6525 = sbr.rel (%p6523) target = $region88
      $region87: #{multi_octave_forward.1} parent=75 // pred_region
        %p6526 = scmp.lt.s32.totalorder %s25, 1
        %s6527 = scalar_select %p6526, %s25, 1
        %s6528 = smul.addr %s6527, 2
        %s6529 = scalar_lea.vmem %s12, %s6528
      $region88: #{multi_octave_forward.1} parent=75 // pred_fallthru
        _
    $region76: #{multi_octave_forward.1} parent=5 // pred_fallthru
      _
  $region6: #{multi_octave_forward.1} parent=0 // loop_footer
    %s23 = sadd.s32 1, %s19
  $region7: #{multi_octave_forward.1} parent=0 // loop_footer_branch
    %18 = sbr.rel target = $region3
  $region8: #{multi_octave_forward.1} parent=0 // loop_exit
    _

</llo_original>
